<compile_context>
chip_gen: v7x
topology: tpu7x:2x2x1
jax: 0.10.0
libtpu: 0.0.40
codegen_flags: <defaults>
</compile_context>

<pallas_src>
import math

import jax
import jax.numpy as jnp
from jax import lax
from jax.experimental import pallas as pl
from jax.experimental.pallas import tpu as pltpu


def _round_up(x, m):
    return (x + m - 1) // m * m


def _tagru_chunk_kernel(xaug_ref, wbig_ref, whf_ref, wcmb_ref, h0_ref,
                        out_ref, h_carry, xproj_scr):
    """One (batch-block, time-chunk) grid step of the TimeAwareGRU forward.

    Shapes seen by the kernel (Hp = padded hidden, Bb = batch-block rows,
    Tc = time steps per chunk, Daug = Din + 2):
      xaug_ref  : (Tc*Bb, Daug)   bf16  rows are [x_t | dt_t | 1], ordered (t, b)
      wbig_ref  : (Daug, 5*Hp)    bf16  fused x-projection [s|T|r|z|h~] (+ W_st, biases)
      whf_ref   : (Hp, 4*Hp)      bf16  fused h-projection [W_sh|WTh|W_rh|W_zh]
      wcmb_ref  : (2*Hp, 2*Hp)    bf16  block_diag(WTs, W_h)
      h0_ref    : (Bb, Hp)        f32   initial hidden state for this batch block
      out_ref   : (Tc*Bb, Hp)     f32   hidden states of this chunk, rows (t, b)
      h_carry   : (Bb, Hp)        f32   hidden state carried across time chunks
      xproj_scr : (Tc*Bb, 5*Hp)   bf16  hoisted x-only terms for this chunk
    """
    Bb, Hp = h0_ref.shape
    Tc = xaug_ref.shape[0] // Bb

    # First time chunk of this batch block: load the initial hidden state.
    @pl.when(pl.program_id(1) == 0)
    def _init():
        h_carry[...] = h0_ref[...]

    # Pre-pass (off the serial path): every x-only term of the chunk in ONE
    # bf16 MXU matmul with f32 accumulation.
    xproj_scr[...] = jnp.dot(
        xaug_ref[...], wbig_ref[...],
        preferred_element_type=jnp.float32).astype(xproj_scr.dtype)

    def step(t, h_prev):
        row0 = pl.multiple_of(t * Bb, 16)
        xp = xproj_scr[pl.ds(row0, Bb), :].astype(jnp.float32)     # (Bb, 5*Hp)

        # One fused h-projection per step (bf16 operands, f32 accumulation).
        g = jnp.dot(h_prev.astype(jnp.bfloat16), whf_ref[...],
                    preferred_element_type=jnp.float32)            # (Bb, 4*Hp)

        # Gate math stays in f32 (v5e has no bf16 VPU/EUP).
        s_t = jnp.tanh(g[:, 0:Hp] + xp[:, 0:Hp])
        r_t = jax.nn.sigmoid(g[:, 2 * Hp:3 * Hp] + xp[:, 2 * Hp:3 * Hp])
        z_t = jax.nn.sigmoid(g[:, 3 * Hp:4 * Hp] + xp[:, 3 * Hp:4 * Hp])

        # Second (and last) MXU issue of the step: [s_t | r_t*h] @ diag(WTs, W_h).
        lhs = jnp.concatenate([s_t, r_t * h_prev], axis=-1).astype(jnp.bfloat16)
        m = jnp.dot(lhs, wcmb_ref[...],
                    preferred_element_type=jnp.float32)            # (Bb, 2*Hp)

        T_t = jax.nn.sigmoid(g[:, Hp:2 * Hp] + xp[:, Hp:2 * Hp] + m[:, 0:Hp])
        h_tilde = jnp.tanh(m[:, Hp:2 * Hp] + xp[:, 4 * Hp:5 * Hp])
        h_t = (1.0 - z_t) * (T_t * h_prev) + z_t * h_tilde

        out_ref[pl.ds(row0, Bb), :] = h_t
        return h_t

    # Cap the unroll: the loop is latency-serial, so deep unroll only bloats
    # instruction memory / vreg live ranges.
    unroll = True if Tc <= 8 else 4
    h_last = lax.fori_loop(0, Tc, step, h_carry[...], unroll=unroll)
    h_carry[...] = h_last


def _vmem_estimate_bytes(Tc, Bb, Daug, Hp):
    bf16, f32 = 2, 4
    dbl = 2  # BlockSpec double-buffering
    est = dbl * (Tc * Bb * Daug * bf16        # x_aug chunk
                 + Daug * 5 * Hp * bf16       # w_big
                 + Hp * 4 * Hp * bf16         # whf
                 + 2 * Hp * 2 * Hp * bf16     # wcmb (block-diag)
                 + Bb * Hp * f32              # h0 block
                 + Tc * Bb * Hp * f32)        # out chunk
    est += Bb * Hp * f32 + Tc * Bb * 5 * Hp * bf16   # carried h + xproj scratch
    return est


@jax.jit
def fraud_time_aware_gru(x_seq, delta_seq, params, h0=None):
    """Forward pass matching FraudTimeAwareGRU.forward.

    x_seq     : (B, T, D_in)  float32
    delta_seq : (B, T, 1)     float32
    params    : dict of stacked weights (see init_params)
    h0        : optional (B, H) float32; defaults to zeros.

    Returns h_seq : (B, T, H) float32.
    """
    B, T, Din = x_seq.shape
    H = params["w_h"].shape[0]
    f32, bf16 = jnp.float32, jnp.bfloat16

    Hp = _round_up(H, 128)            # lane-dense hidden
    Bp = _round_up(B, 16)             # bf16-sublane-aligned batch
    Daug = Din + 2                    # [x | dt | 1(bias)] — NOT padded to 128

    # Batch-block ("parallel") axis: split batch in halves for v7x megacore
    # when the halves stay bf16-sublane aligned (16 rows each).
    nb = 2 if (Bp >= 32 and Bp % 32 == 0) else 1
    Bb = Bp // nb

    # Time chunking ("arbitrary") axis: bounded per-chunk footprint.
    Tc = min(T, 16)
    nT = pl.cdiv(T, Tc)
    Tp = nT * Tc

    wx = params["wx"].astype(f32)     # (5, Din, H)  [W_sx, WTx, W_rx, W_zx, W_x]
    wh = params["wh"].astype(f32)     # (4, H, H)    [W_sh, WTh, W_rh, W_zh]
    w_h = params["w_h"].astype(f32)   # (H, H)
    wts = params["wts"].astype(f32)   # (H, H)
    wst = params["wst"].astype(f32)   # (1, H)
    b = params["b"].astype(f32)       # (5, H)       [b_s, b_T, b_r, b_z, b]

    # --- Fused x-projection W_big : (Daug, 5*Hp), bf16 ----------------------
    # rows: [x rows (Din) | dt row | bias row]; cols: [s|T|r|z|h~] blocks,
    # zero beyond H so padded lanes never receive signal.
    wx_pad = jnp.pad(wx, ((0, 0), (0, 0), (0, Hp - H)))              # (5, Din, Hp)
    x_rows = jnp.transpose(wx_pad, (1, 0, 2)).reshape(Din, 5 * Hp)   # (Din, 5*Hp)
    wst_pad = jnp.pad(wst, ((0, 0), (0, Hp - H)))                    # (1, Hp)
    dt_row = jnp.concatenate([wst_pad, jnp.zeros((1, 4 * Hp), f32)], axis=1)
    bias_row = jnp.pad(b, ((0, 0), (0, Hp - H))).reshape(1, 5 * Hp)
    w_big = jnp.concatenate([x_rows, dt_row, bias_row], axis=0).astype(bf16)

    # --- Fused h-projection (Hp, 4*Hp) and block-diag(WTs, W_h), bf16 -------
    wh_pad = jnp.pad(wh, ((0, 0), (0, Hp - H), (0, Hp - H)))         # (4, Hp, Hp)
    whf = jnp.transpose(wh_pad, (1, 0, 2)).reshape(Hp, 4 * Hp).astype(bf16)
    wcmb = jnp.zeros((2 * Hp, 2 * Hp), f32)
    wcmb = wcmb.at[:H, :H].set(wts)
    wcmb = wcmb.at[Hp:Hp + H, Hp:Hp + H].set(w_h)
    wcmb = wcmb.astype(bf16)

    # --- Augmented inputs, reorganised as (nT, nb, Tc*Bb, Daug) bf16 ---------
    x_tm = jnp.transpose(x_seq, (1, 0, 2)).astype(f32)               # (T, B, Din)
    dt_tm = jnp.transpose(delta_seq, (1, 0, 2)).astype(f32)          # (T, B, 1)
    ones = jnp.ones((T, B, 1), f32)
    x_aug = jnp.concatenate([x_tm, dt_tm, ones], axis=-1)            # (T, B, Daug)
    x_aug = jnp.pad(x_aug, ((0, Tp - T), (0, Bp - B), (0, 0)))       # (Tp, Bp, Daug)
    x_aug = (x_aug.reshape(nT, Tc, nb, Bb, Daug)
                  .transpose(0, 2, 1, 3, 4)
                  .reshape(nT, nb, Tc * Bb, Daug)
                  .astype(bf16))

    if h0 is None:
        h0_p = jnp.zeros((Bp, Hp), f32)
    else:
        h0_p = jnp.pad(h0.astype(f32), ((0, Bp - B), (0, Hp - H)))
    h0_p = h0_p.reshape(nb, Bb, Hp)

    grid_spec = pltpu.PrefetchScalarGridSpec(
        num_scalar_prefetch=0,
        grid=(nb, nT),                        # (batch blocks, time chunks)
        in_specs=[
            pl.BlockSpec((None, None, Tc * Bb, Daug), lambda bk, tk: (tk, bk, 0, 0)),
            pl.BlockSpec((Daug, 5 * Hp), lambda bk, tk: (0, 0)),
            pl.BlockSpec((Hp, 4 * Hp), lambda bk, tk: (0, 0)),
            pl.BlockSpec((2 * Hp, 2 * Hp), lambda bk, tk: (0, 0)),
            pl.BlockSpec((None, Bb, Hp), lambda bk, tk: (bk, 0, 0)),
        ],
        out_specs=pl.BlockSpec((None, None, Tc * Bb, Hp),
                               lambda bk, tk: (tk, bk, 0, 0)),
        scratch_shapes=[
            pltpu.VMEM((Bb, Hp), jnp.float32),            # carried hidden state
            pltpu.VMEM((Tc * Bb, 5 * Hp), jnp.bfloat16),  # hoisted x-projections
        ],
    )

    est = _vmem_estimate_bytes(Tc, Bb, Daug, Hp)
    vmem_limit = int(min(48 * 2**20, max(16 * 2**20, 2 * est)))  # safe on v7x (64 MiB/TC)

    h_blk = pl.pallas_call(
        _tagru_chunk_kernel,
        out_shape=jax.ShapeDtypeStruct((nT, nb, Tc * Bb, Hp), jnp.float32),
        grid_spec=grid_spec,
        compiler_params=pltpu.CompilerParams(
            dimension_semantics=("parallel", "arbitrary"),
            vmem_limit_bytes=vmem_limit),
    )(x_aug, w_big, whf, wcmb, h0_p)

    # undo the (chunk, block) layout, strip padding, back to (B, T, H)
    h_tm = (h_blk.reshape(nT, nb, Tc, Bb, Hp)
                 .transpose(0, 2, 1, 3, 4)
                 .reshape(Tp, Bp, Hp))
    return jnp.transpose(h_tm[:T, :B, :H], (1, 0, 2))


def init_params(key, input_dim, hidden_dim):
    """Deterministic parameter init matching the nn.Module's shapes.

    All Linear weights are stored pre-transposed as (in_features, out_features)
    so the math is `x @ W`.
    """
    ks = jax.random.split(key, 12)
    scale_h = 1.0 / jnp.sqrt(hidden_dim)
    scale_x = 1.0 / jnp.sqrt(input_dim)

    def u(k, shape, scale):
        return jax.random.uniform(k, shape, jnp.float32, -scale, scale)

    # x-projections stacked: [W_sx, WTx, W_rx, W_zx, W_x], each (Din, H)
    wx = jnp.stack([u(ks[i], (input_dim, hidden_dim), scale_x) for i in range(5)])
    # h-projections stacked: [W_sh, WTh, W_rh, W_zh], each (H, H)
    wh = jnp.stack([u(ks[5 + i], (hidden_dim, hidden_dim), scale_h) for i in range(4)])
    w_h = u(ks[9], (hidden_dim, hidden_dim), scale_h)    # W_h
    wts = u(ks[10], (hidden_dim, hidden_dim), scale_h)   # WTs
    wst = u(ks[11], (1, hidden_dim), 1.0)                # W_st (Linear(1, H))
    b = jnp.zeros((5, hidden_dim), jnp.float32)          # biases init to zeros
    return dict(wx=wx, wh=wh, w_h=w_h, wts=wts, wst=wst, b=b)


def _reference(x_seq, delta_seq, params, h0):
    """Pure-JAX f32 reference of the PyTorch forward (lax.scan over time)."""
    wx, wh = params["wx"], params["wh"]
    w_h, wts, wst, b = params["w_h"], params["wts"], params["wst"], params["b"]

    def step(h_prev, inp):
        x, dt = inp
        s_t = jnp.tanh(h_prev @ wh[0] + x @ wx[0] + dt * wst + b[0])
        T_t = jax.nn.sigmoid(h_prev @ wh[1] + x @ wx[1] + s_t @ wts + b[1])
        r_t = jax.nn.sigmoid(h_prev @ wh[2] + x @ wx[2] + b[2])
        z_t = jax.nn.sigmoid(h_prev @ wh[3] + x @ wx[3] + b[3])
        h_tilde = jnp.tanh((r_t * h_prev) @ w_h + x @ wx[4] + b[4])
        h_t = (1.0 - z_t) * (T_t * h_prev) + z_t * h_tilde
        return h_t, h_t

    x_tm = jnp.transpose(x_seq, (1, 0, 2))
    dt_tm = jnp.transpose(delta_seq, (1, 0, 2))
    _, h_tm = lax.scan(step, h0, (x_tm, dt_tm))
    return jnp.transpose(h_tm, (1, 0, 2))


if __name__ == "__main__":
    B, T, INPUT_DIM, HIDDEN_DIM = 8, 6, 16, 32

    key = jax.random.PRNGKey(0)
    k_x, k_dt, k_p = jax.random.split(key, 3)

    x_seq = jax.random.normal(k_x, (B, T, INPUT_DIM), jnp.float32)
    delta_seq = jax.random.uniform(k_dt, (B, T, 1), jnp.float32)
    params = init_params(k_p, INPUT_DIM, HIDDEN_DIM)
    h0 = jnp.zeros((B, HIDDEN_DIM), jnp.float32)

    h_seq = jax.block_until_ready(fraud_time_aware_gru(x_seq, delta_seq, params, h0))

    # Correctness check against a pure-JAX f32 reference. Tolerance is loosened
    # (vs. the old 2e-5) because the kernel now uses bf16 MXU operands with f32
    # accumulation; real semantic bugs produce O(0.1+) errors, bf16 noise stays
    # well below 5e-2 at these shapes.
    h_ref = jax.block_until_ready(_reference(x_seq, delta_seq, params, h0))
    assert h_seq.shape == (B, T, HIDDEN_DIM)
    max_err = float(jnp.max(jnp.abs(h_seq - h_ref)))
    assert jnp.allclose(h_seq, h_ref, atol=5e-2, rtol=5e-2), (
        "mismatch vs reference: max|diff|=%g" % max_err)

    print("KERNEL_OK")
</pallas_src>

<mosaic_0001>
module attributes {stable_mosaic.version = 11 : i64} {
  func.func @_tagru_chunk_kernel(%arg0: i32, %arg1: i32, %arg2: memref<1x1x96x18xbf16, #tpu.memory_space<vmem>>, %arg3: memref<18x640xbf16, #tpu.memory_space<vmem>>, %arg4: memref<128x512xbf16, #tpu.memory_space<vmem>>, %arg5: memref<256x256xbf16, #tpu.memory_space<vmem>>, %arg6: memref<1x16x128xf32, #tpu.memory_space<vmem>>, %arg7: memref<1x1x96x128xf32, #tpu.memory_space<vmem>>, %arg8: memref<16x128xf32, #tpu.memory_space<vmem>>, %arg9: memref<96x640xbf16, #tpu.memory_space<vmem>>) attributes {dimension_semantics = [#tpu.dimension_semantics<parallel>, #tpu.dimension_semantics<arbitrary>], iteration_bounds = array<i64: 1, 1>, scalar_prefetch = 0 : i64, scratch_operands = 2 : i64, tpu.core_type = #tpu.core_type<tc>, window_params = [{transform_indices = @transform_0, window_bounds = array<i64: 1, 1, 96, 18>}, {pipeline_mode = #tpu.pipeline_mode<synchronous>, transform_indices = @transform_1, window_bounds = array<i64: 18, 640>}, {pipeline_mode = #tpu.pipeline_mode<synchronous>, transform_indices = @transform_2, window_bounds = array<i64: 128, 512>}, {pipeline_mode = #tpu.pipeline_mode<synchronous>, transform_indices = @transform_3, window_bounds = array<i64: 256, 256>}, {transform_indices = @transform_4, window_bounds = array<i64: 1, 16, 128>}, {transform_indices = @transform_5, window_bounds = array<i64: 1, 1, 96, 128>}]} {
    %c0_i32 = arith.constant 0 : i32
    %0 = arith.cmpi eq, %arg1, %c0_i32 : i32
    %1 = arith.extui %0 : i1 to i32
    %c0_i32_0 = arith.constant 0 : i32
    %2 = arith.cmpi ne, %1, %c0_i32_0 : i32
    scf.if %2 {
      %c0_102 = arith.constant 0 : index
      %c0_103 = arith.constant 0 : index
      %c0_104 = arith.constant 0 : index
      %353 = vector.load %arg6[%c0_102, %c0_103, %c0_104] : memref<1x16x128xf32, #tpu.memory_space<vmem>>, vector<1x16x128xf32>
      %354 = vector.shape_cast %353 : vector<1x16x128xf32> to vector<16x128xf32>
      %c0_105 = arith.constant 0 : index
      %c0_106 = arith.constant 0 : index
      %355 = vector.load %arg8[%c0_105, %c0_106] : memref<16x128xf32, #tpu.memory_space<vmem>>, vector<16x128xf32>
      tpu.vector_store %arg8[%c0_105, %c0_106], %354 {strides = array<i32>} : memref<16x128xf32, #tpu.memory_space<vmem>>, vector<16x128xf32>,
    } else {
    }
    %c0 = arith.constant 0 : index
    %c0_1 = arith.constant 0 : index
    %c0_2 = arith.constant 0 : index
    %c0_3 = arith.constant 0 : index
    %3 = vector.load %arg2[%c0, %c0_1, %c0_2, %c0_3] : memref<1x1x96x18xbf16, #tpu.memory_space<vmem>>, vector<1x1x96x18xbf16>
    %4 = vector.shape_cast %3 : vector<1x1x96x18xbf16> to vector<96x18xbf16>
    %c0_4 = arith.constant 0 : index
    %c0_5 = arith.constant 0 : index
    %5 = vector.load %arg3[%c0_4, %c0_5] : memref<18x640xbf16, #tpu.memory_space<vmem>>, vector<18x640xbf16>
    %cst = arith.constant dense<0.000000e+00> : vector<96x640xf32>
    %6 = tpu.matmul %4, %5, %cst {dimension_numbers = #tpu.dot_dimension_numbers<[1], [0], [0], [1], [0, 0, 1, 1], [], []>} : vector<96x18xbf16>, vector<18x640xbf16>, vector<96x640xf32> -> vector<96x640xf32>
    %7 = arith.truncf %6 : vector<96x640xf32> to vector<96x640xbf16>
    %c0_6 = arith.constant 0 : index
    %c0_7 = arith.constant 0 : index
    %8 = vector.load %arg9[%c0_6, %c0_7] : memref<96x640xbf16, #tpu.memory_space<vmem>>, vector<96x640xbf16>
    tpu.vector_store %arg9[%c0_6, %c0_7], %7 {strides = array<i32>} : memref<96x640xbf16, #tpu.memory_space<vmem>>, vector<96x640xbf16>,
    %c0_8 = arith.constant 0 : index
    %c0_9 = arith.constant 0 : index
    %9 = vector.load %arg8[%c0_8, %c0_9] : memref<16x128xf32, #tpu.memory_space<vmem>>, vector<16x128xf32>
    %c0_i32_10 = arith.constant 0 : i32
    %c16_i32 = arith.constant 16 : i32
    %10 = arith.muli %c0_i32_10, %c16_i32 : i32
    %11 = tpu.assume_multiple %10, 16 : i32
    %12 = arith.index_cast %11 : i32 to index
    %c0_11 = arith.constant 0 : index
    %13 = vector.load %arg9[%12, %c0_11] : memref<96x640xbf16, #tpu.memory_space<vmem>>, vector<16x640xbf16>
    %14 = arith.extf %13 : vector<16x640xbf16> to vector<16x640xf32>
    %15 = arith.truncf %9 : vector<16x128xf32> to vector<16x128xbf16>
    %c0_12 = arith.constant 0 : index
    %c0_13 = arith.constant 0 : index
    %16 = vector.load %arg4[%c0_12, %c0_13] : memref<128x512xbf16, #tpu.memory_space<vmem>>, vector<128x512xbf16>
    %cst_14 = arith.constant dense<0.000000e+00> : vector<16x512xf32>
    %17 = tpu.matmul %15, %16, %cst_14 {dimension_numbers = #tpu.dot_dimension_numbers<[1], [0], [0], [1], [0, 0, 1, 1], [], []>} : vector<16x128xbf16>, vector<128x512xbf16>, vector<16x512xf32> -> vector<16x512xf32>
    %18 = vector.extract_strided_slice %17 {offsets = [0, 0], sizes = [16, 128], strides = [1, 1]} : vector<16x512xf32> to vector<16x128xf32>
    %19 = vector.extract_strided_slice %14 {offsets = [0, 0], sizes = [16, 128], strides = [1, 1]} : vector<16x640xf32> to vector<16x128xf32>
    %20 = arith.addf %18, %19 : vector<16x128xf32>
    %21 = math.tanh %20 : vector<16x128xf32>
    %22 = vector.extract_strided_slice %17 {offsets = [0, 256], sizes = [16, 128], strides = [1, 1]} : vector<16x512xf32> to vector<16x128xf32>
    %23 = vector.extract_strided_slice %14 {offsets = [0, 256], sizes = [16, 128], strides = [1, 1]} : vector<16x640xf32> to vector<16x128xf32>
    %24 = arith.addf %22, %23 : vector<16x128xf32>
    %25 = arith.negf %24 : vector<16x128xf32>
    %26 = math.exp %25 : vector<16x128xf32>
    %cst_15 = arith.constant 1.000000e+00 : f32
    %27 = vector.broadcast %cst_15 : f32 to vector<16x128xf32>
    %28 = arith.addf %27, %26 : vector<16x128xf32>
    %29 = arith.divf %27, %28 : vector<16x128xf32>
    %30 = vector.extract_strided_slice %17 {offsets = [0, 384], sizes = [16, 128], strides = [1, 1]} : vector<16x512xf32> to vector<16x128xf32>
    %31 = vector.extract_strided_slice %14 {offsets = [0, 384], sizes = [16, 128], strides = [1, 1]} : vector<16x640xf32> to vector<16x128xf32>
    %32 = arith.addf %30, %31 : vector<16x128xf32>
    %33 = arith.negf %32 : vector<16x128xf32>
    %34 = math.exp %33 : vector<16x128xf32>
    %cst_16 = arith.constant 1.000000e+00 : f32
    %35 = vector.broadcast %cst_16 : f32 to vector<16x128xf32>
    %36 = arith.addf %35, %34 : vector<16x128xf32>
    %37 = arith.divf %35, %36 : vector<16x128xf32>
    %38 = arith.mulf %29, %9 : vector<16x128xf32>
    %39 = tpu.concatenate %21, %38 in 1 : vector<16x128xf32>, vector<16x128xf32> -> vector<16x256xf32>
    %40 = arith.truncf %39 : vector<16x256xf32> to vector<16x256xbf16>
    %c0_17 = arith.constant 0 : index
    %c0_18 = arith.constant 0 : index
    %41 = vector.load %arg5[%c0_17, %c0_18] : memref<256x256xbf16, #tpu.memory_space<vmem>>, vector<256x256xbf16>
    %cst_19 = arith.constant dense<0.000000e+00> : vector<16x256xf32>
    %42 = tpu.matmul %40, %41, %cst_19 {dimension_numbers = #tpu.dot_dimension_numbers<[1], [0], [0], [1], [0, 0, 1, 1], [], []>} : vector<16x256xbf16>, vector<256x256xbf16>, vector<16x256xf32> -> vector<16x256xf32>
    %43 = vector.extract_strided_slice %17 {offsets = [0, 128], sizes = [16, 128], strides = [1, 1]} : vector<16x512xf32> to vector<16x128xf32>
    %44 = vector.extract_strided_slice %14 {offsets = [0, 128], sizes = [16, 128], strides = [1, 1]} : vector<16x640xf32> to vector<16x128xf32>
    %45 = arith.addf %43, %44 : vector<16x128xf32>
    %46 = vector.extract_strided_slice %42 {offsets = [0, 0], sizes = [16, 128], strides = [1, 1]} : vector<16x256xf32> to vector<16x128xf32>
    %47 = arith.addf %45, %46 : vector<16x128xf32>
    %48 = arith.negf %47 : vector<16x128xf32>
    %49 = math.exp %48 : vector<16x128xf32>
    %cst_20 = arith.constant 1.000000e+00 : f32
    %50 = vector.broadcast %cst_20 : f32 to vector<16x128xf32>
    %51 = arith.addf %50, %49 : vector<16x128xf32>
    %52 = arith.divf %50, %51 : vector<16x128xf32>
    %53 = vector.extract_strided_slice %42 {offsets = [0, 128], sizes = [16, 128], strides = [1, 1]} : vector<16x256xf32> to vector<16x128xf32>
    %54 = vector.extract_strided_slice %14 {offsets = [0, 512], sizes = [16, 128], strides = [1, 1]} : vector<16x640xf32> to vector<16x128xf32>
    %55 = arith.addf %53, %54 : vector<16x128xf32>
    %56 = math.tanh %55 : vector<16x128xf32>
    %cst_21 = arith.constant 1.000000e+00 : f32
    %57 = vector.broadcast %cst_21 : f32 to vector<16x128xf32>
    %58 = arith.subf %57, %37 : vector<16x128xf32>
    %59 = arith.mulf %52, %9 : vector<16x128xf32>
    %60 = arith.mulf %58, %59 : vector<16x128xf32>
    %61 = arith.mulf %37, %56 : vector<16x128xf32>
    %62 = arith.addf %60, %61 : vector<16x128xf32>
    %c0_22 = arith.constant 0 : index
    %c0_23 = arith.constant 0 : index
    %63 = arith.index_cast %11 : i32 to index
    %c0_24 = arith.constant 0 : index
    %64 = vector.load %arg7[%c0_22, %c0_23, %63, %c0_24] : memref<1x1x96x128xf32, #tpu.memory_space<vmem>>, vector<1x1x16x128xf32>
    %65 = vector.shape_cast %64 : vector<1x1x16x128xf32> to vector<16x128xf32>
    %66 = vector.shape_cast %62 : vector<16x128xf32> to vector<1x1x16x128xf32>
    tpu.vector_store %arg7[%c0_22, %c0_23, %63, %c0_24], %66 {strides = array<i32>} : memref<1x1x96x128xf32, #tpu.memory_space<vmem>>, vector<1x1x16x128xf32>,
    %c1_i32 = arith.constant 1 : i32
    %c16_i32_25 = arith.constant 16 : i32
    %67 = arith.muli %c1_i32, %c16_i32_25 : i32
    %68 = tpu.assume_multiple %67, 16 : i32
    %69 = arith.index_cast %68 : i32 to index
    %c0_26 = arith.constant 0 : index
    %70 = vector.load %arg9[%69, %c0_26] : memref<96x640xbf16, #tpu.memory_space<vmem>>, vector<16x640xbf16>
    %71 = arith.extf %70 : vector<16x640xbf16> to vector<16x640xf32>
    %72 = arith.truncf %62 : vector<16x128xf32> to vector<16x128xbf16>
    %c0_27 = arith.constant 0 : index
    %c0_28 = arith.constant 0 : index
    %73 = vector.load %arg4[%c0_27, %c0_28] : memref<128x512xbf16, #tpu.memory_space<vmem>>, vector<128x512xbf16>
    %cst_29 = arith.constant dense<0.000000e+00> : vector<16x512xf32>
    %74 = tpu.matmul %72, %73, %cst_29 {dimension_numbers = #tpu.dot_dimension_numbers<[1], [0], [0], [1], [0, 0, 1, 1], [], []>} : vector<16x128xbf16>, vector<128x512xbf16>, vector<16x512xf32> -> vector<16x512xf32>
    %75 = vector.extract_strided_slice %74 {offsets = [0, 0], sizes = [16, 128], strides = [1, 1]} : vector<16x512xf32> to vector<16x128xf32>
    %76 = vector.extract_strided_slice %71 {offsets = [0, 0], sizes = [16, 128], strides = [1, 1]} : vector<16x640xf32> to vector<16x128xf32>
    %77 = arith.addf %75, %76 : vector<16x128xf32>
    %78 = math.tanh %77 : vector<16x128xf32>
    %79 = vector.extract_strided_slice %74 {offsets = [0, 256], sizes = [16, 128], strides = [1, 1]} : vector<16x512xf32> to vector<16x128xf32>
    %80 = vector.extract_strided_slice %71 {offsets = [0, 256], sizes = [16, 128], strides = [1, 1]} : vector<16x640xf32> to vector<16x128xf32>
    %81 = arith.addf %79, %80 : vector<16x128xf32>
    %82 = arith.negf %81 : vector<16x128xf32>
    %83 = math.exp %82 : vector<16x128xf32>
    %cst_30 = arith.constant 1.000000e+00 : f32
    %84 = vector.broadcast %cst_30 : f32 to vector<16x128xf32>
    %85 = arith.addf %84, %83 : vector<16x128xf32>
    %86 = arith.divf %84, %85 : vector<16x128xf32>
    %87 = vector.extract_strided_slice %74 {offsets = [0, 384], sizes = [16, 128], strides = [1, 1]} : vector<16x512xf32> to vector<16x128xf32>
    %88 = vector.extract_strided_slice %71 {offsets = [0, 384], sizes = [16, 128], strides = [1, 1]} : vector<16x640xf32> to vector<16x128xf32>
    %89 = arith.addf %87, %88 : vector<16x128xf32>
    %90 = arith.negf %89 : vector<16x128xf32>
    %91 = math.exp %90 : vector<16x128xf32>
    %cst_31 = arith.constant 1.000000e+00 : f32
    %92 = vector.broadcast %cst_31 : f32 to vector<16x128xf32>
    %93 = arith.addf %92, %91 : vector<16x128xf32>
    %94 = arith.divf %92, %93 : vector<16x128xf32>
    %95 = arith.mulf %86, %62 : vector<16x128xf32>
    %96 = tpu.concatenate %78, %95 in 1 : vector<16x128xf32>, vector<16x128xf32> -> vector<16x256xf32>
    %97 = arith.truncf %96 : vector<16x256xf32> to vector<16x256xbf16>
    %c0_32 = arith.constant 0 : index
    %c0_33 = arith.constant 0 : index
    %98 = vector.load %arg5[%c0_32, %c0_33] : memref<256x256xbf16, #tpu.memory_space<vmem>>, vector<256x256xbf16>
    %cst_34 = arith.constant dense<0.000000e+00> : vector<16x256xf32>
    %99 = tpu.matmul %97, %98, %cst_34 {dimension_numbers = #tpu.dot_dimension_numbers<[1], [0], [0], [1], [0, 0, 1, 1], [], []>} : vector<16x256xbf16>, vector<256x256xbf16>, vector<16x256xf32> -> vector<16x256xf32>
    %100 = vector.extract_strided_slice %74 {offsets = [0, 128], sizes = [16, 128], strides = [1, 1]} : vector<16x512xf32> to vector<16x128xf32>
    %101 = vector.extract_strided_slice %71 {offsets = [0, 128], sizes = [16, 128], strides = [1, 1]} : vector<16x640xf32> to vector<16x128xf32>
    %102 = arith.addf %100, %101 : vector<16x128xf32>
    %103 = vector.extract_strided_slice %99 {offsets = [0, 0], sizes = [16, 128], strides = [1, 1]} : vector<16x256xf32> to vector<16x128xf32>
    %104 = arith.addf %102, %103 : vector<16x128xf32>
    %105 = arith.negf %104 : vector<16x128xf32>
    %106 = math.exp %105 : vector<16x128xf32>
    %cst_35 = arith.constant 1.000000e+00 : f32
    %107 = vector.broadcast %cst_35 : f32 to vector<16x128xf32>
    %108 = arith.addf %107, %106 : vector<16x128xf32>
    %109 = arith.divf %107, %108 : vector<16x128xf32>
    %110 = vector.extract_strided_slice %99 {offsets = [0, 128], sizes = [16, 128], strides = [1, 1]} : vector<16x256xf32> to vector<16x128xf32>
    %111 = vector.extract_strided_slice %71 {offsets = [0, 512], sizes = [16, 128], strides = [1, 1]} : vector<16x640xf32> to vector<16x128xf32>
    %112 = arith.addf %110, %111 : vector<16x128xf32>
    %113 = math.tanh %112 : vector<16x128xf32>
    %cst_36 = arith.constant 1.000000e+00 : f32
    %114 = vector.broadcast %cst_36 : f32 to vector<16x128xf32>
    %115 = arith.subf %114, %94 : vector<16x128xf32>
    %116 = arith.mulf %109, %62 : vector<16x128xf32>
    %117 = arith.mulf %115, %116 : vector<16x128xf32>
    %118 = arith.mulf %94, %113 : vector<16x128xf32>
    %119 = arith.addf %117, %118 : vector<16x128xf32>
    %c0_37 = arith.constant 0 : index
    %c0_38 = arith.constant 0 : index
    %120 = arith.index_cast %68 : i32 to index
    %c0_39 = arith.constant 0 : index
    %121 = vector.load %arg7[%c0_37, %c0_38, %120, %c0_39] : memref<1x1x96x128xf32, #tpu.memory_space<vmem>>, vector<1x1x16x128xf32>
    %122 = vector.shape_cast %121 : vector<1x1x16x128xf32> to vector<16x128xf32>
    %123 = vector.shape_cast %119 : vector<16x128xf32> to vector<1x1x16x128xf32>
    tpu.vector_store %arg7[%c0_37, %c0_38, %120, %c0_39], %123 {strides = array<i32>} : memref<1x1x96x128xf32, #tpu.memory_space<vmem>>, vector<1x1x16x128xf32>,
    %c2_i32 = arith.constant 2 : i32
    %c16_i32_40 = arith.constant 16 : i32
    %124 = arith.muli %c2_i32, %c16_i32_40 : i32
    %125 = tpu.assume_multiple %124, 16 : i32
    %126 = arith.index_cast %125 : i32 to index
    %c0_41 = arith.constant 0 : index
    %127 = vector.load %arg9[%126, %c0_41] : memref<96x640xbf16, #tpu.memory_space<vmem>>, vector<16x640xbf16>
    %128 = arith.extf %127 : vector<16x640xbf16> to vector<16x640xf32>
    %129 = arith.truncf %119 : vector<16x128xf32> to vector<16x128xbf16>
    %c0_42 = arith.constant 0 : index
    %c0_43 = arith.constant 0 : index
    %130 = vector.load %arg4[%c0_42, %c0_43] : memref<128x512xbf16, #tpu.memory_space<vmem>>, vector<128x512xbf16>
    %cst_44 = arith.constant dense<0.000000e+00> : vector<16x512xf32>
    %131 = tpu.matmul %129, %130, %cst_44 {dimension_numbers = #tpu.dot_dimension_numbers<[1], [0], [0], [1], [0, 0, 1, 1], [], []>} : vector<16x128xbf16>, vector<128x512xbf16>, vector<16x512xf32> -> vector<16x512xf32>
    %132 = vector.extract_strided_slice %131 {offsets = [0, 0], sizes = [16, 128], strides = [1, 1]} : vector<16x512xf32> to vector<16x128xf32>
    %133 = vector.extract_strided_slice %128 {offsets = [0, 0], sizes = [16, 128], strides = [1, 1]} : vector<16x640xf32> to vector<16x128xf32>
    %134 = arith.addf %132, %133 : vector<16x128xf32>
    %135 = math.tanh %134 : vector<16x128xf32>
    %136 = vector.extract_strided_slice %131 {offsets = [0, 256], sizes = [16, 128], strides = [1, 1]} : vector<16x512xf32> to vector<16x128xf32>
    %137 = vector.extract_strided_slice %128 {offsets = [0, 256], sizes = [16, 128], strides = [1, 1]} : vector<16x640xf32> to vector<16x128xf32>
    %138 = arith.addf %136, %137 : vector<16x128xf32>
    %139 = arith.negf %138 : vector<16x128xf32>
    %140 = math.exp %139 : vector<16x128xf32>
    %cst_45 = arith.constant 1.000000e+00 : f32
    %141 = vector.broadcast %cst_45 : f32 to vector<16x128xf32>
    %142 = arith.addf %141, %140 : vector<16x128xf32>
    %143 = arith.divf %141, %142 : vector<16x128xf32>
    %144 = vector.extract_strided_slice %131 {offsets = [0, 384], sizes = [16, 128], strides = [1, 1]} : vector<16x512xf32> to vector<16x128xf32>
    %145 = vector.extract_strided_slice %128 {offsets = [0, 384], sizes = [16, 128], strides = [1, 1]} : vector<16x640xf32> to vector<16x128xf32>
    %146 = arith.addf %144, %145 : vector<16x128xf32>
    %147 = arith.negf %146 : vector<16x128xf32>
    %148 = math.exp %147 : vector<16x128xf32>
    %cst_46 = arith.constant 1.000000e+00 : f32
    %149 = vector.broadcast %cst_46 : f32 to vector<16x128xf32>
    %150 = arith.addf %149, %148 : vector<16x128xf32>
    %151 = arith.divf %149, %150 : vector<16x128xf32>
    %152 = arith.mulf %143, %119 : vector<16x128xf32>
    %153 = tpu.concatenate %135, %152 in 1 : vector<16x128xf32>, vector<16x128xf32> -> vector<16x256xf32>
    %154 = arith.truncf %153 : vector<16x256xf32> to vector<16x256xbf16>
    %c0_47 = arith.constant 0 : index
    %c0_48 = arith.constant 0 : index
    %155 = vector.load %arg5[%c0_47, %c0_48] : memref<256x256xbf16, #tpu.memory_space<vmem>>, vector<256x256xbf16>
    %cst_49 = arith.constant dense<0.000000e+00> : vector<16x256xf32>
    %156 = tpu.matmul %154, %155, %cst_49 {dimension_numbers = #tpu.dot_dimension_numbers<[1], [0], [0], [1], [0, 0, 1, 1], [], []>} : vector<16x256xbf16>, vector<256x256xbf16>, vector<16x256xf32> -> vector<16x256xf32>
    %157 = vector.extract_strided_slice %131 {offsets = [0, 128], sizes = [16, 128], strides = [1, 1]} : vector<16x512xf32> to vector<16x128xf32>
    %158 = vector.extract_strided_slice %128 {offsets = [0, 128], sizes = [16, 128], strides = [1, 1]} : vector<16x640xf32> to vector<16x128xf32>
    %159 = arith.addf %157, %158 : vector<16x128xf32>
    %160 = vector.extract_strided_slice %156 {offsets = [0, 0], sizes = [16, 128], strides = [1, 1]} : vector<16x256xf32> to vector<16x128xf32>
    %161 = arith.addf %159, %160 : vector<16x128xf32>
    %162 = arith.negf %161 : vector<16x128xf32>
    %163 = math.exp %162 : vector<16x128xf32>
    %cst_50 = arith.constant 1.000000e+00 : f32
    %164 = vector.broadcast %cst_50 : f32 to vector<16x128xf32>
    %165 = arith.addf %164, %163 : vector<16x128xf32>
    %166 = arith.divf %164, %165 : vector<16x128xf32>
    %167 = vector.extract_strided_slice %156 {offsets = [0, 128], sizes = [16, 128], strides = [1, 1]} : vector<16x256xf32> to vector<16x128xf32>
    %168 = vector.extract_strided_slice %128 {offsets = [0, 512], sizes = [16, 128], strides = [1, 1]} : vector<16x640xf32> to vector<16x128xf32>
    %169 = arith.addf %167, %168 : vector<16x128xf32>
    %170 = math.tanh %169 : vector<16x128xf32>
    %cst_51 = arith.constant 1.000000e+00 : f32
    %171 = vector.broadcast %cst_51 : f32 to vector<16x128xf32>
    %172 = arith.subf %171, %151 : vector<16x128xf32>
    %173 = arith.mulf %166, %119 : vector<16x128xf32>
    %174 = arith.mulf %172, %173 : vector<16x128xf32>
    %175 = arith.mulf %151, %170 : vector<16x128xf32>
    %176 = arith.addf %174, %175 : vector<16x128xf32>
    %c0_52 = arith.constant 0 : index
    %c0_53 = arith.constant 0 : index
    %177 = arith.index_cast %125 : i32 to index
    %c0_54 = arith.constant 0 : index
    %178 = vector.load %arg7[%c0_52, %c0_53, %177, %c0_54] : memref<1x1x96x128xf32, #tpu.memory_space<vmem>>, vector<1x1x16x128xf32>
    %179 = vector.shape_cast %178 : vector<1x1x16x128xf32> to vector<16x128xf32>
    %180 = vector.shape_cast %176 : vector<16x128xf32> to vector<1x1x16x128xf32>
    tpu.vector_store %arg7[%c0_52, %c0_53, %177, %c0_54], %180 {strides = array<i32>} : memref<1x1x96x128xf32, #tpu.memory_space<vmem>>, vector<1x1x16x128xf32>,
    %c3_i32 = arith.constant 3 : i32
    %c16_i32_55 = arith.constant 16 : i32
    %181 = arith.muli %c3_i32, %c16_i32_55 : i32
    %182 = tpu.assume_multiple %181, 16 : i32
    %183 = arith.index_cast %182 : i32 to index
    %c0_56 = arith.constant 0 : index
    %184 = vector.load %arg9[%183, %c0_56] : memref<96x640xbf16, #tpu.memory_space<vmem>>, vector<16x640xbf16>
    %185 = arith.extf %184 : vector<16x640xbf16> to vector<16x640xf32>
    %186 = arith.truncf %176 : vector<16x128xf32> to vector<16x128xbf16>
    %c0_57 = arith.constant 0 : index
    %c0_58 = arith.constant 0 : index
    %187 = vector.load %arg4[%c0_57, %c0_58] : memref<128x512xbf16, #tpu.memory_space<vmem>>, vector<128x512xbf16>
    %cst_59 = arith.constant dense<0.000000e+00> : vector<16x512xf32>
    %188 = tpu.matmul %186, %187, %cst_59 {dimension_numbers = #tpu.dot_dimension_numbers<[1], [0], [0], [1], [0, 0, 1, 1], [], []>} : vector<16x128xbf16>, vector<128x512xbf16>, vector<16x512xf32> -> vector<16x512xf32>
    %189 = vector.extract_strided_slice %188 {offsets = [0, 0], sizes = [16, 128], strides = [1, 1]} : vector<16x512xf32> to vector<16x128xf32>
    %190 = vector.extract_strided_slice %185 {offsets = [0, 0], sizes = [16, 128], strides = [1, 1]} : vector<16x640xf32> to vector<16x128xf32>
    %191 = arith.addf %189, %190 : vector<16x128xf32>
    %192 = math.tanh %191 : vector<16x128xf32>
    %193 = vector.extract_strided_slice %188 {offsets = [0, 256], sizes = [16, 128], strides = [1, 1]} : vector<16x512xf32> to vector<16x128xf32>
    %194 = vector.extract_strided_slice %185 {offsets = [0, 256], sizes = [16, 128], strides = [1, 1]} : vector<16x640xf32> to vector<16x128xf32>
    %195 = arith.addf %193, %194 : vector<16x128xf32>
    %196 = arith.negf %195 : vector<16x128xf32>
    %197 = math.exp %196 : vector<16x128xf32>
    %cst_60 = arith.constant 1.000000e+00 : f32
    %198 = vector.broadcast %cst_60 : f32 to vector<16x128xf32>
    %199 = arith.addf %198, %197 : vector<16x128xf32>
    %200 = arith.divf %198, %199 : vector<16x128xf32>
    %201 = vector.extract_strided_slice %188 {offsets = [0, 384], sizes = [16, 128], strides = [1, 1]} : vector<16x512xf32> to vector<16x128xf32>
    %202 = vector.extract_strided_slice %185 {offsets = [0, 384], sizes = [16, 128], strides = [1, 1]} : vector<16x640xf32> to vector<16x128xf32>
    %203 = arith.addf %201, %202 : vector<16x128xf32>
    %204 = arith.negf %203 : vector<16x128xf32>
    %205 = math.exp %204 : vector<16x128xf32>
    %cst_61 = arith.constant 1.000000e+00 : f32
    %206 = vector.broadcast %cst_61 : f32 to vector<16x128xf32>
    %207 = arith.addf %206, %205 : vector<16x128xf32>
    %208 = arith.divf %206, %207 : vector<16x128xf32>
    %209 = arith.mulf %200, %176 : vector<16x128xf32>
    %210 = tpu.concatenate %192, %209 in 1 : vector<16x128xf32>, vector<16x128xf32> -> vector<16x256xf32>
    %211 = arith.truncf %210 : vector<16x256xf32> to vector<16x256xbf16>
    %c0_62 = arith.constant 0 : index
    %c0_63 = arith.constant 0 : index
    %212 = vector.load %arg5[%c0_62, %c0_63] : memref<256x256xbf16, #tpu.memory_space<vmem>>, vector<256x256xbf16>
    %cst_64 = arith.constant dense<0.000000e+00> : vector<16x256xf32>
    %213 = tpu.matmul %211, %212, %cst_64 {dimension_numbers = #tpu.dot_dimension_numbers<[1], [0], [0], [1], [0, 0, 1, 1], [], []>} : vector<16x256xbf16>, vector<256x256xbf16>, vector<16x256xf32> -> vector<16x256xf32>
    %214 = vector.extract_strided_slice %188 {offsets = [0, 128], sizes = [16, 128], strides = [1, 1]} : vector<16x512xf32> to vector<16x128xf32>
    %215 = vector.extract_strided_slice %185 {offsets = [0, 128], sizes = [16, 128], strides = [1, 1]} : vector<16x640xf32> to vector<16x128xf32>
    %216 = arith.addf %214, %215 : vector<16x128xf32>
    %217 = vector.extract_strided_slice %213 {offsets = [0, 0], sizes = [16, 128], strides = [1, 1]} : vector<16x256xf32> to vector<16x128xf32>
    %218 = arith.addf %216, %217 : vector<16x128xf32>
    %219 = arith.negf %218 : vector<16x128xf32>
    %220 = math.exp %219 : vector<16x128xf32>
    %cst_65 = arith.constant 1.000000e+00 : f32
    %221 = vector.broadcast %cst_65 : f32 to vector<16x128xf32>
    %222 = arith.addf %221, %220 : vector<16x128xf32>
    %223 = arith.divf %221, %222 : vector<16x128xf32>
    %224 = vector.extract_strided_slice %213 {offsets = [0, 128], sizes = [16, 128], strides = [1, 1]} : vector<16x256xf32> to vector<16x128xf32>
    %225 = vector.extract_strided_slice %185 {offsets = [0, 512], sizes = [16, 128], strides = [1, 1]} : vector<16x640xf32> to vector<16x128xf32>
    %226 = arith.addf %224, %225 : vector<16x128xf32>
    %227 = math.tanh %226 : vector<16x128xf32>
    %cst_66 = arith.constant 1.000000e+00 : f32
    %228 = vector.broadcast %cst_66 : f32 to vector<16x128xf32>
    %229 = arith.subf %228, %208 : vector<16x128xf32>
    %230 = arith.mulf %223, %176 : vector<16x128xf32>
    %231 = arith.mulf %229, %230 : vector<16x128xf32>
    %232 = arith.mulf %208, %227 : vector<16x128xf32>
    %233 = arith.addf %231, %232 : vector<16x128xf32>
    %c0_67 = arith.constant 0 : index
    %c0_68 = arith.constant 0 : index
    %234 = arith.index_cast %182 : i32 to index
    %c0_69 = arith.constant 0 : index
    %235 = vector.load %arg7[%c0_67, %c0_68, %234, %c0_69] : memref<1x1x96x128xf32, #tpu.memory_space<vmem>>, vector<1x1x16x128xf32>
    %236 = vector.shape_cast %235 : vector<1x1x16x128xf32> to vector<16x128xf32>
    %237 = vector.shape_cast %233 : vector<16x128xf32> to vector<1x1x16x128xf32>
    tpu.vector_store %arg7[%c0_67, %c0_68, %234, %c0_69], %237 {strides = array<i32>} : memref<1x1x96x128xf32, #tpu.memory_space<vmem>>, vector<1x1x16x128xf32>,
    %c4_i32 = arith.constant 4 : i32
    %c16_i32_70 = arith.constant 16 : i32
    %238 = arith.muli %c4_i32, %c16_i32_70 : i32
    %239 = tpu.assume_multiple %238, 16 : i32
    %240 = arith.index_cast %239 : i32 to index
    %c0_71 = arith.constant 0 : index
    %241 = vector.load %arg9[%240, %c0_71] : memref<96x640xbf16, #tpu.memory_space<vmem>>, vector<16x640xbf16>
    %242 = arith.extf %241 : vector<16x640xbf16> to vector<16x640xf32>
    %243 = arith.truncf %233 : vector<16x128xf32> to vector<16x128xbf16>
    %c0_72 = arith.constant 0 : index
    %c0_73 = arith.constant 0 : index
    %244 = vector.load %arg4[%c0_72, %c0_73] : memref<128x512xbf16, #tpu.memory_space<vmem>>, vector<128x512xbf16>
    %cst_74 = arith.constant dense<0.000000e+00> : vector<16x512xf32>
    %245 = tpu.matmul %243, %244, %cst_74 {dimension_numbers = #tpu.dot_dimension_numbers<[1], [0], [0], [1], [0, 0, 1, 1], [], []>} : vector<16x128xbf16>, vector<128x512xbf16>, vector<16x512xf32> -> vector<16x512xf32>
    %246 = vector.extract_strided_slice %245 {offsets = [0, 0], sizes = [16, 128], strides = [1, 1]} : vector<16x512xf32> to vector<16x128xf32>
    %247 = vector.extract_strided_slice %242 {offsets = [0, 0], sizes = [16, 128], strides = [1, 1]} : vector<16x640xf32> to vector<16x128xf32>
    %248 = arith.addf %246, %247 : vector<16x128xf32>
    %249 = math.tanh %248 : vector<16x128xf32>
    %250 = vector.extract_strided_slice %245 {offsets = [0, 256], sizes = [16, 128], strides = [1, 1]} : vector<16x512xf32> to vector<16x128xf32>
    %251 = vector.extract_strided_slice %242 {offsets = [0, 256], sizes = [16, 128], strides = [1, 1]} : vector<16x640xf32> to vector<16x128xf32>
    %252 = arith.addf %250, %251 : vector<16x128xf32>
    %253 = arith.negf %252 : vector<16x128xf32>
    %254 = math.exp %253 : vector<16x128xf32>
    %cst_75 = arith.constant 1.000000e+00 : f32
    %255 = vector.broadcast %cst_75 : f32 to vector<16x128xf32>
    %256 = arith.addf %255, %254 : vector<16x128xf32>
    %257 = arith.divf %255, %256 : vector<16x128xf32>
    %258 = vector.extract_strided_slice %245 {offsets = [0, 384], sizes = [16, 128], strides = [1, 1]} : vector<16x512xf32> to vector<16x128xf32>
    %259 = vector.extract_strided_slice %242 {offsets = [0, 384], sizes = [16, 128], strides = [1, 1]} : vector<16x640xf32> to vector<16x128xf32>
    %260 = arith.addf %258, %259 : vector<16x128xf32>
    %261 = arith.negf %260 : vector<16x128xf32>
    %262 = math.exp %261 : vector<16x128xf32>
    %cst_76 = arith.constant 1.000000e+00 : f32
    %263 = vector.broadcast %cst_76 : f32 to vector<16x128xf32>
    %264 = arith.addf %263, %262 : vector<16x128xf32>
    %265 = arith.divf %263, %264 : vector<16x128xf32>
    %266 = arith.mulf %257, %233 : vector<16x128xf32>
    %267 = tpu.concatenate %249, %266 in 1 : vector<16x128xf32>, vector<16x128xf32> -> vector<16x256xf32>
    %268 = arith.truncf %267 : vector<16x256xf32> to vector<16x256xbf16>
    %c0_77 = arith.constant 0 : index
    %c0_78 = arith.constant 0 : index
    %269 = vector.load %arg5[%c0_77, %c0_78] : memref<256x256xbf16, #tpu.memory_space<vmem>>, vector<256x256xbf16>
    %cst_79 = arith.constant dense<0.000000e+00> : vector<16x256xf32>
    %270 = tpu.matmul %268, %269, %cst_79 {dimension_numbers = #tpu.dot_dimension_numbers<[1], [0], [0], [1], [0, 0, 1, 1], [], []>} : vector<16x256xbf16>, vector<256x256xbf16>, vector<16x256xf32> -> vector<16x256xf32>
    %271 = vector.extract_strided_slice %245 {offsets = [0, 128], sizes = [16, 128], strides = [1, 1]} : vector<16x512xf32> to vector<16x128xf32>
    %272 = vector.extract_strided_slice %242 {offsets = [0, 128], sizes = [16, 128], strides = [1, 1]} : vector<16x640xf32> to vector<16x128xf32>
    %273 = arith.addf %271, %272 : vector<16x128xf32>
    %274 = vector.extract_strided_slice %270 {offsets = [0, 0], sizes = [16, 128], strides = [1, 1]} : vector<16x256xf32> to vector<16x128xf32>
    %275 = arith.addf %273, %274 : vector<16x128xf32>
    %276 = arith.negf %275 : vector<16x128xf32>
    %277 = math.exp %276 : vector<16x128xf32>
    %cst_80 = arith.constant 1.000000e+00 : f32
    %278 = vector.broadcast %cst_80 : f32 to vector<16x128xf32>
    %279 = arith.addf %278, %277 : vector<16x128xf32>
    %280 = arith.divf %278, %279 : vector<16x128xf32>
    %281 = vector.extract_strided_slice %270 {offsets = [0, 128], sizes = [16, 128], strides = [1, 1]} : vector<16x256xf32> to vector<16x128xf32>
    %282 = vector.extract_strided_slice %242 {offsets = [0, 512], sizes = [16, 128], strides = [1, 1]} : vector<16x640xf32> to vector<16x128xf32>
    %283 = arith.addf %281, %282 : vector<16x128xf32>
    %284 = math.tanh %283 : vector<16x128xf32>
    %cst_81 = arith.constant 1.000000e+00 : f32
    %285 = vector.broadcast %cst_81 : f32 to vector<16x128xf32>
    %286 = arith.subf %285, %265 : vector<16x128xf32>
    %287 = arith.mulf %280, %233 : vector<16x128xf32>
    %288 = arith.mulf %286, %287 : vector<16x128xf32>
    %289 = arith.mulf %265, %284 : vector<16x128xf32>
    %290 = arith.addf %288, %289 : vector<16x128xf32>
    %c0_82 = arith.constant 0 : index
    %c0_83 = arith.constant 0 : index
    %291 = arith.index_cast %239 : i32 to index
    %c0_84 = arith.constant 0 : index
    %292 = vector.load %arg7[%c0_82, %c0_83, %291, %c0_84] : memref<1x1x96x128xf32, #tpu.memory_space<vmem>>, vector<1x1x16x128xf32>
    %293 = vector.shape_cast %292 : vector<1x1x16x128xf32> to vector<16x128xf32>
    %294 = vector.shape_cast %290 : vector<16x128xf32> to vector<1x1x16x128xf32>
    tpu.vector_store %arg7[%c0_82, %c0_83, %291, %c0_84], %294 {strides = array<i32>} : memref<1x1x96x128xf32, #tpu.memory_space<vmem>>, vector<1x1x16x128xf32>,
    %c5_i32 = arith.constant 5 : i32
    %c16_i32_85 = arith.constant 16 : i32
    %295 = arith.muli %c5_i32, %c16_i32_85 : i32
    %296 = tpu.assume_multiple %295, 16 : i32
    %297 = arith.index_cast %296 : i32 to index
    %c0_86 = arith.constant 0 : index
    %298 = vector.load %arg9[%297, %c0_86] : memref<96x640xbf16, #tpu.memory_space<vmem>>, vector<16x640xbf16>
    %299 = arith.extf %298 : vector<16x640xbf16> to vector<16x640xf32>
    %300 = arith.truncf %290 : vector<16x128xf32> to vector<16x128xbf16>
    %c0_87 = arith.constant 0 : index
    %c0_88 = arith.constant 0 : index
    %301 = vector.load %arg4[%c0_87, %c0_88] : memref<128x512xbf16, #tpu.memory_space<vmem>>, vector<128x512xbf16>
    %cst_89 = arith.constant dense<0.000000e+00> : vector<16x512xf32>
    %302 = tpu.matmul %300, %301, %cst_89 {dimension_numbers = #tpu.dot_dimension_numbers<[1], [0], [0], [1], [0, 0, 1, 1], [], []>} : vector<16x128xbf16>, vector<128x512xbf16>, vector<16x512xf32> -> vector<16x512xf32>
    %303 = vector.extract_strided_slice %302 {offsets = [0, 0], sizes = [16, 128], strides = [1, 1]} : vector<16x512xf32> to vector<16x128xf32>
    %304 = vector.extract_strided_slice %299 {offsets = [0, 0], sizes = [16, 128], strides = [1, 1]} : vector<16x640xf32> to vector<16x128xf32>
    %305 = arith.addf %303, %304 : vector<16x128xf32>
    %306 = math.tanh %305 : vector<16x128xf32>
    %307 = vector.extract_strided_slice %302 {offsets = [0, 256], sizes = [16, 128], strides = [1, 1]} : vector<16x512xf32> to vector<16x128xf32>
    %308 = vector.extract_strided_slice %299 {offsets = [0, 256], sizes = [16, 128], strides = [1, 1]} : vector<16x640xf32> to vector<16x128xf32>
    %309 = arith.addf %307, %308 : vector<16x128xf32>
    %310 = arith.negf %309 : vector<16x128xf32>
    %311 = math.exp %310 : vector<16x128xf32>
    %cst_90 = arith.constant 1.000000e+00 : f32
    %312 = vector.broadcast %cst_90 : f32 to vector<16x128xf32>
    %313 = arith.addf %312, %311 : vector<16x128xf32>
    %314 = arith.divf %312, %313 : vector<16x128xf32>
    %315 = vector.extract_strided_slice %302 {offsets = [0, 384], sizes = [16, 128], strides = [1, 1]} : vector<16x512xf32> to vector<16x128xf32>
    %316 = vector.extract_strided_slice %299 {offsets = [0, 384], sizes = [16, 128], strides = [1, 1]} : vector<16x640xf32> to vector<16x128xf32>
    %317 = arith.addf %315, %316 : vector<16x128xf32>
    %318 = arith.negf %317 : vector<16x128xf32>
    %319 = math.exp %318 : vector<16x128xf32>
    %cst_91 = arith.constant 1.000000e+00 : f32
    %320 = vector.broadcast %cst_91 : f32 to vector<16x128xf32>
    %321 = arith.addf %320, %319 : vector<16x128xf32>
    %322 = arith.divf %320, %321 : vector<16x128xf32>
    %323 = arith.mulf %314, %290 : vector<16x128xf32>
    %324 = tpu.concatenate %306, %323 in 1 : vector<16x128xf32>, vector<16x128xf32> -> vector<16x256xf32>
    %325 = arith.truncf %324 : vector<16x256xf32> to vector<16x256xbf16>
    %c0_92 = arith.constant 0 : index
    %c0_93 = arith.constant 0 : index
    %326 = vector.load %arg5[%c0_92, %c0_93] : memref<256x256xbf16, #tpu.memory_space<vmem>>, vector<256x256xbf16>
    %cst_94 = arith.constant dense<0.000000e+00> : vector<16x256xf32>
    %327 = tpu.matmul %325, %326, %cst_94 {dimension_numbers = #tpu.dot_dimension_numbers<[1], [0], [0], [1], [0, 0, 1, 1], [], []>} : vector<16x256xbf16>, vector<256x256xbf16>, vector<16x256xf32> -> vector<16x256xf32>
    %328 = vector.extract_strided_slice %302 {offsets = [0, 128], sizes = [16, 128], strides = [1, 1]} : vector<16x512xf32> to vector<16x128xf32>
    %329 = vector.extract_strided_slice %299 {offsets = [0, 128], sizes = [16, 128], strides = [1, 1]} : vector<16x640xf32> to vector<16x128xf32>
    %330 = arith.addf %328, %329 : vector<16x128xf32>
    %331 = vector.extract_strided_slice %327 {offsets = [0, 0], sizes = [16, 128], strides = [1, 1]} : vector<16x256xf32> to vector<16x128xf32>
    %332 = arith.addf %330, %331 : vector<16x128xf32>
    %333 = arith.negf %332 : vector<16x128xf32>
    %334 = math.exp %333 : vector<16x128xf32>
    %cst_95 = arith.constant 1.000000e+00 : f32
    %335 = vector.broadcast %cst_95 : f32 to vector<16x128xf32>
    %336 = arith.addf %335, %334 : vector<16x128xf32>
    %337 = arith.divf %335, %336 : vector<16x128xf32>
    %338 = vector.extract_strided_slice %327 {offsets = [0, 128], sizes = [16, 128], strides = [1, 1]} : vector<16x256xf32> to vector<16x128xf32>
    %339 = vector.extract_strided_slice %299 {offsets = [0, 512], sizes = [16, 128], strides = [1, 1]} : vector<16x640xf32> to vector<16x128xf32>
    %340 = arith.addf %338, %339 : vector<16x128xf32>
    %341 = math.tanh %340 : vector<16x128xf32>
    %cst_96 = arith.constant 1.000000e+00 : f32
    %342 = vector.broadcast %cst_96 : f32 to vector<16x128xf32>
    %343 = arith.subf %342, %322 : vector<16x128xf32>
    %344 = arith.mulf %337, %290 : vector<16x128xf32>
    %345 = arith.mulf %343, %344 : vector<16x128xf32>
    %346 = arith.mulf %322, %341 : vector<16x128xf32>
    %347 = arith.addf %345, %346 : vector<16x128xf32>
    %c0_97 = arith.constant 0 : index
    %c0_98 = arith.constant 0 : index
    %348 = arith.index_cast %296 : i32 to index
    %c0_99 = arith.constant 0 : index
    %349 = vector.load %arg7[%c0_97, %c0_98, %348, %c0_99] : memref<1x1x96x128xf32, #tpu.memory_space<vmem>>, vector<1x1x16x128xf32>
    %350 = vector.shape_cast %349 : vector<1x1x16x128xf32> to vector<16x128xf32>
    %351 = vector.shape_cast %347 : vector<16x128xf32> to vector<1x1x16x128xf32>
    tpu.vector_store %arg7[%c0_97, %c0_98, %348, %c0_99], %351 {strides = array<i32>} : memref<1x1x96x128xf32, #tpu.memory_space<vmem>>, vector<1x1x16x128xf32>,
    %c6_i32 = arith.constant 6 : i32
    %c0_100 = arith.constant 0 : index
    %c0_101 = arith.constant 0 : index
    %352 = vector.load %arg8[%c0_100, %c0_101] : memref<16x128xf32, #tpu.memory_space<vmem>>, vector<16x128xf32>
    tpu.vector_store %arg8[%c0_100, %c0_101], %347 {strides = array<i32>} : memref<16x128xf32, #tpu.memory_space<vmem>>, vector<16x128xf32>,
    return
  }
  func.func @transform_0(%arg0: i32, %arg1: i32) -> (i32, i32, i32, i32) {
    %c0_i32 = arith.constant 0 : i32
    %c0_i32_0 = arith.constant 0 : i32
    %c0_i32_1 = arith.constant 0 : i32
    return %arg1, %arg0, %c0_i32, %c0_i32_0 : i32, i32, i32, i32
  }
  func.func @transform_1(%arg0: i32, %arg1: i32) -> (i32, i32) {
    %c0_i32 = arith.constant 0 : i32
    %c0_i32_0 = arith.constant 0 : i32
    %c0_i32_1 = arith.constant 0 : i32
    return %c0_i32, %c0_i32_0 : i32, i32
  }
  func.func @transform_2(%arg0: i32, %arg1: i32) -> (i32, i32) {
    %c0_i32 = arith.constant 0 : i32
    %c0_i32_0 = arith.constant 0 : i32
    %c0_i32_1 = arith.constant 0 : i32
    return %c0_i32, %c0_i32_0 : i32, i32
  }
  func.func @transform_3(%arg0: i32, %arg1: i32) -> (i32, i32) {
    %c0_i32 = arith.constant 0 : i32
    %c0_i32_0 = arith.constant 0 : i32
    %c0_i32_1 = arith.constant 0 : i32
    return %c0_i32, %c0_i32_0 : i32, i32
  }
  func.func @transform_4(%arg0: i32, %arg1: i32) -> (i32, i32, i32) {
    %c0_i32 = arith.constant 0 : i32
    %c0_i32_0 = arith.constant 0 : i32
    %c0_i32_1 = arith.constant 0 : i32
    return %arg0, %c0_i32, %c0_i32_0 : i32, i32, i32
  }
  func.func @transform_5(%arg0: i32, %arg1: i32) -> (i32, i32, i32, i32) {
    %c0_i32 = arith.constant 0 : i32
    %c0_i32_0 = arith.constant 0 : i32
    %c0_i32_1 = arith.constant 0 : i32
    return %arg1, %arg0, %c0_i32, %c0_i32_0 : i32, i32, i32, i32
  }
}

</mosaic_0001>

<llo_original>
// kernel: fraud_time_aware_gru.1
$region0: #{fraud_time_aware_gru.1}
  #allocation0 [shape = 'u32[]', space=smem, size = 0x4, offset = 0x4, fixed_abs, tag = 'smem constant byte address 0x4 - core index']
  #allocation1 [shape = 'u32[144,128]{1,0:T(1,128)}', space=vmem, size = 0x12000, scoped, tag = 'internal scratch']
  #allocation2 [shape = 'f32[16,128]{1,0:T(8,128)}', space=vmem, size = 0x2000, scoped, tag = 'scratch operand']
  #allocation3 [shape = 'bf16[96,640]{1,0:T(16,128)(2,1)}', space=vmem, size = 0x1e000, scoped, tag = 'scratch operand']
  %s0 = inlined_call_operand.vmem [shape: bf16[1,1,96,18], index: 0, kind: input, shape index: {}]
  %s1 = inlined_call_operand.vmem [shape: bf16[18,640], index: 1, kind: input, shape index: {}]
  %s2 = inlined_call_operand.vmem [shape: bf16[128,512], index: 2, kind: input, shape index: {}]
  %s3 = inlined_call_operand.vmem [shape: bf16[256,256], index: 3, kind: input, shape index: {}]
  %s4 = inlined_call_operand.vmem [shape: f32[1,16,128], index: 4, kind: input, shape index: {}]
  %s5 = inlined_call_operand.vmem [shape: f32[1,1,96,128], index: 5, kind: output, shape index: {}]
  %s6 = sld [smem:[#allocation0]]
  $region34: #{fraud_time_aware_gru.1} parent=0
    _
  %s8 = ssub.s32 1, %s6
  %s9 = scalar_select 0, %s8, %s6
  // Predicated region
  $region2: #{fraud_time_aware_gru.1} parent=0 // pred_check
    _
  $region3: #{fraud_time_aware_gru.1} parent=0 // pred_check_branch
    %11 = sbr.rel (0) target = $region5
  $region4: #{fraud_time_aware_gru.1} parent=0 // pred_region
    _
  $region5: #{fraud_time_aware_gru.1} parent=0 // pred_fallthru
    _
  // Predicated region
  $region6: #{fraud_time_aware_gru.1} parent=0 // pred_check
    _
  $region7: #{fraud_time_aware_gru.1} parent=0 // pred_check_branch
    %13 = sbr.rel (0) target = $region9
  $region8: #{fraud_time_aware_gru.1} parent=0 // pred_region
    _
  $region9: #{fraud_time_aware_gru.1} parent=0 // pred_fallthru
    _
  // Predicated region
  $region10: #{fraud_time_aware_gru.1} parent=0 // pred_check
    _
  $region11: #{fraud_time_aware_gru.1} parent=0 // pred_check_branch
    %15 = sbr.rel (0) target = $region13
  $region12: #{fraud_time_aware_gru.1} parent=0 // pred_region
    _
  $region13: #{fraud_time_aware_gru.1} parent=0 // pred_fallthru
    _
  // Predicated region
  $region14: #{fraud_time_aware_gru.1} parent=0 // pred_check
    _
  $region15: #{fraud_time_aware_gru.1} parent=0 // pred_check_branch
    %17 = sbr.rel (0) target = $region17
  $region16: #{fraud_time_aware_gru.1} parent=0 // pred_region
    _
  $region17: #{fraud_time_aware_gru.1} parent=0 // pred_fallthru
    _
  // Predicated region
  $region18: #{fraud_time_aware_gru.1} parent=0 // pred_check
    _
  $region19: #{fraud_time_aware_gru.1} parent=0 // pred_check_branch
    %19 = sbr.rel (0) target = $region21
  $region20: #{fraud_time_aware_gru.1} parent=0 // pred_region
    _
  $region21: #{fraud_time_aware_gru.1} parent=0 // pred_fallthru
    _
  %p21 = scmp.eq.s32.totalorder 0, 0
  // Predicated region
  $region22: #{fraud_time_aware_gru.1} parent=0 // pred_check
    %p22 = pneg %p21
  $region23: #{fraud_time_aware_gru.1} parent=0 // pred_check_branch
    %24 = sbr.rel (%p22) target = $region25
  $region24: #{fraud_time_aware_gru.1} parent=0 // pred_region
    %v25 = vld [vmem:[%s4] sm:$0xff]
    %v26 = vld [vmem:[%s4 + $0x8] sm:$0xff]
    %27 = vst [vmem:[#allocation2] sm:$0xff] %v25
    %28 = vst [vmem:[#allocation2 + $0x8] sm:$0xff] %v26
  $region25: #{fraud_time_aware_gru.1} parent=0 // pred_fallthru
    _
  %v29 = vld [vmem:[%s0] sm:$0xf]
  %v30 = vld [vmem:[%s0 + $0x4] sm:$0xf]
  %v31 = vld [vmem:[%s0 + $0x8] sm:$0xf]
  %v32 = vld [vmem:[%s0 + $0xc] sm:$0xf]
  %v33 = vld [vmem:[%s0 + $0x10] sm:$0xf]
  %v34 = vld [vmem:[%s0 + $0x14] sm:$0xf]
  %v35 = vld [vmem:[%s0 + $0x18] sm:$0xf]
  %v36 = vld [vmem:[%s0 + $0x1c] sm:$0xf]
  %v37 = vld [vmem:[%s0 + $0x20] sm:$0xf]
  %v38 = vld [vmem:[%s0 + $0x24] sm:$0xf]
  %v39 = vld [vmem:[%s0 + $0x28] sm:$0xf]
  %v40 = vld [vmem:[%s0 + $0x2c] sm:$0xf]
  %v41 = vld [vmem:[%s1] sm:$0xff]
  %v42 = vld [vmem:[%s1 + $0x8] sm:$0xff]
  %v43 = vld [vmem:[%s1 + $0x10] sm:$0xf]
  %v44 = vld [vmem:[%s1 + $0x14] sm:$0xff]
  %v45 = vld [vmem:[%s1 + $0x1c] sm:$0xff]
  %v46 = vld [vmem:[%s1 + $0x24] sm:$0xf]
  %v47 = vld [vmem:[%s1 + $0x28] sm:$0x11]
  %v48 = vld [vmem:[%s1 + $0x30] sm:$0x11]
  %v49 = vld [vmem:[%s1 + $0x38] sm:$0x1]
  %v62 = vunpack.c.l.b16 %v29
  %v63 = vunpack.c.l.b16 %v30
  %v64 = vunpack.c.l.b16 %v31
  %v65 = vunpack.c.l.b16 %v32
  %v66 = vunpack.c.l.b16 %v33
  %v67 = vunpack.c.l.b16 %v34
  %v68 = vunpack.c.l.b16 %v35
  %v69 = vunpack.c.l.b16 %v36
  %v70 = vunpack.c.l.b16 %v37
  %v71 = vunpack.c.l.b16 %v38
  %v72 = vunpack.c.l.b16 %v39
  %v73 = vunpack.c.l.b16 %v40
  %v74 = vpack.c.b16 %v63, %v62
  %v75 = vpack.c.b16 %v65, %v64
  %v76 = vpack.c.b16 %v67, %v66
  %v77 = vpack.c.b16 %v69, %v68
  %v78 = vpack.c.b16 %v71, %v70
  %v79 = vpack.c.b16 %v73, %v72
  %v89 = vunpack.c.l.b16 %v41
  %v90 = vunpack.c.h.b16 %v41
  %v91 = vunpack.c.l.b16 %v42
  %v92 = vunpack.c.h.b16 %v42
  %v93 = vunpack.c.l.b16 %v43
  %v94 = vunpack.c.l.b16 %v44
  %v95 = vunpack.c.h.b16 %v44
  %v96 = vunpack.c.l.b16 %v45
  %v97 = vunpack.c.h.b16 %v45
  %v98 = vunpack.c.l.b16 %v46
  %v99 = vunpack.c.l.b16 %v47
  %v100 = vunpack.c.h.b16 %v47
  %v101 = vunpack.c.l.b16 %v48
  %v102 = vunpack.c.h.b16 %v48
  %v103 = vunpack.c.l.b16 %v49
  %v104 = vpack.c.b16 %v94, %v89
  %v105 = vpack.c.b16 %v95, %v90
  %v106 = vpack.c.b16 %v96, %v91
  %v107 = vpack.c.b16 %v97, %v92
  %v108 = vpack.c.b16 %v98, %v93
  %v109 = vpack.c.b16 %v99, %v99
  %v110 = vpack.c.b16 %v100, %v100
  %v111 = vpack.c.b16 %v101, %v101
  %v112 = vpack.c.b16 %v102, %v102
  %v113 = vpack.c.b16 %v103, %v103
  %vm119 = vcmask 146432
  %v121 = vsel %vm119, %v74, 0
  %v124 = vsel %vm119, %v75, 0
  %v127 = vsel %vm119, %v76, 0
  %v130 = vsel %vm119, %v77, 0
  %v133 = vsel %vm119, %v78, 0
  %v136 = vsel %vm119, %v79, 0
  %vm138 = vcmask 1040384
  %v140 = vsel %vm138, %v109, 0
  %v143 = vsel %vm138, %v110, 0
  %v146 = vsel %vm138, %v111, 0
  %v149 = vsel %vm138, %v112, 0
  %v152 = vsel %vm138, %v113, 0
  %154 = vmatprep.subr.bf16.mxu0 %v105
  %155 = vmatpush1.bf16.msra.mxu0 %v104
  %156 = vmatprep.subr.bf16.mxu0 %v143
  %157 = vmatpush1.bf16.msra.mxu0 %v140
  %158 = vmatprep.subr.bf16.mxu0 0
  %159 = vmatpush1.bf16.msra.mxu0 0
  %160 = vmatprep.subr.bf16.mxu0 0
  %161 = vmatpush1.bf16.msra.mxu0 0
  %162 = vmatprep.subr.bf16.mxu0 0
  %163 = vmatpush1.bf16.msra.mxu0 0
  %164 = vmatprep.subr.bf16.mxu0 0
  %165 = vmatpush1.bf16.msra.mxu0 0
  %166 = vmatprep.subr.bf16.mxu0 0
  %167 = vmatpush1.bf16.msra.mxu0 0
  %168 = vmatprep.subr.bf16.mxu0 0
  %169 = vmatpush1.bf16.msra.mxu0 0
  %170 = vmatprep.subr.bf16.mxu0 0
  %171 = vmatpush1.bf16.msra.mxu0 0
  %172 = vmatprep.subr.bf16.mxu0 0
  %173 = vmatpush1.bf16.msra.mxu0 0
  %174 = vmatprep.subr.bf16.mxu0 0
  %175 = vmatpush1.bf16.msra.mxu0 0
  %176 = vmatprep.subr.bf16.mxu0 0
  %177 = vmatpush1.bf16.msra.mxu0 0
  %178 = vmatprep.subr.bf16.mxu0 0
  %179 = vmatpush1.bf16.msra.mxu0 0
  %180 = vmatprep.subr.bf16.mxu0 0
  %181 = vmatpush1.bf16.msra.mxu0 0
  %182 = vmatprep.subr.bf16.mxu0 0
  %183 = vmatpush1.bf16.msra.mxu0 0
  %184 = vmatprep.subr.bf16.mxu0 0
  %185 = vmatpush1.bf16.msra.mxu0 0
  %186 = vmatprep.mubr.bf16.mxu0 0
  %187 = vmatmul.mubr.bf16.gmra.mrb[0].mxu0 %v121
  %v188 = vpop.f32.mrb[0].mxu0
  %v189 = vadd.f32 0.0, %v188
  %v190 = vpop.f32.mrb[0].mxu0
  %v191 = vadd.f32 0.0, %v190
  %v192 = vpop.f32.mrb[0].mxu0
  %v193 = vadd.f32 0.0, %v192
  %v194 = vpop.f32.mrb[0].mxu0
  %v195 = vadd.f32 0.0, %v194
  %196 = vmatprep.mubr.bf16.mxu0 0
  %197 = vmatmul.mubr.bf16.gmra.mrb[0].mxu0 %v124
  %v198 = vpop.f32.mrb[0].mxu0
  %v199 = vadd.f32 0.0, %v198
  %v200 = vpop.f32.mrb[0].mxu0
  %v201 = vadd.f32 0.0, %v200
  %v202 = vpop.f32.mrb[0].mxu0
  %v203 = vadd.f32 0.0, %v202
  %v204 = vpop.f32.mrb[0].mxu0
  %v205 = vadd.f32 0.0, %v204
  %206 = vmatprep.mubr.bf16.mxu0 0
  %207 = vmatmul.mubr.bf16.gmra.mrb[0].mxu0 %v127
  %v208 = vpop.f32.mrb[0].mxu0
  %v209 = vadd.f32 0.0, %v208
  %v210 = vpop.f32.mrb[0].mxu0
  %v211 = vadd.f32 0.0, %v210
  %v212 = vpop.f32.mrb[0].mxu0
  %v213 = vadd.f32 0.0, %v212
  %v214 = vpop.f32.mrb[0].mxu0
  %v215 = vadd.f32 0.0, %v214
  %216 = vmatprep.mubr.bf16.mxu0 0
  %217 = vmatmul.mubr.bf16.gmra.mrb[0].mxu0 %v130
  %v218 = vpop.f32.mrb[0].mxu0
  %v219 = vadd.f32 0.0, %v218
  %v220 = vpop.f32.mrb[0].mxu0
  %v221 = vadd.f32 0.0, %v220
  %v222 = vpop.f32.mrb[0].mxu0
  %v223 = vadd.f32 0.0, %v222
  %v224 = vpop.f32.mrb[0].mxu0
  %v225 = vadd.f32 0.0, %v224
  %226 = vmatprep.mubr.bf16.mxu0 0
  %227 = vmatmul.mubr.bf16.gmra.mrb[0].mxu0 %v133
  %v228 = vpop.f32.mrb[0].mxu0
  %v229 = vadd.f32 0.0, %v228
  %v230 = vpop.f32.mrb[0].mxu0
  %v231 = vadd.f32 0.0, %v230
  %v232 = vpop.f32.mrb[0].mxu0
  %v233 = vadd.f32 0.0, %v232
  %v234 = vpop.f32.mrb[0].mxu0
  %v235 = vadd.f32 0.0, %v234
  %236 = vmatprep.mubr.bf16.mxu0 0
  %237 = vmatmul.mubr.bf16.gmra.mrb[0].mxu0 %v136
  %v238 = vpop.f32.mrb[0].mxu0
  %v239 = vadd.f32 0.0, %v238
  %v240 = vpop.f32.mrb[0].mxu0
  %v241 = vadd.f32 0.0, %v240
  %v242 = vpop.f32.mrb[0].mxu0
  %v243 = vadd.f32 0.0, %v242
  %v244 = vpop.f32.mrb[0].mxu0
  %v245 = vadd.f32 0.0, %v244
  %246 = vdwg.mxu0
  %247 = vmatprep.subr.bf16.mxu0 %v107
  %248 = vmatpush1.bf16.msra.mxu0 %v106
  %249 = vmatprep.subr.bf16.mxu0 %v149
  %250 = vmatpush1.bf16.msra.mxu0 %v146
  %251 = vmatprep.subr.bf16.mxu0 0
  %252 = vmatpush1.bf16.msra.mxu0 0
  %253 = vmatprep.subr.bf16.mxu0 0
  %254 = vmatpush1.bf16.msra.mxu0 0
  %255 = vmatprep.subr.bf16.mxu0 0
  %256 = vmatpush1.bf16.msra.mxu0 0
  %257 = vmatprep.subr.bf16.mxu0 0
  %258 = vmatpush1.bf16.msra.mxu0 0
  %259 = vmatprep.subr.bf16.mxu0 0
  %260 = vmatpush1.bf16.msra.mxu0 0
  %261 = vmatprep.subr.bf16.mxu0 0
  %262 = vmatpush1.bf16.msra.mxu0 0
  %263 = vmatprep.subr.bf16.mxu0 0
  %264 = vmatpush1.bf16.msra.mxu0 0
  %265 = vmatprep.subr.bf16.mxu0 0
  %266 = vmatpush1.bf16.msra.mxu0 0
  %267 = vmatprep.subr.bf16.mxu0 0
  %268 = vmatpush1.bf16.msra.mxu0 0
  %269 = vmatprep.subr.bf16.mxu0 0
  %270 = vmatpush1.bf16.msra.mxu0 0
  %271 = vmatprep.subr.bf16.mxu0 0
  %272 = vmatpush1.bf16.msra.mxu0 0
  %273 = vmatprep.subr.bf16.mxu0 0
  %274 = vmatpush1.bf16.msra.mxu0 0
  %275 = vmatprep.subr.bf16.mxu0 0
  %276 = vmatpush1.bf16.msra.mxu0 0
  %277 = vmatprep.subr.bf16.mxu0 0
  %278 = vmatpush1.bf16.msra.mxu0 0
  %279 = vmatprep.mubr.bf16.mxu0 0
  %280 = vmatmul.mubr.bf16.gmra.mrb[0].mxu0 %v121
  %v281 = vpop.f32.mrb[0].mxu0
  %v282 = vadd.f32 0.0, %v281
  %v283 = vpop.f32.mrb[0].mxu0
  %v284 = vadd.f32 0.0, %v283
  %v285 = vpop.f32.mrb[0].mxu0
  %v286 = vadd.f32 0.0, %v285
  %v287 = vpop.f32.mrb[0].mxu0
  %v288 = vadd.f32 0.0, %v287
  %289 = vmatprep.mubr.bf16.mxu0 0
  %290 = vmatmul.mubr.bf16.gmra.mrb[0].mxu0 %v124
  %v291 = vpop.f32.mrb[0].mxu0
  %v292 = vadd.f32 0.0, %v291
  %v293 = vpop.f32.mrb[0].mxu0
  %v294 = vadd.f32 0.0, %v293
  %v295 = vpop.f32.mrb[0].mxu0
  %v296 = vadd.f32 0.0, %v295
  %v297 = vpop.f32.mrb[0].mxu0
  %v298 = vadd.f32 0.0, %v297
  %299 = vmatprep.mubr.bf16.mxu0 0
  %300 = vmatmul.mubr.bf16.gmra.mrb[0].mxu0 %v127
  %v301 = vpop.f32.mrb[0].mxu0
  %v302 = vadd.f32 0.0, %v301
  %v303 = vpop.f32.mrb[0].mxu0
  %v304 = vadd.f32 0.0, %v303
  %v305 = vpop.f32.mrb[0].mxu0
  %v306 = vadd.f32 0.0, %v305
  %v307 = vpop.f32.mrb[0].mxu0
  %v308 = vadd.f32 0.0, %v307
  %309 = vmatprep.mubr.bf16.mxu0 0
  %310 = vmatmul.mubr.bf16.gmra.mrb[0].mxu0 %v130
  %v311 = vpop.f32.mrb[0].mxu0
  %v312 = vadd.f32 0.0, %v311
  %v313 = vpop.f32.mrb[0].mxu0
  %v314 = vadd.f32 0.0, %v313
  %v315 = vpop.f32.mrb[0].mxu0
  %v316 = vadd.f32 0.0, %v315
  %v317 = vpop.f32.mrb[0].mxu0
  %v318 = vadd.f32 0.0, %v317
  %319 = vmatprep.mubr.bf16.mxu0 0
  %320 = vmatmul.mubr.bf16.gmra.mrb[0].mxu0 %v133
  %v321 = vpop.f32.mrb[0].mxu0
  %v322 = vadd.f32 0.0, %v321
  %v323 = vpop.f32.mrb[0].mxu0
  %v324 = vadd.f32 0.0, %v323
  %v325 = vpop.f32.mrb[0].mxu0
  %v326 = vadd.f32 0.0, %v325
  %v327 = vpop.f32.mrb[0].mxu0
  %v328 = vadd.f32 0.0, %v327
  %329 = vmatprep.mubr.bf16.mxu0 0
  %330 = vmatmul.mubr.bf16.gmra.mrb[0].mxu0 %v136
  %v331 = vpop.f32.mrb[0].mxu0
  %v332 = vadd.f32 0.0, %v331
  %v333 = vpop.f32.mrb[0].mxu0
  %v334 = vadd.f32 0.0, %v333
  %v335 = vpop.f32.mrb[0].mxu0
  %v336 = vadd.f32 0.0, %v335
  %v337 = vpop.f32.mrb[0].mxu0
  %v338 = vadd.f32 0.0, %v337
  %339 = vdwg.mxu0
  %340 = vmatprep.subr.bf16.mxu0 0
  %341 = vmatpush1.bf16.msra.mxu0 %v108
  %342 = vmatprep.subr.bf16.mxu0 0
  %343 = vmatpush1.bf16.msra.mxu0 %v152
  %344 = vmatprep.subr.bf16.mxu0 0
  %345 = vmatpush1.bf16.msra.mxu0 0
  %346 = vmatprep.subr.bf16.mxu0 0
  %347 = vmatpush1.bf16.msra.mxu0 0
  %348 = vmatprep.subr.bf16.mxu0 0
  %349 = vmatpush1.bf16.msra.mxu0 0
  %350 = vmatprep.subr.bf16.mxu0 0
  %351 = vmatpush1.bf16.msra.mxu0 0
  %352 = vmatprep.subr.bf16.mxu0 0
  %353 = vmatpush1.bf16.msra.mxu0 0
  %354 = vmatprep.subr.bf16.mxu0 0
  %355 = vmatpush1.bf16.msra.mxu0 0
  %356 = vmatprep.subr.bf16.mxu0 0
  %357 = vmatpush1.bf16.msra.mxu0 0
  %358 = vmatprep.subr.bf16.mxu0 0
  %359 = vmatpush1.bf16.msra.mxu0 0
  %360 = vmatprep.subr.bf16.mxu0 0
  %361 = vmatpush1.bf16.msra.mxu0 0
  %362 = vmatprep.subr.bf16.mxu0 0
  %363 = vmatpush1.bf16.msra.mxu0 0
  %364 = vmatprep.subr.bf16.mxu0 0
  %365 = vmatpush1.bf16.msra.mxu0 0
  %366 = vmatprep.subr.bf16.mxu0 0
  %367 = vmatpush1.bf16.msra.mxu0 0
  %368 = vmatprep.subr.bf16.mxu0 0
  %369 = vmatpush1.bf16.msra.mxu0 0
  %370 = vmatprep.subr.bf16.mxu0 0
  %371 = vmatpush1.bf16.msra.mxu0 0
  %372 = vmatprep.mubr.bf16.mxu0 0
  %373 = vmatmul.mubr.bf16.gmra.mrb[0].mxu0 %v121
  %v374 = vpop.f32.mrb[0].mxu0
  %v375 = vadd.f32 0.0, %v374
  %v376 = vpop.f32.mrb[0].mxu0
  %v377 = vpop.f32.mrb[0].mxu0
  %v378 = vadd.f32 0.0, %v377
  %v379 = vpop.f32.mrb[0].mxu0
  %380 = vmatprep.mubr.bf16.mxu0 0
  %381 = vmatmul.mubr.bf16.gmra.mrb[0].mxu0 %v124
  %v382 = vpop.f32.mrb[0].mxu0
  %v383 = vadd.f32 0.0, %v382
  %v384 = vpop.f32.mrb[0].mxu0
  %v385 = vpop.f32.mrb[0].mxu0
  %v386 = vadd.f32 0.0, %v385
  %v387 = vpop.f32.mrb[0].mxu0
  %388 = vmatprep.mubr.bf16.mxu0 0
  %389 = vmatmul.mubr.bf16.gmra.mrb[0].mxu0 %v127
  %v390 = vpop.f32.mrb[0].mxu0
  %v391 = vadd.f32 0.0, %v390
  %v392 = vpop.f32.mrb[0].mxu0
  %v393 = vpop.f32.mrb[0].mxu0
  %v394 = vadd.f32 0.0, %v393
  %v395 = vpop.f32.mrb[0].mxu0
  %396 = vmatprep.mubr.bf16.mxu0 0
  %397 = vmatmul.mubr.bf16.gmra.mrb[0].mxu0 %v130
  %v398 = vpop.f32.mrb[0].mxu0
  %v399 = vadd.f32 0.0, %v398
  %v400 = vpop.f32.mrb[0].mxu0
  %v401 = vpop.f32.mrb[0].mxu0
  %v402 = vadd.f32 0.0, %v401
  %v403 = vpop.f32.mrb[0].mxu0
  %404 = vmatprep.mubr.bf16.mxu0 0
  %405 = vmatmul.mubr.bf16.gmra.mrb[0].mxu0 %v133
  %v406 = vpop.f32.mrb[0].mxu0
  %v407 = vadd.f32 0.0, %v406
  %v408 = vpop.f32.mrb[0].mxu0
  %v409 = vpop.f32.mrb[0].mxu0
  %v410 = vadd.f32 0.0, %v409
  %v411 = vpop.f32.mrb[0].mxu0
  %412 = vmatprep.mubr.bf16.mxu0 0
  %413 = vmatmul.mubr.bf16.gmra.mrb[0].mxu0 %v136
  %v414 = vpop.f32.mrb[0].mxu0
  %v415 = vadd.f32 0.0, %v414
  %v416 = vpop.f32.mrb[0].mxu0
  %v417 = vpop.f32.mrb[0].mxu0
  %v418 = vadd.f32 0.0, %v417
  %v419 = vpop.f32.mrb[0].mxu0
  %420 = vdwg.mxu0
  %v421 = vpack.c.bf16 %v193, %v189
  %v422 = vpack.c.bf16 %v195, %v191
  %v423 = vpack.c.bf16 %v286, %v282
  %v424 = vpack.c.bf16 %v288, %v284
  %v425 = vpack.c.bf16 %v378, %v375
  %v426 = vpack.c.bf16 %v203, %v199
  %v427 = vpack.c.bf16 %v205, %v201
  %v428 = vpack.c.bf16 %v296, %v292
  %v429 = vpack.c.bf16 %v298, %v294
  %v430 = vpack.c.bf16 %v386, %v383
  %v431 = vpack.c.bf16 %v213, %v209
  %v432 = vpack.c.bf16 %v215, %v211
  %v433 = vpack.c.bf16 %v306, %v302
  %v434 = vpack.c.bf16 %v308, %v304
  %v435 = vpack.c.bf16 %v394, %v391
  %v436 = vpack.c.bf16 %v223, %v219
  %v437 = vpack.c.bf16 %v225, %v221
  %v438 = vpack.c.bf16 %v316, %v312
  %v439 = vpack.c.bf16 %v318, %v314
  %v440 = vpack.c.bf16 %v402, %v399
  %v441 = vpack.c.bf16 %v233, %v229
  %v442 = vpack.c.bf16 %v235, %v231
  %v443 = vpack.c.bf16 %v326, %v322
  %v444 = vpack.c.bf16 %v328, %v324
  %v445 = vpack.c.bf16 %v410, %v407
  %v446 = vpack.c.bf16 %v243, %v239
  %v447 = vpack.c.bf16 %v245, %v241
  %v448 = vpack.c.bf16 %v336, %v332
  %v449 = vpack.c.bf16 %v338, %v334
  %v450 = vpack.c.bf16 %v418, %v415
  %451 = vst [vmem:[#allocation3] sm:$0xff] %v421
  %452 = vst [vmem:[#allocation3 + $0x8] sm:$0xff] %v422
  %453 = vst [vmem:[#allocation3 + $0x10] sm:$0xff] %v423
  %454 = vst [vmem:[#allocation3 + $0x18] sm:$0xff] %v424
  %455 = vst [vmem:[#allocation3 + $0x20] sm:$0xff] %v425
  %456 = vst [vmem:[#allocation3 + $0x28] sm:$0xff] %v426
  %457 = vst [vmem:[#allocation3 + $0x30] sm:$0xff] %v427
  %458 = vst [vmem:[#allocation3 + $0x38] sm:$0xff] %v428
  %459 = vst [vmem:[#allocation3 + $0x40] sm:$0xff] %v429
  %460 = vst [vmem:[#allocation3 + $0x48] sm:$0xff] %v430
  %461 = vst [vmem:[#allocation3 + $0x50] sm:$0xff] %v431
  %462 = vst [vmem:[#allocation3 + $0x58] sm:$0xff] %v432
  %463 = vst [vmem:[#allocation3 + $0x60] sm:$0xff] %v433
  %464 = vst [vmem:[#allocation3 + $0x68] sm:$0xff] %v434
  %465 = vst [vmem:[#allocation3 + $0x70] sm:$0xff] %v435
  %466 = vst [vmem:[#allocation3 + $0x78] sm:$0xff] %v436
  %467 = vst [vmem:[#allocation3 + $0x80] sm:$0xff] %v437
  %468 = vst [vmem:[#allocation3 + $0x88] sm:$0xff] %v438
  %469 = vst [vmem:[#allocation3 + $0x90] sm:$0xff] %v439
  %470 = vst [vmem:[#allocation3 + $0x98] sm:$0xff] %v440
  %471 = vst [vmem:[#allocation3 + $0xa0] sm:$0xff] %v441
  %472 = vst [vmem:[#allocation3 + $0xa8] sm:$0xff] %v442
  %473 = vst [vmem:[#allocation3 + $0xb0] sm:$0xff] %v443
  %474 = vst [vmem:[#allocation3 + $0xb8] sm:$0xff] %v444
  %475 = vst [vmem:[#allocation3 + $0xc0] sm:$0xff] %v445
  %476 = vst [vmem:[#allocation3 + $0xc8] sm:$0xff] %v446
  %477 = vst [vmem:[#allocation3 + $0xd0] sm:$0xff] %v447
  %478 = vst [vmem:[#allocation3 + $0xd8] sm:$0xff] %v448
  %479 = vst [vmem:[#allocation3 + $0xe0] sm:$0xff] %v449
  %480 = vst [vmem:[#allocation3 + $0xe8] sm:$0xff] %v450
  %v481 = vld [vmem:[#allocation2] sm:$0xff]
  %v482 = vld [vmem:[#allocation2 + $0x8] sm:$0xff]
  %s483 = smul.u32 0, 5
  %s484 = smul.addr %s483, 8
  %s485 = scalar_lea.vmem [#allocation3], %s484
  %v486 = vld [vmem:[%s485] sm:$0xff]
  %v487 = vld [vmem:[%s485 + $0x8] sm:$0xff]
  %v488 = vld [vmem:[%s485 + $0x10] sm:$0xff]
  %v489 = vld [vmem:[%s485 + $0x18] sm:$0xff]
  %v490 = vld [vmem:[%s485 + $0x20] sm:$0xff]
  %v491 = vunpack.c.l.bf16 %v486
  %v492 = vunpack.c.l.bf16 %v487
  %v493 = vunpack.c.l.bf16 %v488
  %v494 = vunpack.c.l.bf16 %v489
  %v495 = vunpack.c.l.bf16 %v490
  %v496 = vunpack.c.h.bf16 %v486
  %v497 = vunpack.c.h.bf16 %v487
  %v498 = vunpack.c.h.bf16 %v488
  %v499 = vunpack.c.h.bf16 %v489
  %v500 = vunpack.c.h.bf16 %v490
  %v501 = vpack.c.bf16 %v482, %v481
  %v502 = vld [vmem:[%s2] sm:$0xff]
  %v503 = vld [vmem:[%s2 + $0x8] sm:$0xff]
  %v504 = vld [vmem:[%s2 + $0x10] sm:$0xff]
  %v505 = vld [vmem:[%s2 + $0x18] sm:$0xff]
  %v506 = vld [vmem:[%s2 + $0x20] sm:$0xff]
  %v507 = vld [vmem:[%s2 + $0x28] sm:$0xff]
  %v508 = vld [vmem:[%s2 + $0x30] sm:$0xff]
  %v509 = vld [vmem:[%s2 + $0x38] sm:$0xff]
  %v510 = vld [vmem:[%s2 + $0x40] sm:$0xff]
  %v511 = vld [vmem:[%s2 + $0x48] sm:$0xff]
  %v512 = vld [vmem:[%s2 + $0x50] sm:$0xff]
  %v513 = vld [vmem:[%s2 + $0x58] sm:$0xff]
  %v514 = vld [vmem:[%s2 + $0x60] sm:$0xff]
  %v515 = vld [vmem:[%s2 + $0x68] sm:$0xff]
  %v516 = vld [vmem:[%s2 + $0x70] sm:$0xff]
  %v517 = vld [vmem:[%s2 + $0x78] sm:$0xff]
  %v518 = vld [vmem:[%s2 + $0x80] sm:$0xff]
  %v519 = vld [vmem:[%s2 + $0x88] sm:$0xff]
  %v520 = vld [vmem:[%s2 + $0x90] sm:$0xff]
  %v521 = vld [vmem:[%s2 + $0x98] sm:$0xff]
  %v522 = vld [vmem:[%s2 + $0xa0] sm:$0xff]
  %v523 = vld [vmem:[%s2 + $0xa8] sm:$0xff]
  %v524 = vld [vmem:[%s2 + $0xb0] sm:$0xff]
  %v525 = vld [vmem:[%s2 + $0xb8] sm:$0xff]
  %v526 = vld [vmem:[%s2 + $0xc0] sm:$0xff]
  %v527 = vld [vmem:[%s2 + $0xc8] sm:$0xff]
  %v528 = vld [vmem:[%s2 + $0xd0] sm:$0xff]
  %v529 = vld [vmem:[%s2 + $0xd8] sm:$0xff]
  %v530 = vld [vmem:[%s2 + $0xe0] sm:$0xff]
  %v531 = vld [vmem:[%s2 + $0xe8] sm:$0xff]
  %v532 = vld [vmem:[%s2 + $0xf0] sm:$0xff]
  %v533 = vld [vmem:[%s2 + $0xf8] sm:$0xff]
  %v566 = vunpack.c.l.b16 %v502
  %v567 = vunpack.c.h.b16 %v502
  %v568 = vunpack.c.l.b16 %v503
  %v569 = vunpack.c.h.b16 %v503
  %v570 = vunpack.c.l.b16 %v504
  %v571 = vunpack.c.h.b16 %v504
  %v572 = vunpack.c.l.b16 %v505
  %v573 = vunpack.c.h.b16 %v505
  %v574 = vunpack.c.l.b16 %v506
  %v575 = vunpack.c.h.b16 %v506
  %v576 = vunpack.c.l.b16 %v507
  %v577 = vunpack.c.h.b16 %v507
  %v578 = vunpack.c.l.b16 %v508
  %v579 = vunpack.c.h.b16 %v508
  %v580 = vunpack.c.l.b16 %v509
  %v581 = vunpack.c.h.b16 %v509
  %v582 = vunpack.c.l.b16 %v510
  %v583 = vunpack.c.h.b16 %v510
  %v584 = vunpack.c.l.b16 %v511
  %v585 = vunpack.c.h.b16 %v511
  %v586 = vunpack.c.l.b16 %v512
  %v587 = vunpack.c.h.b16 %v512
  %v588 = vunpack.c.l.b16 %v513
  %v589 = vunpack.c.h.b16 %v513
  %v590 = vunpack.c.l.b16 %v514
  %v591 = vunpack.c.h.b16 %v514
  %v592 = vunpack.c.l.b16 %v515
  %v593 = vunpack.c.h.b16 %v515
  %v594 = vunpack.c.l.b16 %v516
  %v595 = vunpack.c.h.b16 %v516
  %v596 = vunpack.c.l.b16 %v517
  %v597 = vunpack.c.h.b16 %v517
  %v598 = vunpack.c.l.b16 %v518
  %v599 = vunpack.c.h.b16 %v518
  %v600 = vunpack.c.l.b16 %v519
  %v601 = vunpack.c.h.b16 %v519
  %v602 = vunpack.c.l.b16 %v520
  %v603 = vunpack.c.h.b16 %v520
  %v604 = vunpack.c.l.b16 %v521
  %v605 = vunpack.c.h.b16 %v521
  %v606 = vunpack.c.l.b16 %v522
  %v607 = vunpack.c.h.b16 %v522
  %v608 = vunpack.c.l.b16 %v523
  %v609 = vunpack.c.h.b16 %v523
  %v610 = vunpack.c.l.b16 %v524
  %v611 = vunpack.c.h.b16 %v524
  %v612 = vunpack.c.l.b16 %v525
  %v613 = vunpack.c.h.b16 %v525
  %v614 = vunpack.c.l.b16 %v526
  %v615 = vunpack.c.h.b16 %v526
  %v616 = vunpack.c.l.b16 %v527
  %v617 = vunpack.c.h.b16 %v527
  %v618 = vunpack.c.l.b16 %v528
  %v619 = vunpack.c.h.b16 %v528
  %v620 = vunpack.c.l.b16 %v529
  %v621 = vunpack.c.h.b16 %v529
  %v622 = vunpack.c.l.b16 %v530
  %v623 = vunpack.c.h.b16 %v530
  %v624 = vunpack.c.l.b16 %v531
  %v625 = vunpack.c.h.b16 %v531
  %v626 = vunpack.c.l.b16 %v532
  %v627 = vunpack.c.h.b16 %v532
  %v628 = vunpack.c.l.b16 %v533
  %v629 = vunpack.c.h.b16 %v533
  %v630 = vpack.c.b16 %v570, %v566
  %v631 = vpack.c.b16 %v571, %v567
  %v632 = vpack.c.b16 %v572, %v568
  %v633 = vpack.c.b16 %v573, %v569
  %v634 = vpack.c.b16 %v578, %v574
  %v635 = vpack.c.b16 %v579, %v575
  %v636 = vpack.c.b16 %v580, %v576
  %v637 = vpack.c.b16 %v581, %v577
  %v638 = vpack.c.b16 %v586, %v582
  %v639 = vpack.c.b16 %v587, %v583
  %v640 = vpack.c.b16 %v588, %v584
  %v641 = vpack.c.b16 %v589, %v585
  %v642 = vpack.c.b16 %v594, %v590
  %v643 = vpack.c.b16 %v595, %v591
  %v644 = vpack.c.b16 %v596, %v592
  %v645 = vpack.c.b16 %v597, %v593
  %v646 = vpack.c.b16 %v602, %v598
  %v647 = vpack.c.b16 %v603, %v599
  %v648 = vpack.c.b16 %v604, %v600
  %v649 = vpack.c.b16 %v605, %v601
  %v650 = vpack.c.b16 %v610, %v606
  %v651 = vpack.c.b16 %v611, %v607
  %v652 = vpack.c.b16 %v612, %v608
  %v653 = vpack.c.b16 %v613, %v609
  %v654 = vpack.c.b16 %v618, %v614
  %v655 = vpack.c.b16 %v619, %v615
  %v656 = vpack.c.b16 %v620, %v616
  %v657 = vpack.c.b16 %v621, %v617
  %v658 = vpack.c.b16 %v626, %v622
  %v659 = vpack.c.b16 %v627, %v623
  %v660 = vpack.c.b16 %v628, %v624
  %v661 = vpack.c.b16 %v629, %v625
  %694 = vmatprep.subr.bf16.mxu0 %v631
  %695 = vmatpush1.bf16.msra.mxu0 %v630
  %696 = vmatprep.subr.bf16.mxu0 %v635
  %697 = vmatpush1.bf16.msra.mxu0 %v634
  %698 = vmatprep.subr.bf16.mxu0 %v639
  %699 = vmatpush1.bf16.msra.mxu0 %v638
  %700 = vmatprep.subr.bf16.mxu0 %v643
  %701 = vmatpush1.bf16.msra.mxu0 %v642
  %702 = vmatprep.subr.bf16.mxu0 %v647
  %703 = vmatpush1.bf16.msra.mxu0 %v646
  %704 = vmatprep.subr.bf16.mxu0 %v651
  %705 = vmatpush1.bf16.msra.mxu0 %v650
  %706 = vmatprep.subr.bf16.mxu0 %v655
  %707 = vmatpush1.bf16.msra.mxu0 %v654
  %708 = vmatprep.subr.bf16.mxu0 %v659
  %709 = vmatpush1.bf16.msra.mxu0 %v658
  %710 = vmatprep.subr.bf16.mxu0 0
  %711 = vmatpush1.bf16.msra.mxu0 0
  %712 = vmatprep.subr.bf16.mxu0 0
  %713 = vmatpush1.bf16.msra.mxu0 0
  %714 = vmatprep.subr.bf16.mxu0 0
  %715 = vmatpush1.bf16.msra.mxu0 0
  %716 = vmatprep.subr.bf16.mxu0 0
  %717 = vmatpush1.bf16.msra.mxu0 0
  %718 = vmatprep.subr.bf16.mxu0 0
  %719 = vmatpush1.bf16.msra.mxu0 0
  %720 = vmatprep.subr.bf16.mxu0 0
  %721 = vmatpush1.bf16.msra.mxu0 0
  %722 = vmatprep.subr.bf16.mxu0 0
  %723 = vmatpush1.bf16.msra.mxu0 0
  %724 = vmatprep.subr.bf16.mxu0 0
  %725 = vmatpush1.bf16.msra.mxu0 0
  %726 = vmatprep.mubr.bf16.mxu0 0
  %727 = vmatmul.mubr.bf16.gmra.mrb[0].mxu0 %v501
  %v728 = vpop.f32.mrb[0].mxu0
  %v729 = vadd.f32 0.0, %v728
  %v730 = vpop.f32.mrb[0].mxu0
  %v731 = vadd.f32 0.0, %v730
  %v732 = vpop.f32.mrb[0].mxu0
  %v733 = vadd.f32 0.0, %v732
  %v734 = vpop.f32.mrb[0].mxu0
  %v735 = vadd.f32 0.0, %v734
  %736 = vdwg.mxu0
  %737 = vmatprep.subr.bf16.mxu0 %v633
  %738 = vmatpush1.bf16.msra.mxu0 %v632
  %739 = vmatprep.subr.bf16.mxu0 %v637
  %740 = vmatpush1.bf16.msra.mxu0 %v636
  %741 = vmatprep.subr.bf16.mxu0 %v641
  %742 = vmatpush1.bf16.msra.mxu0 %v640
  %743 = vmatprep.subr.bf16.mxu0 %v645
  %744 = vmatpush1.bf16.msra.mxu0 %v644
  %745 = vmatprep.subr.bf16.mxu0 %v649
  %746 = vmatpush1.bf16.msra.mxu0 %v648
  %747 = vmatprep.subr.bf16.mxu0 %v653
  %748 = vmatpush1.bf16.msra.mxu0 %v652
  %749 = vmatprep.subr.bf16.mxu0 %v657
  %750 = vmatpush1.bf16.msra.mxu0 %v656
  %751 = vmatprep.subr.bf16.mxu0 %v661
  %752 = vmatpush1.bf16.msra.mxu0 %v660
  %753 = vmatprep.subr.bf16.mxu0 0
  %754 = vmatpush1.bf16.msra.mxu0 0
  %755 = vmatprep.subr.bf16.mxu0 0
  %756 = vmatpush1.bf16.msra.mxu0 0
  %757 = vmatprep.subr.bf16.mxu0 0
  %758 = vmatpush1.bf16.msra.mxu0 0
  %759 = vmatprep.subr.bf16.mxu0 0
  %760 = vmatpush1.bf16.msra.mxu0 0
  %761 = vmatprep.subr.bf16.mxu0 0
  %762 = vmatpush1.bf16.msra.mxu0 0
  %763 = vmatprep.subr.bf16.mxu0 0
  %764 = vmatpush1.bf16.msra.mxu0 0
  %765 = vmatprep.subr.bf16.mxu0 0
  %766 = vmatpush1.bf16.msra.mxu0 0
  %767 = vmatprep.subr.bf16.mxu0 0
  %768 = vmatpush1.bf16.msra.mxu0 0
  %769 = vmatprep.mubr.bf16.mxu0 0
  %770 = vmatmul.mubr.bf16.gmra.mrb[0].mxu0 %v501
  %v771 = vpop.f32.mrb[0].mxu0
  %v772 = vadd.f32 0.0, %v771
  %v773 = vpop.f32.mrb[0].mxu0
  %v774 = vadd.f32 0.0, %v773
  %v775 = vpop.f32.mrb[0].mxu0
  %v776 = vadd.f32 0.0, %v775
  %v777 = vpop.f32.mrb[0].mxu0
  %v778 = vadd.f32 0.0, %v777
  %779 = vdwg.mxu0
  %v780 = vadd.f32 %v729, %v491
  %v781 = vadd.f32 %v733, %v496
  %v782 = vtanh.pop %v780
  %v783 = vtanh.pop %v781
  %v784 = vadd.f32 %v772, %v493
  %v785 = vadd.f32 %v776, %v498
  %v786 = vxor.u32 %v784, 2147483648
  %v787 = vxor.u32 %v785, 2147483648
  %v788 = vmul.f32 %v786, 1.442695
  %v789 = vpow.pop %v788
  %v790 = vmul.f32 %v787, 1.442695
  %v791 = vpow.pop %v790
  %v792 = vadd.f32 %v789, 1.0
  %v793 = vadd.f32 %v791, 1.0
  %v794 = vrcp.pop %v792
  %v795 = vmul.f32 1.0, %v794
  %v796 = vrcp.pop %v793
  %v797 = vmul.f32 1.0, %v796
  %v798 = vadd.f32 %v774, %v494
  %v799 = vadd.f32 %v778, %v499
  %v800 = vxor.u32 %v798, 2147483648
  %v801 = vxor.u32 %v799, 2147483648
  %v802 = vmul.f32 %v800, 1.442695
  %v803 = vpow.pop %v802
  %v804 = vmul.f32 %v801, 1.442695
  %v805 = vpow.pop %v804
  %v806 = vadd.f32 %v803, 1.0
  %v807 = vadd.f32 %v805, 1.0
  %v808 = vrcp.pop %v806
  %v809 = vmul.f32 1.0, %v808
  %v810 = vrcp.pop %v807
  %v811 = vmul.f32 1.0, %v810
  %v812 = vmul.f32 %v795, %v481
  %v813 = vmul.f32 %v797, %v482
  %v814 = vpack.c.bf16 %v783, %v782
  %v815 = vpack.c.bf16 %v813, %v812
  %v816 = vld [vmem:[%s3] sm:$0xff]
  %v817 = vld [vmem:[%s3 + $0x8] sm:$0xff]
  %v818 = vld [vmem:[%s3 + $0x10] sm:$0xff]
  %v819 = vld [vmem:[%s3 + $0x18] sm:$0xff]
  %v820 = vld [vmem:[%s3 + $0x20] sm:$0xff]
  %v821 = vld [vmem:[%s3 + $0x28] sm:$0xff]
  %v822 = vld [vmem:[%s3 + $0x30] sm:$0xff]
  %v823 = vld [vmem:[%s3 + $0x38] sm:$0xff]
  %v824 = vld [vmem:[%s3 + $0x40] sm:$0xff]
  %v825 = vld [vmem:[%s3 + $0x48] sm:$0xff]
  %v826 = vld [vmem:[%s3 + $0x50] sm:$0xff]
  %v827 = vld [vmem:[%s3 + $0x58] sm:$0xff]
  %v828 = vld [vmem:[%s3 + $0x60] sm:$0xff]
  %v829 = vld [vmem:[%s3 + $0x68] sm:$0xff]
  %v830 = vld [vmem:[%s3 + $0x70] sm:$0xff]
  %v831 = vld [vmem:[%s3 + $0x78] sm:$0xff]
  %v832 = vld [vmem:[%s3 + $0x80] sm:$0xff]
  %v833 = vld [vmem:[%s3 + $0x88] sm:$0xff]
  %v834 = vld [vmem:[%s3 + $0x90] sm:$0xff]
  %v835 = vld [vmem:[%s3 + $0x98] sm:$0xff]
  %v836 = vld [vmem:[%s3 + $0xa0] sm:$0xff]
  %v837 = vld [vmem:[%s3 + $0xa8] sm:$0xff]
  %v838 = vld [vmem:[%s3 + $0xb0] sm:$0xff]
  %v839 = vld [vmem:[%s3 + $0xb8] sm:$0xff]
  %v840 = vld [vmem:[%s3 + $0xc0] sm:$0xff]
  %v841 = vld [vmem:[%s3 + $0xc8] sm:$0xff]
  %v842 = vld [vmem:[%s3 + $0xd0] sm:$0xff]
  %v843 = vld [vmem:[%s3 + $0xd8] sm:$0xff]
  %v844 = vld [vmem:[%s3 + $0xe0] sm:$0xff]
  %v845 = vld [vmem:[%s3 + $0xe8] sm:$0xff]
  %v846 = vld [vmem:[%s3 + $0xf0] sm:$0xff]
  %v847 = vld [vmem:[%s3 + $0xf8] sm:$0xff]
  %v880 = vunpack.c.l.b16 %v816
  %v881 = vunpack.c.h.b16 %v816
  %v882 = vunpack.c.l.b16 %v817
  %v883 = vunpack.c.h.b16 %v817
  %v884 = vunpack.c.l.b16 %v818
  %v885 = vunpack.c.h.b16 %v818
  %v886 = vunpack.c.l.b16 %v819
  %v887 = vunpack.c.h.b16 %v819
  %v888 = vunpack.c.l.b16 %v820
  %v889 = vunpack.c.h.b16 %v820
  %v890 = vunpack.c.l.b16 %v821
  %v891 = vunpack.c.h.b16 %v821
  %v892 = vunpack.c.l.b16 %v822
  %v893 = vunpack.c.h.b16 %v822
  %v894 = vunpack.c.l.b16 %v823
  %v895 = vunpack.c.h.b16 %v823
  %v896 = vunpack.c.l.b16 %v824
  %v897 = vunpack.c.h.b16 %v824
  %v898 = vunpack.c.l.b16 %v825
  %v899 = vunpack.c.h.b16 %v825
  %v900 = vunpack.c.l.b16 %v826
  %v901 = vunpack.c.h.b16 %v826
  %v902 = vunpack.c.l.b16 %v827
  %v903 = vunpack.c.h.b16 %v827
  %v904 = vunpack.c.l.b16 %v828
  %v905 = vunpack.c.h.b16 %v828
  %v906 = vunpack.c.l.b16 %v829
  %v907 = vunpack.c.h.b16 %v829
  %v908 = vunpack.c.l.b16 %v830
  %v909 = vunpack.c.h.b16 %v830
  %v910 = vunpack.c.l.b16 %v831
  %v911 = vunpack.c.h.b16 %v831
  %v912 = vunpack.c.l.b16 %v832
  %v913 = vunpack.c.h.b16 %v832
  %v914 = vunpack.c.l.b16 %v833
  %v915 = vunpack.c.h.b16 %v833
  %v916 = vunpack.c.l.b16 %v834
  %v917 = vunpack.c.h.b16 %v834
  %v918 = vunpack.c.l.b16 %v835
  %v919 = vunpack.c.h.b16 %v835
  %v920 = vunpack.c.l.b16 %v836
  %v921 = vunpack.c.h.b16 %v836
  %v922 = vunpack.c.l.b16 %v837
  %v923 = vunpack.c.h.b16 %v837
  %v924 = vunpack.c.l.b16 %v838
  %v925 = vunpack.c.h.b16 %v838
  %v926 = vunpack.c.l.b16 %v839
  %v927 = vunpack.c.h.b16 %v839
  %v928 = vunpack.c.l.b16 %v840
  %v929 = vunpack.c.h.b16 %v840
  %v930 = vunpack.c.l.b16 %v841
  %v931 = vunpack.c.h.b16 %v841
  %v932 = vunpack.c.l.b16 %v842
  %v933 = vunpack.c.h.b16 %v842
  %v934 = vunpack.c.l.b16 %v843
  %v935 = vunpack.c.h.b16 %v843
  %v936 = vunpack.c.l.b16 %v844
  %v937 = vunpack.c.h.b16 %v844
  %v938 = vunpack.c.l.b16 %v845
  %v939 = vunpack.c.h.b16 %v845
  %v940 = vunpack.c.l.b16 %v846
  %v941 = vunpack.c.h.b16 %v846
  %v942 = vunpack.c.l.b16 %v847
  %v943 = vunpack.c.h.b16 %v847
  %v944 = vpack.c.b16 %v882, %v880
  %v945 = vpack.c.b16 %v883, %v881
  %v946 = vpack.c.b16 %v886, %v884
  %v947 = vpack.c.b16 %v887, %v885
  %v948 = vpack.c.b16 %v890, %v888
  %v949 = vpack.c.b16 %v891, %v889
  %v950 = vpack.c.b16 %v894, %v892
  %v951 = vpack.c.b16 %v895, %v893
  %v952 = vpack.c.b16 %v898, %v896
  %v953 = vpack.c.b16 %v899, %v897
  %v954 = vpack.c.b16 %v902, %v900
  %v955 = vpack.c.b16 %v903, %v901
  %v956 = vpack.c.b16 %v906, %v904
  %v957 = vpack.c.b16 %v907, %v905
  %v958 = vpack.c.b16 %v910, %v908
  %v959 = vpack.c.b16 %v911, %v909
  %v960 = vpack.c.b16 %v914, %v912
  %v961 = vpack.c.b16 %v915, %v913
  %v962 = vpack.c.b16 %v918, %v916
  %v963 = vpack.c.b16 %v919, %v917
  %v964 = vpack.c.b16 %v922, %v920
  %v965 = vpack.c.b16 %v923, %v921
  %v966 = vpack.c.b16 %v926, %v924
  %v967 = vpack.c.b16 %v927, %v925
  %v968 = vpack.c.b16 %v930, %v928
  %v969 = vpack.c.b16 %v931, %v929
  %v970 = vpack.c.b16 %v934, %v932
  %v971 = vpack.c.b16 %v935, %v933
  %v972 = vpack.c.b16 %v938, %v936
  %v973 = vpack.c.b16 %v939, %v937
  %v974 = vpack.c.b16 %v942, %v940
  %v975 = vpack.c.b16 %v943, %v941
  %1008 = vmatprep.subr.bf16.mxu0 %v945
  %1009 = vmatpush1.bf16.msra.mxu0 %v944
  %1010 = vmatprep.subr.bf16.mxu0 %v947
  %1011 = vmatpush1.bf16.msra.mxu0 %v946
  %1012 = vmatprep.subr.bf16.mxu0 %v949
  %1013 = vmatpush1.bf16.msra.mxu0 %v948
  %1014 = vmatprep.subr.bf16.mxu0 %v951
  %1015 = vmatpush1.bf16.msra.mxu0 %v950
  %1016 = vmatprep.subr.bf16.mxu0 %v953
  %1017 = vmatpush1.bf16.msra.mxu0 %v952
  %1018 = vmatprep.subr.bf16.mxu0 %v955
  %1019 = vmatpush1.bf16.msra.mxu0 %v954
  %1020 = vmatprep.subr.bf16.mxu0 %v957
  %1021 = vmatpush1.bf16.msra.mxu0 %v956
  %1022 = vmatprep.subr.bf16.mxu0 %v959
  %1023 = vmatpush1.bf16.msra.mxu0 %v958
  %1024 = vmatprep.subr.bf16.mxu0 %v961
  %1025 = vmatpush1.bf16.msra.mxu0 %v960
  %1026 = vmatprep.subr.bf16.mxu0 %v963
  %1027 = vmatpush1.bf16.msra.mxu0 %v962
  %1028 = vmatprep.subr.bf16.mxu0 %v965
  %1029 = vmatpush1.bf16.msra.mxu0 %v964
  %1030 = vmatprep.subr.bf16.mxu0 %v967
  %1031 = vmatpush1.bf16.msra.mxu0 %v966
  %1032 = vmatprep.subr.bf16.mxu0 %v969
  %1033 = vmatpush1.bf16.msra.mxu0 %v968
  %1034 = vmatprep.subr.bf16.mxu0 %v971
  %1035 = vmatpush1.bf16.msra.mxu0 %v970
  %1036 = vmatprep.subr.bf16.mxu0 %v973
  %1037 = vmatpush1.bf16.msra.mxu0 %v972
  %1038 = vmatprep.subr.bf16.mxu0 %v975
  %1039 = vmatpush1.bf16.msra.mxu0 %v974
  %1040 = vmatprep.mubr.bf16.mxu0 %v815
  %1041 = vmatmul.mubr.bf16.gmra.mrb[0].mxu0 %v814
  %v1042 = vpop.f32.mrb[0].mxu0
  %v1043 = vadd.f32 0.0, %v1042
  %v1044 = vpop.f32.mrb[0].mxu0
  %v1045 = vadd.f32 0.0, %v1044
  %v1046 = vpop.f32.mrb[0].mxu0
  %v1047 = vadd.f32 0.0, %v1046
  %v1048 = vpop.f32.mrb[0].mxu0
  %v1049 = vadd.f32 0.0, %v1048
  %1050 = vdwg.mxu0
  %v1051 = vadd.f32 %v731, %v492
  %v1052 = vadd.f32 %v735, %v497
  %v1053 = vadd.f32 %v1051, %v1043
  %v1054 = vadd.f32 %v1052, %v1047
  %v1055 = vxor.u32 %v1053, 2147483648
  %v1056 = vxor.u32 %v1054, 2147483648
  %v1057 = vmul.f32 %v1055, 1.442695
  %v1058 = vpow.pop %v1057
  %v1059 = vmul.f32 %v1056, 1.442695
  %v1060 = vpow.pop %v1059
  %v1061 = vadd.f32 %v1058, 1.0
  %v1062 = vadd.f32 %v1060, 1.0
  %v1063 = vrcp.pop %v1061
  %v1064 = vmul.f32 1.0, %v1063
  %v1065 = vrcp.pop %v1062
  %v1066 = vmul.f32 1.0, %v1065
  %v1067 = vadd.f32 %v1045, %v495
  %v1068 = vadd.f32 %v1049, %v500
  %v1069 = vtanh.pop %v1067
  %v1070 = vtanh.pop %v1068
  %v1071 = vsub.f32 1.0, %v809
  %v1072 = vsub.f32 1.0, %v811
  %v1073 = vmul.f32 %v1064, %v481
  %v1074 = vmul.f32 %v1066, %v482
  %v1075 = vmul.f32 %v1071, %v1073
  %v1076 = vmul.f32 %v1072, %v1074
  %v1077 = vmul.f32 %v809, %v1069
  %v1078 = vmul.f32 %v811, %v1070
  %v1079 = vadd.f32 %v1075, %v1077
  %v1080 = vadd.f32 %v1076, %v1078
  %1081 = vst [vmem:[%s5] sm:$0xff] %v1079
  %1082 = vst [vmem:[%s5 + $0x8] sm:$0xff] %v1080
  %s1083 = smul.u32 1, 5
  %s1084 = smul.addr %s1083, 8
  %s1085 = scalar_lea.vmem [#allocation3], %s1084
  %v1086 = vld [vmem:[%s1085] sm:$0xff]
  %v1087 = vld [vmem:[%s1085 + $0x8] sm:$0xff]
  %v1088 = vld [vmem:[%s1085 + $0x10] sm:$0xff]
  %v1089 = vld [vmem:[%s1085 + $0x18] sm:$0xff]
  %v1090 = vld [vmem:[%s1085 + $0x20] sm:$0xff]
  %v1091 = vunpack.c.l.bf16 %v1086
  %v1092 = vunpack.c.l.bf16 %v1087
  %v1093 = vunpack.c.l.bf16 %v1088
  %v1094 = vunpack.c.l.bf16 %v1089
  %v1095 = vunpack.c.l.bf16 %v1090
  %v1096 = vunpack.c.h.bf16 %v1086
  %v1097 = vunpack.c.h.bf16 %v1087
  %v1098 = vunpack.c.h.bf16 %v1088
  %v1099 = vunpack.c.h.bf16 %v1089
  %v1100 = vunpack.c.h.bf16 %v1090
  %v1101 = vpack.c.bf16 %v1080, %v1079
  %v1102 = vld [vmem:[%s2] sm:$0xff]
  %v1103 = vld [vmem:[%s2 + $0x8] sm:$0xff]
  %v1104 = vld [vmem:[%s2 + $0x10] sm:$0xff]
  %v1105 = vld [vmem:[%s2 + $0x18] sm:$0xff]
  %v1106 = vld [vmem:[%s2 + $0x20] sm:$0xff]
  %v1107 = vld [vmem:[%s2 + $0x28] sm:$0xff]
  %v1108 = vld [vmem:[%s2 + $0x30] sm:$0xff]
  %v1109 = vld [vmem:[%s2 + $0x38] sm:$0xff]
  %v1110 = vld [vmem:[%s2 + $0x40] sm:$0xff]
  %v1111 = vld [vmem:[%s2 + $0x48] sm:$0xff]
  %v1112 = vld [vmem:[%s2 + $0x50] sm:$0xff]
  %v1113 = vld [vmem:[%s2 + $0x58] sm:$0xff]
  %v1114 = vld [vmem:[%s2 + $0x60] sm:$0xff]
  %v1115 = vld [vmem:[%s2 + $0x68] sm:$0xff]
  %v1116 = vld [vmem:[%s2 + $0x70] sm:$0xff]
  %v1117 = vld [vmem:[%s2 + $0x78] sm:$0xff]
  %v1118 = vld [vmem:[%s2 + $0x80] sm:$0xff]
  %v1119 = vld [vmem:[%s2 + $0x88] sm:$0xff]
  %v1120 = vld [vmem:[%s2 + $0x90] sm:$0xff]
  %v1121 = vld [vmem:[%s2 + $0x98] sm:$0xff]
  %v1122 = vld [vmem:[%s2 + $0xa0] sm:$0xff]
  %v1123 = vld [vmem:[%s2 + $0xa8] sm:$0xff]
  %v1124 = vld [vmem:[%s2 + $0xb0] sm:$0xff]
  %v1125 = vld [vmem:[%s2 + $0xb8] sm:$0xff]
  %v1126 = vld [vmem:[%s2 + $0xc0] sm:$0xff]
  %v1127 = vld [vmem:[%s2 + $0xc8] sm:$0xff]
  %v1128 = vld [vmem:[%s2 + $0xd0] sm:$0xff]
  %v1129 = vld [vmem:[%s2 + $0xd8] sm:$0xff]
  %v1130 = vld [vmem:[%s2 + $0xe0] sm:$0xff]
  %v1131 = vld [vmem:[%s2 + $0xe8] sm:$0xff]
  %v1132 = vld [vmem:[%s2 + $0xf0] sm:$0xff]
  %v1133 = vld [vmem:[%s2 + $0xf8] sm:$0xff]
  %v1166 = vunpack.c.l.b16 %v1102
  %v1167 = vunpack.c.h.b16 %v1102
  %v1168 = vunpack.c.l.b16 %v1103
  %v1169 = vunpack.c.h.b16 %v1103
  %v1170 = vunpack.c.l.b16 %v1104
  %v1171 = vunpack.c.h.b16 %v1104
  %v1172 = vunpack.c.l.b16 %v1105
  %v1173 = vunpack.c.h.b16 %v1105
  %v1174 = vunpack.c.l.b16 %v1106
  %v1175 = vunpack.c.h.b16 %v1106
  %v1176 = vunpack.c.l.b16 %v1107
  %v1177 = vunpack.c.h.b16 %v1107
  %v1178 = vunpack.c.l.b16 %v1108
  %v1179 = vunpack.c.h.b16 %v1108
  %v1180 = vunpack.c.l.b16 %v1109
  %v1181 = vunpack.c.h.b16 %v1109
  %v1182 = vunpack.c.l.b16 %v1110
  %v1183 = vunpack.c.h.b16 %v1110
  %v1184 = vunpack.c.l.b16 %v1111
  %v1185 = vunpack.c.h.b16 %v1111
  %v1186 = vunpack.c.l.b16 %v1112
  %v1187 = vunpack.c.h.b16 %v1112
  %v1188 = vunpack.c.l.b16 %v1113
  %v1189 = vunpack.c.h.b16 %v1113
  %v1190 = vunpack.c.l.b16 %v1114
  %v1191 = vunpack.c.h.b16 %v1114
  %v1192 = vunpack.c.l.b16 %v1115
  %v1193 = vunpack.c.h.b16 %v1115
  %v1194 = vunpack.c.l.b16 %v1116
  %v1195 = vunpack.c.h.b16 %v1116
  %v1196 = vunpack.c.l.b16 %v1117
  %v1197 = vunpack.c.h.b16 %v1117
  %v1198 = vunpack.c.l.b16 %v1118
  %v1199 = vunpack.c.h.b16 %v1118
  %v1200 = vunpack.c.l.b16 %v1119
  %v1201 = vunpack.c.h.b16 %v1119
  %v1202 = vunpack.c.l.b16 %v1120
  %v1203 = vunpack.c.h.b16 %v1120
  %v1204 = vunpack.c.l.b16 %v1121
  %v1205 = vunpack.c.h.b16 %v1121
  %v1206 = vunpack.c.l.b16 %v1122
  %v1207 = vunpack.c.h.b16 %v1122
  %v1208 = vunpack.c.l.b16 %v1123
  %v1209 = vunpack.c.h.b16 %v1123
  %v1210 = vunpack.c.l.b16 %v1124
  %v1211 = vunpack.c.h.b16 %v1124
  %v1212 = vunpack.c.l.b16 %v1125
  %v1213 = vunpack.c.h.b16 %v1125
  %v1214 = vunpack.c.l.b16 %v1126
  %v1215 = vunpack.c.h.b16 %v1126
  %v1216 = vunpack.c.l.b16 %v1127
  %v1217 = vunpack.c.h.b16 %v1127
  %v1218 = vunpack.c.l.b16 %v1128
  %v1219 = vunpack.c.h.b16 %v1128
  %v1220 = vunpack.c.l.b16 %v1129
  %v1221 = vunpack.c.h.b16 %v1129
  %v1222 = vunpack.c.l.b16 %v1130
  %v1223 = vunpack.c.h.b16 %v1130
  %v1224 = vunpack.c.l.b16 %v1131
  %v1225 = vunpack.c.h.b16 %v1131
  %v1226 = vunpack.c.l.b16 %v1132
  %v1227 = vunpack.c.h.b16 %v1132
  %v1228 = vunpack.c.l.b16 %v1133
  %v1229 = vunpack.c.h.b16 %v1133
  %v1230 = vpack.c.b16 %v1170, %v1166
  %v1231 = vpack.c.b16 %v1171, %v1167
  %v1232 = vpack.c.b16 %v1172, %v1168
  %v1233 = vpack.c.b16 %v1173, %v1169
  %v1234 = vpack.c.b16 %v1178, %v1174
  %v1235 = vpack.c.b16 %v1179, %v1175
  %v1236 = vpack.c.b16 %v1180, %v1176
  %v1237 = vpack.c.b16 %v1181, %v1177
  %v1238 = vpack.c.b16 %v1186, %v1182
  %v1239 = vpack.c.b16 %v1187, %v1183
  %v1240 = vpack.c.b16 %v1188, %v1184
  %v1241 = vpack.c.b16 %v1189, %v1185
  %v1242 = vpack.c.b16 %v1194, %v1190
  %v1243 = vpack.c.b16 %v1195, %v1191
  %v1244 = vpack.c.b16 %v1196, %v1192
  %v1245 = vpack.c.b16 %v1197, %v1193
  %v1246 = vpack.c.b16 %v1202, %v1198
  %v1247 = vpack.c.b16 %v1203, %v1199
  %v1248 = vpack.c.b16 %v1204, %v1200
  %v1249 = vpack.c.b16 %v1205, %v1201
  %v1250 = vpack.c.b16 %v1210, %v1206
  %v1251 = vpack.c.b16 %v1211, %v1207
  %v1252 = vpack.c.b16 %v1212, %v1208
  %v1253 = vpack.c.b16 %v1213, %v1209
  %v1254 = vpack.c.b16 %v1218, %v1214
  %v1255 = vpack.c.b16 %v1219, %v1215
  %v1256 = vpack.c.b16 %v1220, %v1216
  %v1257 = vpack.c.b16 %v1221, %v1217
  %v1258 = vpack.c.b16 %v1226, %v1222
  %v1259 = vpack.c.b16 %v1227, %v1223
  %v1260 = vpack.c.b16 %v1228, %v1224
  %v1261 = vpack.c.b16 %v1229, %v1225
  %1294 = vmatprep.subr.bf16.mxu0 %v1231
  %1295 = vmatpush1.bf16.msra.mxu0 %v1230
  %1296 = vmatprep.subr.bf16.mxu0 %v1235
  %1297 = vmatpush1.bf16.msra.mxu0 %v1234
  %1298 = vmatprep.subr.bf16.mxu0 %v1239
  %1299 = vmatpush1.bf16.msra.mxu0 %v1238
  %1300 = vmatprep.subr.bf16.mxu0 %v1243
  %1301 = vmatpush1.bf16.msra.mxu0 %v1242
  %1302 = vmatprep.subr.bf16.mxu0 %v1247
  %1303 = vmatpush1.bf16.msra.mxu0 %v1246
  %1304 = vmatprep.subr.bf16.mxu0 %v1251
  %1305 = vmatpush1.bf16.msra.mxu0 %v1250
  %1306 = vmatprep.subr.bf16.mxu0 %v1255
  %1307 = vmatpush1.bf16.msra.mxu0 %v1254
  %1308 = vmatprep.subr.bf16.mxu0 %v1259
  %1309 = vmatpush1.bf16.msra.mxu0 %v1258
  %1310 = vmatprep.subr.bf16.mxu0 0
  %1311 = vmatpush1.bf16.msra.mxu0 0
  %1312 = vmatprep.subr.bf16.mxu0 0
  %1313 = vmatpush1.bf16.msra.mxu0 0
  %1314 = vmatprep.subr.bf16.mxu0 0
  %1315 = vmatpush1.bf16.msra.mxu0 0
  %1316 = vmatprep.subr.bf16.mxu0 0
  %1317 = vmatpush1.bf16.msra.mxu0 0
  %1318 = vmatprep.subr.bf16.mxu0 0
  %1319 = vmatpush1.bf16.msra.mxu0 0
  %1320 = vmatprep.subr.bf16.mxu0 0
  %1321 = vmatpush1.bf16.msra.mxu0 0
  %1322 = vmatprep.subr.bf16.mxu0 0
  %1323 = vmatpush1.bf16.msra.mxu0 0
  %1324 = vmatprep.subr.bf16.mxu0 0
  %1325 = vmatpush1.bf16.msra.mxu0 0
  %1326 = vmatprep.mubr.bf16.mxu0 0
  %1327 = vmatmul.mubr.bf16.gmra.mrb[0].mxu0 %v1101
  %v1328 = vpop.f32.mrb[0].mxu0
  %v1329 = vadd.f32 0.0, %v1328
  %v1330 = vpop.f32.mrb[0].mxu0
  %v1331 = vadd.f32 0.0, %v1330
  %v1332 = vpop.f32.mrb[0].mxu0
  %v1333 = vadd.f32 0.0, %v1332
  %v1334 = vpop.f32.mrb[0].mxu0
  %v1335 = vadd.f32 0.0, %v1334
  %1336 = vdwg.mxu0
  %1337 = vmatprep.subr.bf16.mxu0 %v1233
  %1338 = vmatpush1.bf16.msra.mxu0 %v1232
  %1339 = vmatprep.subr.bf16.mxu0 %v1237
  %1340 = vmatpush1.bf16.msra.mxu0 %v1236
  %1341 = vmatprep.subr.bf16.mxu0 %v1241
  %1342 = vmatpush1.bf16.msra.mxu0 %v1240
  %1343 = vmatprep.subr.bf16.mxu0 %v1245
  %1344 = vmatpush1.bf16.msra.mxu0 %v1244
  %1345 = vmatprep.subr.bf16.mxu0 %v1249
  %1346 = vmatpush1.bf16.msra.mxu0 %v1248
  %1347 = vmatprep.subr.bf16.mxu0 %v1253
  %1348 = vmatpush1.bf16.msra.mxu0 %v1252
  %1349 = vmatprep.subr.bf16.mxu0 %v1257
  %1350 = vmatpush1.bf16.msra.mxu0 %v1256
  %1351 = vmatprep.subr.bf16.mxu0 %v1261
  %1352 = vmatpush1.bf16.msra.mxu0 %v1260
  %1353 = vmatprep.subr.bf16.mxu0 0
  %1354 = vmatpush1.bf16.msra.mxu0 0
  %1355 = vmatprep.subr.bf16.mxu0 0
  %1356 = vmatpush1.bf16.msra.mxu0 0
  %1357 = vmatprep.subr.bf16.mxu0 0
  %1358 = vmatpush1.bf16.msra.mxu0 0
  %1359 = vmatprep.subr.bf16.mxu0 0
  %1360 = vmatpush1.bf16.msra.mxu0 0
  %1361 = vmatprep.subr.bf16.mxu0 0
  %1362 = vmatpush1.bf16.msra.mxu0 0
  %1363 = vmatprep.subr.bf16.mxu0 0
  %1364 = vmatpush1.bf16.msra.mxu0 0
  %1365 = vmatprep.subr.bf16.mxu0 0
  %1366 = vmatpush1.bf16.msra.mxu0 0
  %1367 = vmatprep.subr.bf16.mxu0 0
  %1368 = vmatpush1.bf16.msra.mxu0 0
  %1369 = vmatprep.mubr.bf16.mxu0 0
  %1370 = vmatmul.mubr.bf16.gmra.mrb[0].mxu0 %v1101
  %v1371 = vpop.f32.mrb[0].mxu0
  %v1372 = vadd.f32 0.0, %v1371
  %v1373 = vpop.f32.mrb[0].mxu0
  %v1374 = vadd.f32 0.0, %v1373
  %v1375 = vpop.f32.mrb[0].mxu0
  %v1376 = vadd.f32 0.0, %v1375
  %v1377 = vpop.f32.mrb[0].mxu0
  %v1378 = vadd.f32 0.0, %v1377
  %1379 = vdwg.mxu0
  %v1380 = vadd.f32 %v1329, %v1091
  %v1381 = vadd.f32 %v1333, %v1096
  %v1382 = vtanh.pop %v1380
  %v1383 = vtanh.pop %v1381
  %v1384 = vadd.f32 %v1372, %v1093
  %v1385 = vadd.f32 %v1376, %v1098
  %v1386 = vxor.u32 %v1384, 2147483648
  %v1387 = vxor.u32 %v1385, 2147483648
  %v1388 = vmul.f32 %v1386, 1.442695
  %v1389 = vpow.pop %v1388
  %v1390 = vmul.f32 %v1387, 1.442695
  %v1391 = vpow.pop %v1390
  %v1392 = vadd.f32 %v1389, 1.0
  %v1393 = vadd.f32 %v1391, 1.0
  %v1394 = vrcp.pop %v1392
  %v1395 = vmul.f32 1.0, %v1394
  %v1396 = vrcp.pop %v1393
  %v1397 = vmul.f32 1.0, %v1396
  %v1398 = vadd.f32 %v1374, %v1094
  %v1399 = vadd.f32 %v1378, %v1099
  %v1400 = vxor.u32 %v1398, 2147483648
  %v1401 = vxor.u32 %v1399, 2147483648
  %v1402 = vmul.f32 %v1400, 1.442695
  %v1403 = vpow.pop %v1402
  %v1404 = vmul.f32 %v1401, 1.442695
  %v1405 = vpow.pop %v1404
  %v1406 = vadd.f32 %v1403, 1.0
  %v1407 = vadd.f32 %v1405, 1.0
  %v1408 = vrcp.pop %v1406
  %v1409 = vmul.f32 1.0, %v1408
  %v1410 = vrcp.pop %v1407
  %v1411 = vmul.f32 1.0, %v1410
  %v1412 = vmul.f32 %v1395, %v1079
  %v1413 = vmul.f32 %v1397, %v1080
  %v1414 = vpack.c.bf16 %v1383, %v1382
  %v1415 = vpack.c.bf16 %v1413, %v1412
  %v1416 = vld [vmem:[%s3] sm:$0xff]
  %v1417 = vld [vmem:[%s3 + $0x8] sm:$0xff]
  %v1418 = vld [vmem:[%s3 + $0x10] sm:$0xff]
  %v1419 = vld [vmem:[%s3 + $0x18] sm:$0xff]
  %v1420 = vld [vmem:[%s3 + $0x20] sm:$0xff]
  %v1421 = vld [vmem:[%s3 + $0x28] sm:$0xff]
  %v1422 = vld [vmem:[%s3 + $0x30] sm:$0xff]
  %v1423 = vld [vmem:[%s3 + $0x38] sm:$0xff]
  %v1424 = vld [vmem:[%s3 + $0x40] sm:$0xff]
  %v1425 = vld [vmem:[%s3 + $0x48] sm:$0xff]
  %v1426 = vld [vmem:[%s3 + $0x50] sm:$0xff]
  %v1427 = vld [vmem:[%s3 + $0x58] sm:$0xff]
  %v1428 = vld [vmem:[%s3 + $0x60] sm:$0xff]
  %v1429 = vld [vmem:[%s3 + $0x68] sm:$0xff]
  %v1430 = vld [vmem:[%s3 + $0x70] sm:$0xff]
  %v1431 = vld [vmem:[%s3 + $0x78] sm:$0xff]
  %v1432 = vld [vmem:[%s3 + $0x80] sm:$0xff]
  %v1433 = vld [vmem:[%s3 + $0x88] sm:$0xff]
  %v1434 = vld [vmem:[%s3 + $0x90] sm:$0xff]
  %v1435 = vld [vmem:[%s3 + $0x98] sm:$0xff]
  %v1436 = vld [vmem:[%s3 + $0xa0] sm:$0xff]
  %v1437 = vld [vmem:[%s3 + $0xa8] sm:$0xff]
  %v1438 = vld [vmem:[%s3 + $0xb0] sm:$0xff]
  %v1439 = vld [vmem:[%s3 + $0xb8] sm:$0xff]
  %v1440 = vld [vmem:[%s3 + $0xc0] sm:$0xff]
  %v1441 = vld [vmem:[%s3 + $0xc8] sm:$0xff]
  %v1442 = vld [vmem:[%s3 + $0xd0] sm:$0xff]
  %v1443 = vld [vmem:[%s3 + $0xd8] sm:$0xff]
  %v1444 = vld [vmem:[%s3 + $0xe0] sm:$0xff]
  %v1445 = vld [vmem:[%s3 + $0xe8] sm:$0xff]
  %v1446 = vld [vmem:[%s3 + $0xf0] sm:$0xff]
  %v1447 = vld [vmem:[%s3 + $0xf8] sm:$0xff]
  %v1480 = vunpack.c.l.b16 %v1416
  %v1481 = vunpack.c.h.b16 %v1416
  %v1482 = vunpack.c.l.b16 %v1417
  %v1483 = vunpack.c.h.b16 %v1417
  %v1484 = vunpack.c.l.b16 %v1418
  %v1485 = vunpack.c.h.b16 %v1418
  %v1486 = vunpack.c.l.b16 %v1419
  %v1487 = vunpack.c.h.b16 %v1419
  %v1488 = vunpack.c.l.b16 %v1420
  %v1489 = vunpack.c.h.b16 %v1420
  %v1490 = vunpack.c.l.b16 %v1421
  %v1491 = vunpack.c.h.b16 %v1421
  %v1492 = vunpack.c.l.b16 %v1422
  %v1493 = vunpack.c.h.b16 %v1422
  %v1494 = vunpack.c.l.b16 %v1423
  %v1495 = vunpack.c.h.b16 %v1423
  %v1496 = vunpack.c.l.b16 %v1424
  %v1497 = vunpack.c.h.b16 %v1424
  %v1498 = vunpack.c.l.b16 %v1425
  %v1499 = vunpack.c.h.b16 %v1425
  %v1500 = vunpack.c.l.b16 %v1426
  %v1501 = vunpack.c.h.b16 %v1426
  %v1502 = vunpack.c.l.b16 %v1427
  %v1503 = vunpack.c.h.b16 %v1427
  %v1504 = vunpack.c.l.b16 %v1428
  %v1505 = vunpack.c.h.b16 %v1428
  %v1506 = vunpack.c.l.b16 %v1429
  %v1507 = vunpack.c.h.b16 %v1429
  %v1508 = vunpack.c.l.b16 %v1430
  %v1509 = vunpack.c.h.b16 %v1430
  %v1510 = vunpack.c.l.b16 %v1431
  %v1511 = vunpack.c.h.b16 %v1431
  %v1512 = vunpack.c.l.b16 %v1432
  %v1513 = vunpack.c.h.b16 %v1432
  %v1514 = vunpack.c.l.b16 %v1433
  %v1515 = vunpack.c.h.b16 %v1433
  %v1516 = vunpack.c.l.b16 %v1434
  %v1517 = vunpack.c.h.b16 %v1434
  %v1518 = vunpack.c.l.b16 %v1435
  %v1519 = vunpack.c.h.b16 %v1435
  %v1520 = vunpack.c.l.b16 %v1436
  %v1521 = vunpack.c.h.b16 %v1436
  %v1522 = vunpack.c.l.b16 %v1437
  %v1523 = vunpack.c.h.b16 %v1437
  %v1524 = vunpack.c.l.b16 %v1438
  %v1525 = vunpack.c.h.b16 %v1438
  %v1526 = vunpack.c.l.b16 %v1439
  %v1527 = vunpack.c.h.b16 %v1439
  %v1528 = vunpack.c.l.b16 %v1440
  %v1529 = vunpack.c.h.b16 %v1440
  %v1530 = vunpack.c.l.b16 %v1441
  %v1531 = vunpack.c.h.b16 %v1441
  %v1532 = vunpack.c.l.b16 %v1442
  %v1533 = vunpack.c.h.b16 %v1442
  %v1534 = vunpack.c.l.b16 %v1443
  %v1535 = vunpack.c.h.b16 %v1443
  %v1536 = vunpack.c.l.b16 %v1444
  %v1537 = vunpack.c.h.b16 %v1444
  %v1538 = vunpack.c.l.b16 %v1445
  %v1539 = vunpack.c.h.b16 %v1445
  %v1540 = vunpack.c.l.b16 %v1446
  %v1541 = vunpack.c.h.b16 %v1446
  %v1542 = vunpack.c.l.b16 %v1447
  %v1543 = vunpack.c.h.b16 %v1447
  %v1544 = vpack.c.b16 %v1482, %v1480
  %v1545 = vpack.c.b16 %v1483, %v1481
  %v1546 = vpack.c.b16 %v1486, %v1484
  %v1547 = vpack.c.b16 %v1487, %v1485
  %v1548 = vpack.c.b16 %v1490, %v1488
  %v1549 = vpack.c.b16 %v1491, %v1489
  %v1550 = vpack.c.b16 %v1494, %v1492
  %v1551 = vpack.c.b16 %v1495, %v1493
  %v1552 = vpack.c.b16 %v1498, %v1496
  %v1553 = vpack.c.b16 %v1499, %v1497
  %v1554 = vpack.c.b16 %v1502, %v1500
  %v1555 = vpack.c.b16 %v1503, %v1501
  %v1556 = vpack.c.b16 %v1506, %v1504
  %v1557 = vpack.c.b16 %v1507, %v1505
  %v1558 = vpack.c.b16 %v1510, %v1508
  %v1559 = vpack.c.b16 %v1511, %v1509
  %v1560 = vpack.c.b16 %v1514, %v1512
  %v1561 = vpack.c.b16 %v1515, %v1513
  %v1562 = vpack.c.b16 %v1518, %v1516
  %v1563 = vpack.c.b16 %v1519, %v1517
  %v1564 = vpack.c.b16 %v1522, %v1520
  %v1565 = vpack.c.b16 %v1523, %v1521
  %v1566 = vpack.c.b16 %v1526, %v1524
  %v1567 = vpack.c.b16 %v1527, %v1525
  %v1568 = vpack.c.b16 %v1530, %v1528
  %v1569 = vpack.c.b16 %v1531, %v1529
  %v1570 = vpack.c.b16 %v1534, %v1532
  %v1571 = vpack.c.b16 %v1535, %v1533
  %v1572 = vpack.c.b16 %v1538, %v1536
  %v1573 = vpack.c.b16 %v1539, %v1537
  %v1574 = vpack.c.b16 %v1542, %v1540
  %v1575 = vpack.c.b16 %v1543, %v1541
  %1608 = vmatprep.subr.bf16.mxu0 %v1545
  %1609 = vmatpush1.bf16.msra.mxu0 %v1544
  %1610 = vmatprep.subr.bf16.mxu0 %v1547
  %1611 = vmatpush1.bf16.msra.mxu0 %v1546
  %1612 = vmatprep.subr.bf16.mxu0 %v1549
  %1613 = vmatpush1.bf16.msra.mxu0 %v1548
  %1614 = vmatprep.subr.bf16.mxu0 %v1551
  %1615 = vmatpush1.bf16.msra.mxu0 %v1550
  %1616 = vmatprep.subr.bf16.mxu0 %v1553
  %1617 = vmatpush1.bf16.msra.mxu0 %v1552
  %1618 = vmatprep.subr.bf16.mxu0 %v1555
  %1619 = vmatpush1.bf16.msra.mxu0 %v1554
  %1620 = vmatprep.subr.bf16.mxu0 %v1557
  %1621 = vmatpush1.bf16.msra.mxu0 %v1556
  %1622 = vmatprep.subr.bf16.mxu0 %v1559
  %1623 = vmatpush1.bf16.msra.mxu0 %v1558
  %1624 = vmatprep.subr.bf16.mxu0 %v1561
  %1625 = vmatpush1.bf16.msra.mxu0 %v1560
  %1626 = vmatprep.subr.bf16.mxu0 %v1563
  %1627 = vmatpush1.bf16.msra.mxu0 %v1562
  %1628 = vmatprep.subr.bf16.mxu0 %v1565
  %1629 = vmatpush1.bf16.msra.mxu0 %v1564
  %1630 = vmatprep.subr.bf16.mxu0 %v1567
  %1631 = vmatpush1.bf16.msra.mxu0 %v1566
  %1632 = vmatprep.subr.bf16.mxu0 %v1569
  %1633 = vmatpush1.bf16.msra.mxu0 %v1568
  %1634 = vmatprep.subr.bf16.mxu0 %v1571
  %1635 = vmatpush1.bf16.msra.mxu0 %v1570
  %1636 = vmatprep.subr.bf16.mxu0 %v1573
  %1637 = vmatpush1.bf16.msra.mxu0 %v1572
  %1638 = vmatprep.subr.bf16.mxu0 %v1575
  %1639 = vmatpush1.bf16.msra.mxu0 %v1574
  %1640 = vmatprep.mubr.bf16.mxu0 %v1415
  %1641 = vmatmul.mubr.bf16.gmra.mrb[0].mxu0 %v1414
  %v1642 = vpop.f32.mrb[0].mxu0
  %v1643 = vadd.f32 0.0, %v1642
  %v1644 = vpop.f32.mrb[0].mxu0
  %v1645 = vadd.f32 0.0, %v1644
  %v1646 = vpop.f32.mrb[0].mxu0
  %v1647 = vadd.f32 0.0, %v1646
  %v1648 = vpop.f32.mrb[0].mxu0
  %v1649 = vadd.f32 0.0, %v1648
  %1650 = vdwg.mxu0
  %v1651 = vadd.f32 %v1331, %v1092
  %v1652 = vadd.f32 %v1335, %v1097
  %v1653 = vadd.f32 %v1651, %v1643
  %v1654 = vadd.f32 %v1652, %v1647
  %v1655 = vxor.u32 %v1653, 2147483648
  %v1656 = vxor.u32 %v1654, 2147483648
  %v1657 = vmul.f32 %v1655, 1.442695
  %v1658 = vpow.pop %v1657
  %v1659 = vmul.f32 %v1656, 1.442695
  %v1660 = vpow.pop %v1659
  %v1661 = vadd.f32 %v1658, 1.0
  %v1662 = vadd.f32 %v1660, 1.0
  %v1663 = vrcp.pop %v1661
  %v1664 = vmul.f32 1.0, %v1663
  %v1665 = vrcp.pop %v1662
  %v1666 = vmul.f32 1.0, %v1665
  %v1667 = vadd.f32 %v1645, %v1095
  %v1668 = vadd.f32 %v1649, %v1100
  %v1669 = vtanh.pop %v1667
  %v1670 = vtanh.pop %v1668
  %v1671 = vsub.f32 1.0, %v1409
  %v1672 = vsub.f32 1.0, %v1411
  %v1673 = vmul.f32 %v1664, %v1079
  %v1674 = vmul.f32 %v1666, %v1080
  %v1675 = vmul.f32 %v1671, %v1673
  %v1676 = vmul.f32 %v1672, %v1674
  %v1677 = vmul.f32 %v1409, %v1669
  %v1678 = vmul.f32 %v1411, %v1670
  %v1679 = vadd.f32 %v1675, %v1677
  %v1680 = vadd.f32 %v1676, %v1678
  %s1681 = scalar_lea.vmem %s5, 16
  %1682 = vst [vmem:[%s1681] sm:$0xff] %v1679
  %1683 = vst [vmem:[%s1681 + $0x8] sm:$0xff] %v1680
  %s1684 = smul.u32 2, 5
  %s1685 = smul.addr %s1684, 8
  %s1686 = scalar_lea.vmem [#allocation3], %s1685
  %v1687 = vld [vmem:[%s1686] sm:$0xff]
  %v1688 = vld [vmem:[%s1686 + $0x8] sm:$0xff]
  %v1689 = vld [vmem:[%s1686 + $0x10] sm:$0xff]
  %v1690 = vld [vmem:[%s1686 + $0x18] sm:$0xff]
  %v1691 = vld [vmem:[%s1686 + $0x20] sm:$0xff]
  %v1692 = vunpack.c.l.bf16 %v1687
  %v1693 = vunpack.c.l.bf16 %v1688
  %v1694 = vunpack.c.l.bf16 %v1689
  %v1695 = vunpack.c.l.bf16 %v1690
  %v1696 = vunpack.c.l.bf16 %v1691
  %v1697 = vunpack.c.h.bf16 %v1687
  %v1698 = vunpack.c.h.bf16 %v1688
  %v1699 = vunpack.c.h.bf16 %v1689
  %v1700 = vunpack.c.h.bf16 %v1690
  %v1701 = vunpack.c.h.bf16 %v1691
  %v1702 = vpack.c.bf16 %v1680, %v1679
  %v1703 = vld [vmem:[%s2] sm:$0xff]
  %v1704 = vld [vmem:[%s2 + $0x8] sm:$0xff]
  %v1705 = vld [vmem:[%s2 + $0x10] sm:$0xff]
  %v1706 = vld [vmem:[%s2 + $0x18] sm:$0xff]
  %v1707 = vld [vmem:[%s2 + $0x20] sm:$0xff]
  %v1708 = vld [vmem:[%s2 + $0x28] sm:$0xff]
  %v1709 = vld [vmem:[%s2 + $0x30] sm:$0xff]
  %v1710 = vld [vmem:[%s2 + $0x38] sm:$0xff]
  %v1711 = vld [vmem:[%s2 + $0x40] sm:$0xff]
  %v1712 = vld [vmem:[%s2 + $0x48] sm:$0xff]
  %v1713 = vld [vmem:[%s2 + $0x50] sm:$0xff]
  %v1714 = vld [vmem:[%s2 + $0x58] sm:$0xff]
  %v1715 = vld [vmem:[%s2 + $0x60] sm:$0xff]
  %v1716 = vld [vmem:[%s2 + $0x68] sm:$0xff]
  %v1717 = vld [vmem:[%s2 + $0x70] sm:$0xff]
  %v1718 = vld [vmem:[%s2 + $0x78] sm:$0xff]
  %v1719 = vld [vmem:[%s2 + $0x80] sm:$0xff]
  %v1720 = vld [vmem:[%s2 + $0x88] sm:$0xff]
  %v1721 = vld [vmem:[%s2 + $0x90] sm:$0xff]
  %v1722 = vld [vmem:[%s2 + $0x98] sm:$0xff]
  %v1723 = vld [vmem:[%s2 + $0xa0] sm:$0xff]
  %v1724 = vld [vmem:[%s2 + $0xa8] sm:$0xff]
  %v1725 = vld [vmem:[%s2 + $0xb0] sm:$0xff]
  %v1726 = vld [vmem:[%s2 + $0xb8] sm:$0xff]
  %v1727 = vld [vmem:[%s2 + $0xc0] sm:$0xff]
  %v1728 = vld [vmem:[%s2 + $0xc8] sm:$0xff]
  %v1729 = vld [vmem:[%s2 + $0xd0] sm:$0xff]
  %v1730 = vld [vmem:[%s2 + $0xd8] sm:$0xff]
  %v1731 = vld [vmem:[%s2 + $0xe0] sm:$0xff]
  %v1732 = vld [vmem:[%s2 + $0xe8] sm:$0xff]
  %v1733 = vld [vmem:[%s2 + $0xf0] sm:$0xff]
  %v1734 = vld [vmem:[%s2 + $0xf8] sm:$0xff]
  %v1767 = vunpack.c.l.b16 %v1703
  %v1768 = vunpack.c.h.b16 %v1703
  %v1769 = vunpack.c.l.b16 %v1704
  %v1770 = vunpack.c.h.b16 %v1704
  %v1771 = vunpack.c.l.b16 %v1705
  %v1772 = vunpack.c.h.b16 %v1705
  %v1773 = vunpack.c.l.b16 %v1706
  %v1774 = vunpack.c.h.b16 %v1706
  %v1775 = vunpack.c.l.b16 %v1707
  %v1776 = vunpack.c.h.b16 %v1707
  %v1777 = vunpack.c.l.b16 %v1708
  %v1778 = vunpack.c.h.b16 %v1708
  %v1779 = vunpack.c.l.b16 %v1709
  %v1780 = vunpack.c.h.b16 %v1709
  %v1781 = vunpack.c.l.b16 %v1710
  %v1782 = vunpack.c.h.b16 %v1710
  %v1783 = vunpack.c.l.b16 %v1711
  %v1784 = vunpack.c.h.b16 %v1711
  %v1785 = vunpack.c.l.b16 %v1712
  %v1786 = vunpack.c.h.b16 %v1712
  %v1787 = vunpack.c.l.b16 %v1713
  %v1788 = vunpack.c.h.b16 %v1713
  %v1789 = vunpack.c.l.b16 %v1714
  %v1790 = vunpack.c.h.b16 %v1714
  %v1791 = vunpack.c.l.b16 %v1715
  %v1792 = vunpack.c.h.b16 %v1715
  %v1793 = vunpack.c.l.b16 %v1716
  %v1794 = vunpack.c.h.b16 %v1716
  %v1795 = vunpack.c.l.b16 %v1717
  %v1796 = vunpack.c.h.b16 %v1717
  %v1797 = vunpack.c.l.b16 %v1718
  %v1798 = vunpack.c.h.b16 %v1718
  %v1799 = vunpack.c.l.b16 %v1719
  %v1800 = vunpack.c.h.b16 %v1719
  %v1801 = vunpack.c.l.b16 %v1720
  %v1802 = vunpack.c.h.b16 %v1720
  %v1803 = vunpack.c.l.b16 %v1721
  %v1804 = vunpack.c.h.b16 %v1721
  %v1805 = vunpack.c.l.b16 %v1722
  %v1806 = vunpack.c.h.b16 %v1722
  %v1807 = vunpack.c.l.b16 %v1723
  %v1808 = vunpack.c.h.b16 %v1723
  %v1809 = vunpack.c.l.b16 %v1724
  %v1810 = vunpack.c.h.b16 %v1724
  %v1811 = vunpack.c.l.b16 %v1725
  %v1812 = vunpack.c.h.b16 %v1725
  %v1813 = vunpack.c.l.b16 %v1726
  %v1814 = vunpack.c.h.b16 %v1726
  %v1815 = vunpack.c.l.b16 %v1727
  %v1816 = vunpack.c.h.b16 %v1727
  %v1817 = vunpack.c.l.b16 %v1728
  %v1818 = vunpack.c.h.b16 %v1728
  %v1819 = vunpack.c.l.b16 %v1729
  %v1820 = vunpack.c.h.b16 %v1729
  %v1821 = vunpack.c.l.b16 %v1730
  %v1822 = vunpack.c.h.b16 %v1730
  %v1823 = vunpack.c.l.b16 %v1731
  %v1824 = vunpack.c.h.b16 %v1731
  %v1825 = vunpack.c.l.b16 %v1732
  %v1826 = vunpack.c.h.b16 %v1732
  %v1827 = vunpack.c.l.b16 %v1733
  %v1828 = vunpack.c.h.b16 %v1733
  %v1829 = vunpack.c.l.b16 %v1734
  %v1830 = vunpack.c.h.b16 %v1734
  %v1831 = vpack.c.b16 %v1771, %v1767
  %v1832 = vpack.c.b16 %v1772, %v1768
  %v1833 = vpack.c.b16 %v1773, %v1769
  %v1834 = vpack.c.b16 %v1774, %v1770
  %v1835 = vpack.c.b16 %v1779, %v1775
  %v1836 = vpack.c.b16 %v1780, %v1776
  %v1837 = vpack.c.b16 %v1781, %v1777
  %v1838 = vpack.c.b16 %v1782, %v1778
  %v1839 = vpack.c.b16 %v1787, %v1783
  %v1840 = vpack.c.b16 %v1788, %v1784
  %v1841 = vpack.c.b16 %v1789, %v1785
  %v1842 = vpack.c.b16 %v1790, %v1786
  %v1843 = vpack.c.b16 %v1795, %v1791
  %v1844 = vpack.c.b16 %v1796, %v1792
  %v1845 = vpack.c.b16 %v1797, %v1793
  %v1846 = vpack.c.b16 %v1798, %v1794
  %v1847 = vpack.c.b16 %v1803, %v1799
  %v1848 = vpack.c.b16 %v1804, %v1800
  %v1849 = vpack.c.b16 %v1805, %v1801
  %v1850 = vpack.c.b16 %v1806, %v1802
  %v1851 = vpack.c.b16 %v1811, %v1807
  %v1852 = vpack.c.b16 %v1812, %v1808
  %v1853 = vpack.c.b16 %v1813, %v1809
  %v1854 = vpack.c.b16 %v1814, %v1810
  %v1855 = vpack.c.b16 %v1819, %v1815
  %v1856 = vpack.c.b16 %v1820, %v1816
  %v1857 = vpack.c.b16 %v1821, %v1817
  %v1858 = vpack.c.b16 %v1822, %v1818
  %v1859 = vpack.c.b16 %v1827, %v1823
  %v1860 = vpack.c.b16 %v1828, %v1824
  %v1861 = vpack.c.b16 %v1829, %v1825
  %v1862 = vpack.c.b16 %v1830, %v1826
  %1895 = vmatprep.subr.bf16.mxu0 %v1832
  %1896 = vmatpush1.bf16.msra.mxu0 %v1831
  %1897 = vmatprep.subr.bf16.mxu0 %v1836
  %1898 = vmatpush1.bf16.msra.mxu0 %v1835
  %1899 = vmatprep.subr.bf16.mxu0 %v1840
  %1900 = vmatpush1.bf16.msra.mxu0 %v1839
  %1901 = vmatprep.subr.bf16.mxu0 %v1844
  %1902 = vmatpush1.bf16.msra.mxu0 %v1843
  %1903 = vmatprep.subr.bf16.mxu0 %v1848
  %1904 = vmatpush1.bf16.msra.mxu0 %v1847
  %1905 = vmatprep.subr.bf16.mxu0 %v1852
  %1906 = vmatpush1.bf16.msra.mxu0 %v1851
  %1907 = vmatprep.subr.bf16.mxu0 %v1856
  %1908 = vmatpush1.bf16.msra.mxu0 %v1855
  %1909 = vmatprep.subr.bf16.mxu0 %v1860
  %1910 = vmatpush1.bf16.msra.mxu0 %v1859
  %1911 = vmatprep.subr.bf16.mxu0 0
  %1912 = vmatpush1.bf16.msra.mxu0 0
  %1913 = vmatprep.subr.bf16.mxu0 0
  %1914 = vmatpush1.bf16.msra.mxu0 0
  %1915 = vmatprep.subr.bf16.mxu0 0
  %1916 = vmatpush1.bf16.msra.mxu0 0
  %1917 = vmatprep.subr.bf16.mxu0 0
  %1918 = vmatpush1.bf16.msra.mxu0 0
  %1919 = vmatprep.subr.bf16.mxu0 0
  %1920 = vmatpush1.bf16.msra.mxu0 0
  %1921 = vmatprep.subr.bf16.mxu0 0
  %1922 = vmatpush1.bf16.msra.mxu0 0
  %1923 = vmatprep.subr.bf16.mxu0 0
  %1924 = vmatpush1.bf16.msra.mxu0 0
  %1925 = vmatprep.subr.bf16.mxu0 0
  %1926 = vmatpush1.bf16.msra.mxu0 0
  %1927 = vmatprep.mubr.bf16.mxu0 0
  %1928 = vmatmul.mubr.bf16.gmra.mrb[0].mxu0 %v1702
  %v1929 = vpop.f32.mrb[0].mxu0
  %v1930 = vadd.f32 0.0, %v1929
  %v1931 = vpop.f32.mrb[0].mxu0
  %v1932 = vadd.f32 0.0, %v1931
  %v1933 = vpop.f32.mrb[0].mxu0
  %v1934 = vadd.f32 0.0, %v1933
  %v1935 = vpop.f32.mrb[0].mxu0
  %v1936 = vadd.f32 0.0, %v1935
  %1937 = vdwg.mxu0
  %1938 = vmatprep.subr.bf16.mxu0 %v1834
  %1939 = vmatpush1.bf16.msra.mxu0 %v1833
  %1940 = vmatprep.subr.bf16.mxu0 %v1838
  %1941 = vmatpush1.bf16.msra.mxu0 %v1837
  %1942 = vmatprep.subr.bf16.mxu0 %v1842
  %1943 = vmatpush1.bf16.msra.mxu0 %v1841
  %1944 = vmatprep.subr.bf16.mxu0 %v1846
  %1945 = vmatpush1.bf16.msra.mxu0 %v1845
  %1946 = vmatprep.subr.bf16.mxu0 %v1850
  %1947 = vmatpush1.bf16.msra.mxu0 %v1849
  %1948 = vmatprep.subr.bf16.mxu0 %v1854
  %1949 = vmatpush1.bf16.msra.mxu0 %v1853
  %1950 = vmatprep.subr.bf16.mxu0 %v1858
  %1951 = vmatpush1.bf16.msra.mxu0 %v1857
  %1952 = vmatprep.subr.bf16.mxu0 %v1862
  %1953 = vmatpush1.bf16.msra.mxu0 %v1861
  %1954 = vmatprep.subr.bf16.mxu0 0
  %1955 = vmatpush1.bf16.msra.mxu0 0
  %1956 = vmatprep.subr.bf16.mxu0 0
  %1957 = vmatpush1.bf16.msra.mxu0 0
  %1958 = vmatprep.subr.bf16.mxu0 0
  %1959 = vmatpush1.bf16.msra.mxu0 0
  %1960 = vmatprep.subr.bf16.mxu0 0
  %1961 = vmatpush1.bf16.msra.mxu0 0
  %1962 = vmatprep.subr.bf16.mxu0 0
  %1963 = vmatpush1.bf16.msra.mxu0 0
  %1964 = vmatprep.subr.bf16.mxu0 0
  %1965 = vmatpush1.bf16.msra.mxu0 0
  %1966 = vmatprep.subr.bf16.mxu0 0
  %1967 = vmatpush1.bf16.msra.mxu0 0
  %1968 = vmatprep.subr.bf16.mxu0 0
  %1969 = vmatpush1.bf16.msra.mxu0 0
  %1970 = vmatprep.mubr.bf16.mxu0 0
  %1971 = vmatmul.mubr.bf16.gmra.mrb[0].mxu0 %v1702
  %v1972 = vpop.f32.mrb[0].mxu0
  %v1973 = vadd.f32 0.0, %v1972
  %v1974 = vpop.f32.mrb[0].mxu0
  %v1975 = vadd.f32 0.0, %v1974
  %v1976 = vpop.f32.mrb[0].mxu0
  %v1977 = vadd.f32 0.0, %v1976
  %v1978 = vpop.f32.mrb[0].mxu0
  %v1979 = vadd.f32 0.0, %v1978
  %1980 = vdwg.mxu0
  %v1981 = vadd.f32 %v1930, %v1692
  %v1982 = vadd.f32 %v1934, %v1697
  %v1983 = vtanh.pop %v1981
  %v1984 = vtanh.pop %v1982
  %v1985 = vadd.f32 %v1973, %v1694
  %v1986 = vadd.f32 %v1977, %v1699
  %v1987 = vxor.u32 %v1985, 2147483648
  %v1988 = vxor.u32 %v1986, 2147483648
  %v1989 = vmul.f32 %v1987, 1.442695
  %v1990 = vpow.pop %v1989
  %v1991 = vmul.f32 %v1988, 1.442695
  %v1992 = vpow.pop %v1991
  %v1993 = vadd.f32 %v1990, 1.0
  %v1994 = vadd.f32 %v1992, 1.0
  %v1995 = vrcp.pop %v1993
  %v1996 = vmul.f32 1.0, %v1995
  %v1997 = vrcp.pop %v1994
  %v1998 = vmul.f32 1.0, %v1997
  %v1999 = vadd.f32 %v1975, %v1695
  %v2000 = vadd.f32 %v1979, %v1700
  %v2001 = vxor.u32 %v1999, 2147483648
  %v2002 = vxor.u32 %v2000, 2147483648
  %v2003 = vmul.f32 %v2001, 1.442695
  %v2004 = vpow.pop %v2003
  %v2005 = vmul.f32 %v2002, 1.442695
  %v2006 = vpow.pop %v2005
  %v2007 = vadd.f32 %v2004, 1.0
  %v2008 = vadd.f32 %v2006, 1.0
  %v2009 = vrcp.pop %v2007
  %v2010 = vmul.f32 1.0, %v2009
  %v2011 = vrcp.pop %v2008
  %v2012 = vmul.f32 1.0, %v2011
  %v2013 = vmul.f32 %v1996, %v1679
  %v2014 = vmul.f32 %v1998, %v1680
  %v2015 = vpack.c.bf16 %v1984, %v1983
  %v2016 = vpack.c.bf16 %v2014, %v2013
  %v2017 = vld [vmem:[%s3] sm:$0xff]
  %v2018 = vld [vmem:[%s3 + $0x8] sm:$0xff]
  %v2019 = vld [vmem:[%s3 + $0x10] sm:$0xff]
  %v2020 = vld [vmem:[%s3 + $0x18] sm:$0xff]
  %v2021 = vld [vmem:[%s3 + $0x20] sm:$0xff]
  %v2022 = vld [vmem:[%s3 + $0x28] sm:$0xff]
  %v2023 = vld [vmem:[%s3 + $0x30] sm:$0xff]
  %v2024 = vld [vmem:[%s3 + $0x38] sm:$0xff]
  %v2025 = vld [vmem:[%s3 + $0x40] sm:$0xff]
  %v2026 = vld [vmem:[%s3 + $0x48] sm:$0xff]
  %v2027 = vld [vmem:[%s3 + $0x50] sm:$0xff]
  %v2028 = vld [vmem:[%s3 + $0x58] sm:$0xff]
  %v2029 = vld [vmem:[%s3 + $0x60] sm:$0xff]
  %v2030 = vld [vmem:[%s3 + $0x68] sm:$0xff]
  %v2031 = vld [vmem:[%s3 + $0x70] sm:$0xff]
  %v2032 = vld [vmem:[%s3 + $0x78] sm:$0xff]
  %v2033 = vld [vmem:[%s3 + $0x80] sm:$0xff]
  %v2034 = vld [vmem:[%s3 + $0x88] sm:$0xff]
  %v2035 = vld [vmem:[%s3 + $0x90] sm:$0xff]
  %v2036 = vld [vmem:[%s3 + $0x98] sm:$0xff]
  %v2037 = vld [vmem:[%s3 + $0xa0] sm:$0xff]
  %v2038 = vld [vmem:[%s3 + $0xa8] sm:$0xff]
  %v2039 = vld [vmem:[%s3 + $0xb0] sm:$0xff]
  %v2040 = vld [vmem:[%s3 + $0xb8] sm:$0xff]
  %v2041 = vld [vmem:[%s3 + $0xc0] sm:$0xff]
  %v2042 = vld [vmem:[%s3 + $0xc8] sm:$0xff]
  %v2043 = vld [vmem:[%s3 + $0xd0] sm:$0xff]
  %v2044 = vld [vmem:[%s3 + $0xd8] sm:$0xff]
  %v2045 = vld [vmem:[%s3 + $0xe0] sm:$0xff]
  %v2046 = vld [vmem:[%s3 + $0xe8] sm:$0xff]
  %v2047 = vld [vmem:[%s3 + $0xf0] sm:$0xff]
  %v2048 = vld [vmem:[%s3 + $0xf8] sm:$0xff]
  %v2081 = vunpack.c.l.b16 %v2017
  %v2082 = vunpack.c.h.b16 %v2017
  %v2083 = vunpack.c.l.b16 %v2018
  %v2084 = vunpack.c.h.b16 %v2018
  %v2085 = vunpack.c.l.b16 %v2019
  %v2086 = vunpack.c.h.b16 %v2019
  %v2087 = vunpack.c.l.b16 %v2020
  %v2088 = vunpack.c.h.b16 %v2020
  %v2089 = vunpack.c.l.b16 %v2021
  %v2090 = vunpack.c.h.b16 %v2021
  %v2091 = vunpack.c.l.b16 %v2022
  %v2092 = vunpack.c.h.b16 %v2022
  %v2093 = vunpack.c.l.b16 %v2023
  %v2094 = vunpack.c.h.b16 %v2023
  %v2095 = vunpack.c.l.b16 %v2024
  %v2096 = vunpack.c.h.b16 %v2024
  %v2097 = vunpack.c.l.b16 %v2025
  %v2098 = vunpack.c.h.b16 %v2025
  %v2099 = vunpack.c.l.b16 %v2026
  %v2100 = vunpack.c.h.b16 %v2026
  %v2101 = vunpack.c.l.b16 %v2027
  %v2102 = vunpack.c.h.b16 %v2027
  %v2103 = vunpack.c.l.b16 %v2028
  %v2104 = vunpack.c.h.b16 %v2028
  %v2105 = vunpack.c.l.b16 %v2029
  %v2106 = vunpack.c.h.b16 %v2029
  %v2107 = vunpack.c.l.b16 %v2030
  %v2108 = vunpack.c.h.b16 %v2030
  %v2109 = vunpack.c.l.b16 %v2031
  %v2110 = vunpack.c.h.b16 %v2031
  %v2111 = vunpack.c.l.b16 %v2032
  %v2112 = vunpack.c.h.b16 %v2032
  %v2113 = vunpack.c.l.b16 %v2033
  %v2114 = vunpack.c.h.b16 %v2033
  %v2115 = vunpack.c.l.b16 %v2034
  %v2116 = vunpack.c.h.b16 %v2034
  %v2117 = vunpack.c.l.b16 %v2035
  %v2118 = vunpack.c.h.b16 %v2035
  %v2119 = vunpack.c.l.b16 %v2036
  %v2120 = vunpack.c.h.b16 %v2036
  %v2121 = vunpack.c.l.b16 %v2037
  %v2122 = vunpack.c.h.b16 %v2037
  %v2123 = vunpack.c.l.b16 %v2038
  %v2124 = vunpack.c.h.b16 %v2038
  %v2125 = vunpack.c.l.b16 %v2039
  %v2126 = vunpack.c.h.b16 %v2039
  %v2127 = vunpack.c.l.b16 %v2040
  %v2128 = vunpack.c.h.b16 %v2040
  %v2129 = vunpack.c.l.b16 %v2041
  %v2130 = vunpack.c.h.b16 %v2041
  %v2131 = vunpack.c.l.b16 %v2042
  %v2132 = vunpack.c.h.b16 %v2042
  %v2133 = vunpack.c.l.b16 %v2043
  %v2134 = vunpack.c.h.b16 %v2043
  %v2135 = vunpack.c.l.b16 %v2044
  %v2136 = vunpack.c.h.b16 %v2044
  %v2137 = vunpack.c.l.b16 %v2045
  %v2138 = vunpack.c.h.b16 %v2045
  %v2139 = vunpack.c.l.b16 %v2046
  %v2140 = vunpack.c.h.b16 %v2046
  %v2141 = vunpack.c.l.b16 %v2047
  %v2142 = vunpack.c.h.b16 %v2047
  %v2143 = vunpack.c.l.b16 %v2048
  %v2144 = vunpack.c.h.b16 %v2048
  %v2145 = vpack.c.b16 %v2083, %v2081
  %v2146 = vpack.c.b16 %v2084, %v2082
  %v2147 = vpack.c.b16 %v2087, %v2085
  %v2148 = vpack.c.b16 %v2088, %v2086
  %v2149 = vpack.c.b16 %v2091, %v2089
  %v2150 = vpack.c.b16 %v2092, %v2090
  %v2151 = vpack.c.b16 %v2095, %v2093
  %v2152 = vpack.c.b16 %v2096, %v2094
  %v2153 = vpack.c.b16 %v2099, %v2097
  %v2154 = vpack.c.b16 %v2100, %v2098
  %v2155 = vpack.c.b16 %v2103, %v2101
  %v2156 = vpack.c.b16 %v2104, %v2102
  %v2157 = vpack.c.b16 %v2107, %v2105
  %v2158 = vpack.c.b16 %v2108, %v2106
  %v2159 = vpack.c.b16 %v2111, %v2109
  %v2160 = vpack.c.b16 %v2112, %v2110
  %v2161 = vpack.c.b16 %v2115, %v2113
  %v2162 = vpack.c.b16 %v2116, %v2114
  %v2163 = vpack.c.b16 %v2119, %v2117
  %v2164 = vpack.c.b16 %v2120, %v2118
  %v2165 = vpack.c.b16 %v2123, %v2121
  %v2166 = vpack.c.b16 %v2124, %v2122
  %v2167 = vpack.c.b16 %v2127, %v2125
  %v2168 = vpack.c.b16 %v2128, %v2126
  %v2169 = vpack.c.b16 %v2131, %v2129
  %v2170 = vpack.c.b16 %v2132, %v2130
  %v2171 = vpack.c.b16 %v2135, %v2133
  %v2172 = vpack.c.b16 %v2136, %v2134
  %v2173 = vpack.c.b16 %v2139, %v2137
  %v2174 = vpack.c.b16 %v2140, %v2138
  %v2175 = vpack.c.b16 %v2143, %v2141
  %v2176 = vpack.c.b16 %v2144, %v2142
  %2209 = vmatprep.subr.bf16.mxu0 %v2146
  %2210 = vmatpush1.bf16.msra.mxu0 %v2145
  %2211 = vmatprep.subr.bf16.mxu0 %v2148
  %2212 = vmatpush1.bf16.msra.mxu0 %v2147
  %2213 = vmatprep.subr.bf16.mxu0 %v2150
  %2214 = vmatpush1.bf16.msra.mxu0 %v2149
  %2215 = vmatprep.subr.bf16.mxu0 %v2152
  %2216 = vmatpush1.bf16.msra.mxu0 %v2151
  %2217 = vmatprep.subr.bf16.mxu0 %v2154
  %2218 = vmatpush1.bf16.msra.mxu0 %v2153
  %2219 = vmatprep.subr.bf16.mxu0 %v2156
  %2220 = vmatpush1.bf16.msra.mxu0 %v2155
  %2221 = vmatprep.subr.bf16.mxu0 %v2158
  %2222 = vmatpush1.bf16.msra.mxu0 %v2157
  %2223 = vmatprep.subr.bf16.mxu0 %v2160
  %2224 = vmatpush1.bf16.msra.mxu0 %v2159
  %2225 = vmatprep.subr.bf16.mxu0 %v2162
  %2226 = vmatpush1.bf16.msra.mxu0 %v2161
  %2227 = vmatprep.subr.bf16.mxu0 %v2164
  %2228 = vmatpush1.bf16.msra.mxu0 %v2163
  %2229 = vmatprep.subr.bf16.mxu0 %v2166
  %2230 = vmatpush1.bf16.msra.mxu0 %v2165
  %2231 = vmatprep.subr.bf16.mxu0 %v2168
  %2232 = vmatpush1.bf16.msra.mxu0 %v2167
  %2233 = vmatprep.subr.bf16.mxu0 %v2170
  %2234 = vmatpush1.bf16.msra.mxu0 %v2169
  %2235 = vmatprep.subr.bf16.mxu0 %v2172
  %2236 = vmatpush1.bf16.msra.mxu0 %v2171
  %2237 = vmatprep.subr.bf16.mxu0 %v2174
  %2238 = vmatpush1.bf16.msra.mxu0 %v2173
  %2239 = vmatprep.subr.bf16.mxu0 %v2176
  %2240 = vmatpush1.bf16.msra.mxu0 %v2175
  %2241 = vmatprep.mubr.bf16.mxu0 %v2016
  %2242 = vmatmul.mubr.bf16.gmra.mrb[0].mxu0 %v2015
  %v2243 = vpop.f32.mrb[0].mxu0
  %v2244 = vadd.f32 0.0, %v2243
  %v2245 = vpop.f32.mrb[0].mxu0
  %v2246 = vadd.f32 0.0, %v2245
  %v2247 = vpop.f32.mrb[0].mxu0
  %v2248 = vadd.f32 0.0, %v2247
  %v2249 = vpop.f32.mrb[0].mxu0
  %v2250 = vadd.f32 0.0, %v2249
  %2251 = vdwg.mxu0
  %v2252 = vadd.f32 %v1932, %v1693
  %v2253 = vadd.f32 %v1936, %v1698
  %v2254 = vadd.f32 %v2252, %v2244
  %v2255 = vadd.f32 %v2253, %v2248
  %v2256 = vxor.u32 %v2254, 2147483648
  %v2257 = vxor.u32 %v2255, 2147483648
  %v2258 = vmul.f32 %v2256, 1.442695
  %v2259 = vpow.pop %v2258
  %v2260 = vmul.f32 %v2257, 1.442695
  %v2261 = vpow.pop %v2260
  %v2262 = vadd.f32 %v2259, 1.0
  %v2263 = vadd.f32 %v2261, 1.0
  %v2264 = vrcp.pop %v2262
  %v2265 = vmul.f32 1.0, %v2264
  %v2266 = vrcp.pop %v2263
  %v2267 = vmul.f32 1.0, %v2266
  %v2268 = vadd.f32 %v2246, %v1696
  %v2269 = vadd.f32 %v2250, %v1701
  %v2270 = vtanh.pop %v2268
  %v2271 = vtanh.pop %v2269
  %v2272 = vsub.f32 1.0, %v2010
  %v2273 = vsub.f32 1.0, %v2012
  %v2274 = vmul.f32 %v2265, %v1679
  %v2275 = vmul.f32 %v2267, %v1680
  %v2276 = vmul.f32 %v2272, %v2274
  %v2277 = vmul.f32 %v2273, %v2275
  %v2278 = vmul.f32 %v2010, %v2270
  %v2279 = vmul.f32 %v2012, %v2271
  %v2280 = vadd.f32 %v2276, %v2278
  %v2281 = vadd.f32 %v2277, %v2279
  %s2282 = scalar_lea.vmem %s5, 32
  %2283 = vst [vmem:[%s2282] sm:$0xff] %v2280
  %2284 = vst [vmem:[%s2282 + $0x8] sm:$0xff] %v2281
  %s2285 = smul.u32 3, 5
  %s2286 = smul.addr %s2285, 8
  %s2287 = scalar_lea.vmem [#allocation3], %s2286
  %v2288 = vld [vmem:[%s2287] sm:$0xff]
  %v2289 = vld [vmem:[%s2287 + $0x8] sm:$0xff]
  %v2290 = vld [vmem:[%s2287 + $0x10] sm:$0xff]
  %v2291 = vld [vmem:[%s2287 + $0x18] sm:$0xff]
  %v2292 = vld [vmem:[%s2287 + $0x20] sm:$0xff]
  %v2293 = vunpack.c.l.bf16 %v2288
  %v2294 = vunpack.c.l.bf16 %v2289
  %v2295 = vunpack.c.l.bf16 %v2290
  %v2296 = vunpack.c.l.bf16 %v2291
  %v2297 = vunpack.c.l.bf16 %v2292
  %v2298 = vunpack.c.h.bf16 %v2288
  %v2299 = vunpack.c.h.bf16 %v2289
  %v2300 = vunpack.c.h.bf16 %v2290
  %v2301 = vunpack.c.h.bf16 %v2291
  %v2302 = vunpack.c.h.bf16 %v2292
  %v2303 = vpack.c.bf16 %v2281, %v2280
  %v2304 = vld [vmem:[%s2] sm:$0xff]
  %v2305 = vld [vmem:[%s2 + $0x8] sm:$0xff]
  %v2306 = vld [vmem:[%s2 + $0x10] sm:$0xff]
  %v2307 = vld [vmem:[%s2 + $0x18] sm:$0xff]
  %v2308 = vld [vmem:[%s2 + $0x20] sm:$0xff]
  %v2309 = vld [vmem:[%s2 + $0x28] sm:$0xff]
  %v2310 = vld [vmem:[%s2 + $0x30] sm:$0xff]
  %v2311 = vld [vmem:[%s2 + $0x38] sm:$0xff]
  %v2312 = vld [vmem:[%s2 + $0x40] sm:$0xff]
  %v2313 = vld [vmem:[%s2 + $0x48] sm:$0xff]
  %v2314 = vld [vmem:[%s2 + $0x50] sm:$0xff]
  %v2315 = vld [vmem:[%s2 + $0x58] sm:$0xff]
  %v2316 = vld [vmem:[%s2 + $0x60] sm:$0xff]
  %v2317 = vld [vmem:[%s2 + $0x68] sm:$0xff]
  %v2318 = vld [vmem:[%s2 + $0x70] sm:$0xff]
  %v2319 = vld [vmem:[%s2 + $0x78] sm:$0xff]
  %v2320 = vld [vmem:[%s2 + $0x80] sm:$0xff]
  %v2321 = vld [vmem:[%s2 + $0x88] sm:$0xff]
  %v2322 = vld [vmem:[%s2 + $0x90] sm:$0xff]
  %v2323 = vld [vmem:[%s2 + $0x98] sm:$0xff]
  %v2324 = vld [vmem:[%s2 + $0xa0] sm:$0xff]
  %v2325 = vld [vmem:[%s2 + $0xa8] sm:$0xff]
  %v2326 = vld [vmem:[%s2 + $0xb0] sm:$0xff]
  %v2327 = vld [vmem:[%s2 + $0xb8] sm:$0xff]
  %v2328 = vld [vmem:[%s2 + $0xc0] sm:$0xff]
  %v2329 = vld [vmem:[%s2 + $0xc8] sm:$0xff]
  %v2330 = vld [vmem:[%s2 + $0xd0] sm:$0xff]
  %v2331 = vld [vmem:[%s2 + $0xd8] sm:$0xff]
  %v2332 = vld [vmem:[%s2 + $0xe0] sm:$0xff]
  %v2333 = vld [vmem:[%s2 + $0xe8] sm:$0xff]
  %v2334 = vld [vmem:[%s2 + $0xf0] sm:$0xff]
  %v2335 = vld [vmem:[%s2 + $0xf8] sm:$0xff]
  %v2368 = vunpack.c.l.b16 %v2304
  %v2369 = vunpack.c.h.b16 %v2304
  %v2370 = vunpack.c.l.b16 %v2305
  %v2371 = vunpack.c.h.b16 %v2305
  %v2372 = vunpack.c.l.b16 %v2306
  %v2373 = vunpack.c.h.b16 %v2306
  %v2374 = vunpack.c.l.b16 %v2307
  %v2375 = vunpack.c.h.b16 %v2307
  %v2376 = vunpack.c.l.b16 %v2308
  %v2377 = vunpack.c.h.b16 %v2308
  %v2378 = vunpack.c.l.b16 %v2309
  %v2379 = vunpack.c.h.b16 %v2309
  %v2380 = vunpack.c.l.b16 %v2310
  %v2381 = vunpack.c.h.b16 %v2310
  %v2382 = vunpack.c.l.b16 %v2311
  %v2383 = vunpack.c.h.b16 %v2311
  %v2384 = vunpack.c.l.b16 %v2312
  %v2385 = vunpack.c.h.b16 %v2312
  %v2386 = vunpack.c.l.b16 %v2313
  %v2387 = vunpack.c.h.b16 %v2313
  %v2388 = vunpack.c.l.b16 %v2314
  %v2389 = vunpack.c.h.b16 %v2314
  %v2390 = vunpack.c.l.b16 %v2315
  %v2391 = vunpack.c.h.b16 %v2315
  %v2392 = vunpack.c.l.b16 %v2316
  %v2393 = vunpack.c.h.b16 %v2316
  %v2394 = vunpack.c.l.b16 %v2317
  %v2395 = vunpack.c.h.b16 %v2317
  %v2396 = vunpack.c.l.b16 %v2318
  %v2397 = vunpack.c.h.b16 %v2318
  %v2398 = vunpack.c.l.b16 %v2319
  %v2399 = vunpack.c.h.b16 %v2319
  %v2400 = vunpack.c.l.b16 %v2320
  %v2401 = vunpack.c.h.b16 %v2320
  %v2402 = vunpack.c.l.b16 %v2321
  %v2403 = vunpack.c.h.b16 %v2321
  %v2404 = vunpack.c.l.b16 %v2322
  %v2405 = vunpack.c.h.b16 %v2322
  %v2406 = vunpack.c.l.b16 %v2323
  %v2407 = vunpack.c.h.b16 %v2323
  %v2408 = vunpack.c.l.b16 %v2324
  %v2409 = vunpack.c.h.b16 %v2324
  %v2410 = vunpack.c.l.b16 %v2325
  %v2411 = vunpack.c.h.b16 %v2325
  %v2412 = vunpack.c.l.b16 %v2326
  %v2413 = vunpack.c.h.b16 %v2326
  %v2414 = vunpack.c.l.b16 %v2327
  %v2415 = vunpack.c.h.b16 %v2327
  %v2416 = vunpack.c.l.b16 %v2328
  %v2417 = vunpack.c.h.b16 %v2328
  %v2418 = vunpack.c.l.b16 %v2329
  %v2419 = vunpack.c.h.b16 %v2329
  %v2420 = vunpack.c.l.b16 %v2330
  %v2421 = vunpack.c.h.b16 %v2330
  %v2422 = vunpack.c.l.b16 %v2331
  %v2423 = vunpack.c.h.b16 %v2331
  %v2424 = vunpack.c.l.b16 %v2332
  %v2425 = vunpack.c.h.b16 %v2332
  %v2426 = vunpack.c.l.b16 %v2333
  %v2427 = vunpack.c.h.b16 %v2333
  %v2428 = vunpack.c.l.b16 %v2334
  %v2429 = vunpack.c.h.b16 %v2334
  %v2430 = vunpack.c.l.b16 %v2335
  %v2431 = vunpack.c.h.b16 %v2335
  %v2432 = vpack.c.b16 %v2372, %v2368
  %v2433 = vpack.c.b16 %v2373, %v2369
  %v2434 = vpack.c.b16 %v2374, %v2370
  %v2435 = vpack.c.b16 %v2375, %v2371
  %v2436 = vpack.c.b16 %v2380, %v2376
  %v2437 = vpack.c.b16 %v2381, %v2377
  %v2438 = vpack.c.b16 %v2382, %v2378
  %v2439 = vpack.c.b16 %v2383, %v2379
  %v2440 = vpack.c.b16 %v2388, %v2384
  %v2441 = vpack.c.b16 %v2389, %v2385
  %v2442 = vpack.c.b16 %v2390, %v2386
  %v2443 = vpack.c.b16 %v2391, %v2387
  %v2444 = vpack.c.b16 %v2396, %v2392
  %v2445 = vpack.c.b16 %v2397, %v2393
  %v2446 = vpack.c.b16 %v2398, %v2394
  %v2447 = vpack.c.b16 %v2399, %v2395
  %v2448 = vpack.c.b16 %v2404, %v2400
  %v2449 = vpack.c.b16 %v2405, %v2401
  %v2450 = vpack.c.b16 %v2406, %v2402
  %v2451 = vpack.c.b16 %v2407, %v2403
  %v2452 = vpack.c.b16 %v2412, %v2408
  %v2453 = vpack.c.b16 %v2413, %v2409
  %v2454 = vpack.c.b16 %v2414, %v2410
  %v2455 = vpack.c.b16 %v2415, %v2411
  %v2456 = vpack.c.b16 %v2420, %v2416
  %v2457 = vpack.c.b16 %v2421, %v2417
  %v2458 = vpack.c.b16 %v2422, %v2418
  %v2459 = vpack.c.b16 %v2423, %v2419
  %v2460 = vpack.c.b16 %v2428, %v2424
  %v2461 = vpack.c.b16 %v2429, %v2425
  %v2462 = vpack.c.b16 %v2430, %v2426
  %v2463 = vpack.c.b16 %v2431, %v2427
  %2496 = vmatprep.subr.bf16.mxu0 %v2433
  %2497 = vmatpush1.bf16.msra.mxu0 %v2432
  %2498 = vmatprep.subr.bf16.mxu0 %v2437
  %2499 = vmatpush1.bf16.msra.mxu0 %v2436
  %2500 = vmatprep.subr.bf16.mxu0 %v2441
  %2501 = vmatpush1.bf16.msra.mxu0 %v2440
  %2502 = vmatprep.subr.bf16.mxu0 %v2445
  %2503 = vmatpush1.bf16.msra.mxu0 %v2444
  %2504 = vmatprep.subr.bf16.mxu0 %v2449
  %2505 = vmatpush1.bf16.msra.mxu0 %v2448
  %2506 = vmatprep.subr.bf16.mxu0 %v2453
  %2507 = vmatpush1.bf16.msra.mxu0 %v2452
  %2508 = vmatprep.subr.bf16.mxu0 %v2457
  %2509 = vmatpush1.bf16.msra.mxu0 %v2456
  %2510 = vmatprep.subr.bf16.mxu0 %v2461
  %2511 = vmatpush1.bf16.msra.mxu0 %v2460
  %2512 = vmatprep.subr.bf16.mxu0 0
  %2513 = vmatpush1.bf16.msra.mxu0 0
  %2514 = vmatprep.subr.bf16.mxu0 0
  %2515 = vmatpush1.bf16.msra.mxu0 0
  %2516 = vmatprep.subr.bf16.mxu0 0
  %2517 = vmatpush1.bf16.msra.mxu0 0
  %2518 = vmatprep.subr.bf16.mxu0 0
  %2519 = vmatpush1.bf16.msra.mxu0 0
  %2520 = vmatprep.subr.bf16.mxu0 0
  %2521 = vmatpush1.bf16.msra.mxu0 0
  %2522 = vmatprep.subr.bf16.mxu0 0
  %2523 = vmatpush1.bf16.msra.mxu0 0
  %2524 = vmatprep.subr.bf16.mxu0 0
  %2525 = vmatpush1.bf16.msra.mxu0 0
  %2526 = vmatprep.subr.bf16.mxu0 0
  %2527 = vmatpush1.bf16.msra.mxu0 0
  %2528 = vmatprep.mubr.bf16.mxu0 0
  %2529 = vmatmul.mubr.bf16.gmra.mrb[0].mxu0 %v2303
  %v2530 = vpop.f32.mrb[0].mxu0
  %v2531 = vadd.f32 0.0, %v2530
  %v2532 = vpop.f32.mrb[0].mxu0
  %v2533 = vadd.f32 0.0, %v2532
  %v2534 = vpop.f32.mrb[0].mxu0
  %v2535 = vadd.f32 0.0, %v2534
  %v2536 = vpop.f32.mrb[0].mxu0
  %v2537 = vadd.f32 0.0, %v2536
  %2538 = vdwg.mxu0
  %2539 = vmatprep.subr.bf16.mxu0 %v2435
  %2540 = vmatpush1.bf16.msra.mxu0 %v2434
  %2541 = vmatprep.subr.bf16.mxu0 %v2439
  %2542 = vmatpush1.bf16.msra.mxu0 %v2438
  %2543 = vmatprep.subr.bf16.mxu0 %v2443
  %2544 = vmatpush1.bf16.msra.mxu0 %v2442
  %2545 = vmatprep.subr.bf16.mxu0 %v2447
  %2546 = vmatpush1.bf16.msra.mxu0 %v2446
  %2547 = vmatprep.subr.bf16.mxu0 %v2451
  %2548 = vmatpush1.bf16.msra.mxu0 %v2450
  %2549 = vmatprep.subr.bf16.mxu0 %v2455
  %2550 = vmatpush1.bf16.msra.mxu0 %v2454
  %2551 = vmatprep.subr.bf16.mxu0 %v2459
  %2552 = vmatpush1.bf16.msra.mxu0 %v2458
  %2553 = vmatprep.subr.bf16.mxu0 %v2463
  %2554 = vmatpush1.bf16.msra.mxu0 %v2462
  %2555 = vmatprep.subr.bf16.mxu0 0
  %2556 = vmatpush1.bf16.msra.mxu0 0
  %2557 = vmatprep.subr.bf16.mxu0 0
  %2558 = vmatpush1.bf16.msra.mxu0 0
  %2559 = vmatprep.subr.bf16.mxu0 0
  %2560 = vmatpush1.bf16.msra.mxu0 0
  %2561 = vmatprep.subr.bf16.mxu0 0
  %2562 = vmatpush1.bf16.msra.mxu0 0
  %2563 = vmatprep.subr.bf16.mxu0 0
  %2564 = vmatpush1.bf16.msra.mxu0 0
  %2565 = vmatprep.subr.bf16.mxu0 0
  %2566 = vmatpush1.bf16.msra.mxu0 0
  %2567 = vmatprep.subr.bf16.mxu0 0
  %2568 = vmatpush1.bf16.msra.mxu0 0
  %2569 = vmatprep.subr.bf16.mxu0 0
  %2570 = vmatpush1.bf16.msra.mxu0 0
  %2571 = vmatprep.mubr.bf16.mxu0 0
  %2572 = vmatmul.mubr.bf16.gmra.mrb[0].mxu0 %v2303
  %v2573 = vpop.f32.mrb[0].mxu0
  %v2574 = vadd.f32 0.0, %v2573
  %v2575 = vpop.f32.mrb[0].mxu0
  %v2576 = vadd.f32 0.0, %v2575
  %v2577 = vpop.f32.mrb[0].mxu0
  %v2578 = vadd.f32 0.0, %v2577
  %v2579 = vpop.f32.mrb[0].mxu0
  %v2580 = vadd.f32 0.0, %v2579
  %2581 = vdwg.mxu0
  %v2582 = vadd.f32 %v2531, %v2293
  %v2583 = vadd.f32 %v2535, %v2298
  %v2584 = vtanh.pop %v2582
  %v2585 = vtanh.pop %v2583
  %v2586 = vadd.f32 %v2574, %v2295
  %v2587 = vadd.f32 %v2578, %v2300
  %v2588 = vxor.u32 %v2586, 2147483648
  %v2589 = vxor.u32 %v2587, 2147483648
  %v2590 = vmul.f32 %v2588, 1.442695
  %v2591 = vpow.pop %v2590
  %v2592 = vmul.f32 %v2589, 1.442695
  %v2593 = vpow.pop %v2592
  %v2594 = vadd.f32 %v2591, 1.0
  %v2595 = vadd.f32 %v2593, 1.0
  %v2596 = vrcp.pop %v2594
  %v2597 = vmul.f32 1.0, %v2596
  %v2598 = vrcp.pop %v2595
  %v2599 = vmul.f32 1.0, %v2598
  %v2600 = vadd.f32 %v2576, %v2296
  %v2601 = vadd.f32 %v2580, %v2301
  %v2602 = vxor.u32 %v2600, 2147483648
  %v2603 = vxor.u32 %v2601, 2147483648
  %v2604 = vmul.f32 %v2602, 1.442695
  %v2605 = vpow.pop %v2604
  %v2606 = vmul.f32 %v2603, 1.442695
  %v2607 = vpow.pop %v2606
  %v2608 = vadd.f32 %v2605, 1.0
  %v2609 = vadd.f32 %v2607, 1.0
  %v2610 = vrcp.pop %v2608
  %v2611 = vmul.f32 1.0, %v2610
  %v2612 = vrcp.pop %v2609
  %v2613 = vmul.f32 1.0, %v2612
  %v2614 = vmul.f32 %v2597, %v2280
  %v2615 = vmul.f32 %v2599, %v2281
  %v2616 = vpack.c.bf16 %v2585, %v2584
  %v2617 = vpack.c.bf16 %v2615, %v2614
  %v2618 = vld [vmem:[%s3] sm:$0xff]
  %v2619 = vld [vmem:[%s3 + $0x8] sm:$0xff]
  %v2620 = vld [vmem:[%s3 + $0x10] sm:$0xff]
  %v2621 = vld [vmem:[%s3 + $0x18] sm:$0xff]
  %v2622 = vld [vmem:[%s3 + $0x20] sm:$0xff]
  %v2623 = vld [vmem:[%s3 + $0x28] sm:$0xff]
  %v2624 = vld [vmem:[%s3 + $0x30] sm:$0xff]
  %v2625 = vld [vmem:[%s3 + $0x38] sm:$0xff]
  %v2626 = vld [vmem:[%s3 + $0x40] sm:$0xff]
  %v2627 = vld [vmem:[%s3 + $0x48] sm:$0xff]
  %v2628 = vld [vmem:[%s3 + $0x50] sm:$0xff]
  %v2629 = vld [vmem:[%s3 + $0x58] sm:$0xff]
  %v2630 = vld [vmem:[%s3 + $0x60] sm:$0xff]
  %v2631 = vld [vmem:[%s3 + $0x68] sm:$0xff]
  %v2632 = vld [vmem:[%s3 + $0x70] sm:$0xff]
  %v2633 = vld [vmem:[%s3 + $0x78] sm:$0xff]
  %v2634 = vld [vmem:[%s3 + $0x80] sm:$0xff]
  %v2635 = vld [vmem:[%s3 + $0x88] sm:$0xff]
  %v2636 = vld [vmem:[%s3 + $0x90] sm:$0xff]
  %v2637 = vld [vmem:[%s3 + $0x98] sm:$0xff]
  %v2638 = vld [vmem:[%s3 + $0xa0] sm:$0xff]
  %v2639 = vld [vmem:[%s3 + $0xa8] sm:$0xff]
  %v2640 = vld [vmem:[%s3 + $0xb0] sm:$0xff]
  %v2641 = vld [vmem:[%s3 + $0xb8] sm:$0xff]
  %v2642 = vld [vmem:[%s3 + $0xc0] sm:$0xff]
  %v2643 = vld [vmem:[%s3 + $0xc8] sm:$0xff]
  %v2644 = vld [vmem:[%s3 + $0xd0] sm:$0xff]
  %v2645 = vld [vmem:[%s3 + $0xd8] sm:$0xff]
  %v2646 = vld [vmem:[%s3 + $0xe0] sm:$0xff]
  %v2647 = vld [vmem:[%s3 + $0xe8] sm:$0xff]
  %v2648 = vld [vmem:[%s3 + $0xf0] sm:$0xff]
  %v2649 = vld [vmem:[%s3 + $0xf8] sm:$0xff]
  %v2682 = vunpack.c.l.b16 %v2618
  %v2683 = vunpack.c.h.b16 %v2618
  %v2684 = vunpack.c.l.b16 %v2619
  %v2685 = vunpack.c.h.b16 %v2619
  %v2686 = vunpack.c.l.b16 %v2620
  %v2687 = vunpack.c.h.b16 %v2620
  %v2688 = vunpack.c.l.b16 %v2621
  %v2689 = vunpack.c.h.b16 %v2621
  %v2690 = vunpack.c.l.b16 %v2622
  %v2691 = vunpack.c.h.b16 %v2622
  %v2692 = vunpack.c.l.b16 %v2623
  %v2693 = vunpack.c.h.b16 %v2623
  %v2694 = vunpack.c.l.b16 %v2624
  %v2695 = vunpack.c.h.b16 %v2624
  %v2696 = vunpack.c.l.b16 %v2625
  %v2697 = vunpack.c.h.b16 %v2625
  %v2698 = vunpack.c.l.b16 %v2626
  %v2699 = vunpack.c.h.b16 %v2626
  %v2700 = vunpack.c.l.b16 %v2627
  %v2701 = vunpack.c.h.b16 %v2627
  %v2702 = vunpack.c.l.b16 %v2628
  %v2703 = vunpack.c.h.b16 %v2628
  %v2704 = vunpack.c.l.b16 %v2629
  %v2705 = vunpack.c.h.b16 %v2629
  %v2706 = vunpack.c.l.b16 %v2630
  %v2707 = vunpack.c.h.b16 %v2630
  %v2708 = vunpack.c.l.b16 %v2631
  %v2709 = vunpack.c.h.b16 %v2631
  %v2710 = vunpack.c.l.b16 %v2632
  %v2711 = vunpack.c.h.b16 %v2632
  %v2712 = vunpack.c.l.b16 %v2633
  %v2713 = vunpack.c.h.b16 %v2633
  %v2714 = vunpack.c.l.b16 %v2634
  %v2715 = vunpack.c.h.b16 %v2634
  %v2716 = vunpack.c.l.b16 %v2635
  %v2717 = vunpack.c.h.b16 %v2635
  %v2718 = vunpack.c.l.b16 %v2636
  %v2719 = vunpack.c.h.b16 %v2636
  %v2720 = vunpack.c.l.b16 %v2637
  %v2721 = vunpack.c.h.b16 %v2637
  %v2722 = vunpack.c.l.b16 %v2638
  %v2723 = vunpack.c.h.b16 %v2638
  %v2724 = vunpack.c.l.b16 %v2639
  %v2725 = vunpack.c.h.b16 %v2639
  %v2726 = vunpack.c.l.b16 %v2640
  %v2727 = vunpack.c.h.b16 %v2640
  %v2728 = vunpack.c.l.b16 %v2641
  %v2729 = vunpack.c.h.b16 %v2641
  %v2730 = vunpack.c.l.b16 %v2642
  %v2731 = vunpack.c.h.b16 %v2642
  %v2732 = vunpack.c.l.b16 %v2643
  %v2733 = vunpack.c.h.b16 %v2643
  %v2734 = vunpack.c.l.b16 %v2644
  %v2735 = vunpack.c.h.b16 %v2644
  %v2736 = vunpack.c.l.b16 %v2645
  %v2737 = vunpack.c.h.b16 %v2645
  %v2738 = vunpack.c.l.b16 %v2646
  %v2739 = vunpack.c.h.b16 %v2646
  %v2740 = vunpack.c.l.b16 %v2647
  %v2741 = vunpack.c.h.b16 %v2647
  %v2742 = vunpack.c.l.b16 %v2648
  %v2743 = vunpack.c.h.b16 %v2648
  %v2744 = vunpack.c.l.b16 %v2649
  %v2745 = vunpack.c.h.b16 %v2649
  %v2746 = vpack.c.b16 %v2684, %v2682
  %v2747 = vpack.c.b16 %v2685, %v2683
  %v2748 = vpack.c.b16 %v2688, %v2686
  %v2749 = vpack.c.b16 %v2689, %v2687
  %v2750 = vpack.c.b16 %v2692, %v2690
  %v2751 = vpack.c.b16 %v2693, %v2691
  %v2752 = vpack.c.b16 %v2696, %v2694
  %v2753 = vpack.c.b16 %v2697, %v2695
  %v2754 = vpack.c.b16 %v2700, %v2698
  %v2755 = vpack.c.b16 %v2701, %v2699
  %v2756 = vpack.c.b16 %v2704, %v2702
  %v2757 = vpack.c.b16 %v2705, %v2703
  %v2758 = vpack.c.b16 %v2708, %v2706
  %v2759 = vpack.c.b16 %v2709, %v2707
  %v2760 = vpack.c.b16 %v2712, %v2710
  %v2761 = vpack.c.b16 %v2713, %v2711
  %v2762 = vpack.c.b16 %v2716, %v2714
  %v2763 = vpack.c.b16 %v2717, %v2715
  %v2764 = vpack.c.b16 %v2720, %v2718
  %v2765 = vpack.c.b16 %v2721, %v2719
  %v2766 = vpack.c.b16 %v2724, %v2722
  %v2767 = vpack.c.b16 %v2725, %v2723
  %v2768 = vpack.c.b16 %v2728, %v2726
  %v2769 = vpack.c.b16 %v2729, %v2727
  %v2770 = vpack.c.b16 %v2732, %v2730
  %v2771 = vpack.c.b16 %v2733, %v2731
  %v2772 = vpack.c.b16 %v2736, %v2734
  %v2773 = vpack.c.b16 %v2737, %v2735
  %v2774 = vpack.c.b16 %v2740, %v2738
  %v2775 = vpack.c.b16 %v2741, %v2739
  %v2776 = vpack.c.b16 %v2744, %v2742
  %v2777 = vpack.c.b16 %v2745, %v2743
  %2810 = vmatprep.subr.bf16.mxu0 %v2747
  %2811 = vmatpush1.bf16.msra.mxu0 %v2746
  %2812 = vmatprep.subr.bf16.mxu0 %v2749
  %2813 = vmatpush1.bf16.msra.mxu0 %v2748
  %2814 = vmatprep.subr.bf16.mxu0 %v2751
  %2815 = vmatpush1.bf16.msra.mxu0 %v2750
  %2816 = vmatprep.subr.bf16.mxu0 %v2753
  %2817 = vmatpush1.bf16.msra.mxu0 %v2752
  %2818 = vmatprep.subr.bf16.mxu0 %v2755
  %2819 = vmatpush1.bf16.msra.mxu0 %v2754
  %2820 = vmatprep.subr.bf16.mxu0 %v2757
  %2821 = vmatpush1.bf16.msra.mxu0 %v2756
  %2822 = vmatprep.subr.bf16.mxu0 %v2759
  %2823 = vmatpush1.bf16.msra.mxu0 %v2758
  %2824 = vmatprep.subr.bf16.mxu0 %v2761
  %2825 = vmatpush1.bf16.msra.mxu0 %v2760
  %2826 = vmatprep.subr.bf16.mxu0 %v2763
  %2827 = vmatpush1.bf16.msra.mxu0 %v2762
  %2828 = vmatprep.subr.bf16.mxu0 %v2765
  %2829 = vmatpush1.bf16.msra.mxu0 %v2764
  %2830 = vmatprep.subr.bf16.mxu0 %v2767
  %2831 = vmatpush1.bf16.msra.mxu0 %v2766
  %2832 = vmatprep.subr.bf16.mxu0 %v2769
  %2833 = vmatpush1.bf16.msra.mxu0 %v2768
  %2834 = vmatprep.subr.bf16.mxu0 %v2771
  %2835 = vmatpush1.bf16.msra.mxu0 %v2770
  %2836 = vmatprep.subr.bf16.mxu0 %v2773
  %2837 = vmatpush1.bf16.msra.mxu0 %v2772
  %2838 = vmatprep.subr.bf16.mxu0 %v2775
  %2839 = vmatpush1.bf16.msra.mxu0 %v2774
  %2840 = vmatprep.subr.bf16.mxu0 %v2777
  %2841 = vmatpush1.bf16.msra.mxu0 %v2776
  %2842 = vmatprep.mubr.bf16.mxu0 %v2617
  %2843 = vmatmul.mubr.bf16.gmra.mrb[0].mxu0 %v2616
  %v2844 = vpop.f32.mrb[0].mxu0
  %v2845 = vadd.f32 0.0, %v2844
  %v2846 = vpop.f32.mrb[0].mxu0
  %v2847 = vadd.f32 0.0, %v2846
  %v2848 = vpop.f32.mrb[0].mxu0
  %v2849 = vadd.f32 0.0, %v2848
  %v2850 = vpop.f32.mrb[0].mxu0
  %v2851 = vadd.f32 0.0, %v2850
  %2852 = vdwg.mxu0
  %v2853 = vadd.f32 %v2533, %v2294
  %v2854 = vadd.f32 %v2537, %v2299
  %v2855 = vadd.f32 %v2853, %v2845
  %v2856 = vadd.f32 %v2854, %v2849
  %v2857 = vxor.u32 %v2855, 2147483648
  %v2858 = vxor.u32 %v2856, 2147483648
  %v2859 = vmul.f32 %v2857, 1.442695
  %v2860 = vpow.pop %v2859
  %v2861 = vmul.f32 %v2858, 1.442695
  %v2862 = vpow.pop %v2861
  %v2863 = vadd.f32 %v2860, 1.0
  %v2864 = vadd.f32 %v2862, 1.0
  %v2865 = vrcp.pop %v2863
  %v2866 = vmul.f32 1.0, %v2865
  %v2867 = vrcp.pop %v2864
  %v2868 = vmul.f32 1.0, %v2867
  %v2869 = vadd.f32 %v2847, %v2297
  %v2870 = vadd.f32 %v2851, %v2302
  %v2871 = vtanh.pop %v2869
  %v2872 = vtanh.pop %v2870
  %v2873 = vsub.f32 1.0, %v2611
  %v2874 = vsub.f32 1.0, %v2613
  %v2875 = vmul.f32 %v2866, %v2280
  %v2876 = vmul.f32 %v2868, %v2281
  %v2877 = vmul.f32 %v2873, %v2875
  %v2878 = vmul.f32 %v2874, %v2876
  %v2879 = vmul.f32 %v2611, %v2871
  %v2880 = vmul.f32 %v2613, %v2872
  %v2881 = vadd.f32 %v2877, %v2879
  %v2882 = vadd.f32 %v2878, %v2880
  %s2883 = scalar_lea.vmem %s5, 48
  %2884 = vst [vmem:[%s2883] sm:$0xff] %v2881
  %2885 = vst [vmem:[%s2883 + $0x8] sm:$0xff] %v2882
  %s2886 = smul.u32 4, 5
  %s2887 = smul.addr %s2886, 8
  %s2888 = scalar_lea.vmem [#allocation3], %s2887
  %v2889 = vld [vmem:[%s2888] sm:$0xff]
  %v2890 = vld [vmem:[%s2888 + $0x8] sm:$0xff]
  %v2891 = vld [vmem:[%s2888 + $0x10] sm:$0xff]
  %v2892 = vld [vmem:[%s2888 + $0x18] sm:$0xff]
  %v2893 = vld [vmem:[%s2888 + $0x20] sm:$0xff]
  %v2894 = vunpack.c.l.bf16 %v2889
  %v2895 = vunpack.c.l.bf16 %v2890
  %v2896 = vunpack.c.l.bf16 %v2891
  %v2897 = vunpack.c.l.bf16 %v2892
  %v2898 = vunpack.c.l.bf16 %v2893
  %v2899 = vunpack.c.h.bf16 %v2889
  %v2900 = vunpack.c.h.bf16 %v2890
  %v2901 = vunpack.c.h.bf16 %v2891
  %v2902 = vunpack.c.h.bf16 %v2892
  %v2903 = vunpack.c.h.bf16 %v2893
  %v2904 = vpack.c.bf16 %v2882, %v2881
  %v2905 = vld [vmem:[%s2] sm:$0xff]
  %v2906 = vld [vmem:[%s2 + $0x8] sm:$0xff]
  %v2907 = vld [vmem:[%s2 + $0x10] sm:$0xff]
  %v2908 = vld [vmem:[%s2 + $0x18] sm:$0xff]
  %v2909 = vld [vmem:[%s2 + $0x20] sm:$0xff]
  %v2910 = vld [vmem:[%s2 + $0x28] sm:$0xff]
  %v2911 = vld [vmem:[%s2 + $0x30] sm:$0xff]
  %v2912 = vld [vmem:[%s2 + $0x38] sm:$0xff]
  %v2913 = vld [vmem:[%s2 + $0x40] sm:$0xff]
  %v2914 = vld [vmem:[%s2 + $0x48] sm:$0xff]
  %v2915 = vld [vmem:[%s2 + $0x50] sm:$0xff]
  %v2916 = vld [vmem:[%s2 + $0x58] sm:$0xff]
  %v2917 = vld [vmem:[%s2 + $0x60] sm:$0xff]
  %v2918 = vld [vmem:[%s2 + $0x68] sm:$0xff]
  %v2919 = vld [vmem:[%s2 + $0x70] sm:$0xff]
  %v2920 = vld [vmem:[%s2 + $0x78] sm:$0xff]
  %v2921 = vld [vmem:[%s2 + $0x80] sm:$0xff]
  %v2922 = vld [vmem:[%s2 + $0x88] sm:$0xff]
  %v2923 = vld [vmem:[%s2 + $0x90] sm:$0xff]
  %v2924 = vld [vmem:[%s2 + $0x98] sm:$0xff]
  %v2925 = vld [vmem:[%s2 + $0xa0] sm:$0xff]
  %v2926 = vld [vmem:[%s2 + $0xa8] sm:$0xff]
  %v2927 = vld [vmem:[%s2 + $0xb0] sm:$0xff]
  %v2928 = vld [vmem:[%s2 + $0xb8] sm:$0xff]
  %v2929 = vld [vmem:[%s2 + $0xc0] sm:$0xff]
  %v2930 = vld [vmem:[%s2 + $0xc8] sm:$0xff]
  %v2931 = vld [vmem:[%s2 + $0xd0] sm:$0xff]
  %v2932 = vld [vmem:[%s2 + $0xd8] sm:$0xff]
  %v2933 = vld [vmem:[%s2 + $0xe0] sm:$0xff]
  %v2934 = vld [vmem:[%s2 + $0xe8] sm:$0xff]
  %v2935 = vld [vmem:[%s2 + $0xf0] sm:$0xff]
  %v2936 = vld [vmem:[%s2 + $0xf8] sm:$0xff]
  %v2969 = vunpack.c.l.b16 %v2905
  %v2970 = vunpack.c.h.b16 %v2905
  %v2971 = vunpack.c.l.b16 %v2906
  %v2972 = vunpack.c.h.b16 %v2906
  %v2973 = vunpack.c.l.b16 %v2907
  %v2974 = vunpack.c.h.b16 %v2907
  %v2975 = vunpack.c.l.b16 %v2908
  %v2976 = vunpack.c.h.b16 %v2908
  %v2977 = vunpack.c.l.b16 %v2909
  %v2978 = vunpack.c.h.b16 %v2909
  %v2979 = vunpack.c.l.b16 %v2910
  %v2980 = vunpack.c.h.b16 %v2910
  %v2981 = vunpack.c.l.b16 %v2911
  %v2982 = vunpack.c.h.b16 %v2911
  %v2983 = vunpack.c.l.b16 %v2912
  %v2984 = vunpack.c.h.b16 %v2912
  %v2985 = vunpack.c.l.b16 %v2913
  %v2986 = vunpack.c.h.b16 %v2913
  %v2987 = vunpack.c.l.b16 %v2914
  %v2988 = vunpack.c.h.b16 %v2914
  %v2989 = vunpack.c.l.b16 %v2915
  %v2990 = vunpack.c.h.b16 %v2915
  %v2991 = vunpack.c.l.b16 %v2916
  %v2992 = vunpack.c.h.b16 %v2916
  %v2993 = vunpack.c.l.b16 %v2917
  %v2994 = vunpack.c.h.b16 %v2917
  %v2995 = vunpack.c.l.b16 %v2918
  %v2996 = vunpack.c.h.b16 %v2918
  %v2997 = vunpack.c.l.b16 %v2919
  %v2998 = vunpack.c.h.b16 %v2919
  %v2999 = vunpack.c.l.b16 %v2920
  %v3000 = vunpack.c.h.b16 %v2920
  %v3001 = vunpack.c.l.b16 %v2921
  %v3002 = vunpack.c.h.b16 %v2921
  %v3003 = vunpack.c.l.b16 %v2922
  %v3004 = vunpack.c.h.b16 %v2922
  %v3005 = vunpack.c.l.b16 %v2923
  %v3006 = vunpack.c.h.b16 %v2923
  %v3007 = vunpack.c.l.b16 %v2924
  %v3008 = vunpack.c.h.b16 %v2924
  %v3009 = vunpack.c.l.b16 %v2925
  %v3010 = vunpack.c.h.b16 %v2925
  %v3011 = vunpack.c.l.b16 %v2926
  %v3012 = vunpack.c.h.b16 %v2926
  %v3013 = vunpack.c.l.b16 %v2927
  %v3014 = vunpack.c.h.b16 %v2927
  %v3015 = vunpack.c.l.b16 %v2928
  %v3016 = vunpack.c.h.b16 %v2928
  %v3017 = vunpack.c.l.b16 %v2929
  %v3018 = vunpack.c.h.b16 %v2929
  %v3019 = vunpack.c.l.b16 %v2930
  %v3020 = vunpack.c.h.b16 %v2930
  %v3021 = vunpack.c.l.b16 %v2931
  %v3022 = vunpack.c.h.b16 %v2931
  %v3023 = vunpack.c.l.b16 %v2932
  %v3024 = vunpack.c.h.b16 %v2932
  %v3025 = vunpack.c.l.b16 %v2933
  %v3026 = vunpack.c.h.b16 %v2933
  %v3027 = vunpack.c.l.b16 %v2934
  %v3028 = vunpack.c.h.b16 %v2934
  %v3029 = vunpack.c.l.b16 %v2935
  %v3030 = vunpack.c.h.b16 %v2935
  %v3031 = vunpack.c.l.b16 %v2936
  %v3032 = vunpack.c.h.b16 %v2936
  %v3033 = vpack.c.b16 %v2973, %v2969
  %v3034 = vpack.c.b16 %v2974, %v2970
  %v3035 = vpack.c.b16 %v2975, %v2971
  %v3036 = vpack.c.b16 %v2976, %v2972
  %v3037 = vpack.c.b16 %v2981, %v2977
  %v3038 = vpack.c.b16 %v2982, %v2978
  %v3039 = vpack.c.b16 %v2983, %v2979
  %v3040 = vpack.c.b16 %v2984, %v2980
  %v3041 = vpack.c.b16 %v2989, %v2985
  %v3042 = vpack.c.b16 %v2990, %v2986
  %v3043 = vpack.c.b16 %v2991, %v2987
  %v3044 = vpack.c.b16 %v2992, %v2988
  %v3045 = vpack.c.b16 %v2997, %v2993
  %v3046 = vpack.c.b16 %v2998, %v2994
  %v3047 = vpack.c.b16 %v2999, %v2995
  %v3048 = vpack.c.b16 %v3000, %v2996
  %v3049 = vpack.c.b16 %v3005, %v3001
  %v3050 = vpack.c.b16 %v3006, %v3002
  %v3051 = vpack.c.b16 %v3007, %v3003
  %v3052 = vpack.c.b16 %v3008, %v3004
  %v3053 = vpack.c.b16 %v3013, %v3009
  %v3054 = vpack.c.b16 %v3014, %v3010
  %v3055 = vpack.c.b16 %v3015, %v3011
  %v3056 = vpack.c.b16 %v3016, %v3012
  %v3057 = vpack.c.b16 %v3021, %v3017
  %v3058 = vpack.c.b16 %v3022, %v3018
  %v3059 = vpack.c.b16 %v3023, %v3019
  %v3060 = vpack.c.b16 %v3024, %v3020
  %v3061 = vpack.c.b16 %v3029, %v3025
  %v3062 = vpack.c.b16 %v3030, %v3026
  %v3063 = vpack.c.b16 %v3031, %v3027
  %v3064 = vpack.c.b16 %v3032, %v3028
  %3097 = vmatprep.subr.bf16.mxu0 %v3034
  %3098 = vmatpush1.bf16.msra.mxu0 %v3033
  %3099 = vmatprep.subr.bf16.mxu0 %v3038
  %3100 = vmatpush1.bf16.msra.mxu0 %v3037
  %3101 = vmatprep.subr.bf16.mxu0 %v3042
  %3102 = vmatpush1.bf16.msra.mxu0 %v3041
  %3103 = vmatprep.subr.bf16.mxu0 %v3046
  %3104 = vmatpush1.bf16.msra.mxu0 %v3045
  %3105 = vmatprep.subr.bf16.mxu0 %v3050
  %3106 = vmatpush1.bf16.msra.mxu0 %v3049
  %3107 = vmatprep.subr.bf16.mxu0 %v3054
  %3108 = vmatpush1.bf16.msra.mxu0 %v3053
  %3109 = vmatprep.subr.bf16.mxu0 %v3058
  %3110 = vmatpush1.bf16.msra.mxu0 %v3057
  %3111 = vmatprep.subr.bf16.mxu0 %v3062
  %3112 = vmatpush1.bf16.msra.mxu0 %v3061
  %3113 = vmatprep.subr.bf16.mxu0 0
  %3114 = vmatpush1.bf16.msra.mxu0 0
  %3115 = vmatprep.subr.bf16.mxu0 0
  %3116 = vmatpush1.bf16.msra.mxu0 0
  %3117 = vmatprep.subr.bf16.mxu0 0
  %3118 = vmatpush1.bf16.msra.mxu0 0
  %3119 = vmatprep.subr.bf16.mxu0 0
  %3120 = vmatpush1.bf16.msra.mxu0 0
  %3121 = vmatprep.subr.bf16.mxu0 0
  %3122 = vmatpush1.bf16.msra.mxu0 0
  %3123 = vmatprep.subr.bf16.mxu0 0
  %3124 = vmatpush1.bf16.msra.mxu0 0
  %3125 = vmatprep.subr.bf16.mxu0 0
  %3126 = vmatpush1.bf16.msra.mxu0 0
  %3127 = vmatprep.subr.bf16.mxu0 0
  %3128 = vmatpush1.bf16.msra.mxu0 0
  %3129 = vmatprep.mubr.bf16.mxu0 0
  %3130 = vmatmul.mubr.bf16.gmra.mrb[0].mxu0 %v2904
  %v3131 = vpop.f32.mrb[0].mxu0
  %v3132 = vadd.f32 0.0, %v3131
  %v3133 = vpop.f32.mrb[0].mxu0
  %v3134 = vadd.f32 0.0, %v3133
  %v3135 = vpop.f32.mrb[0].mxu0
  %v3136 = vadd.f32 0.0, %v3135
  %v3137 = vpop.f32.mrb[0].mxu0
  %v3138 = vadd.f32 0.0, %v3137
  %3139 = vdwg.mxu0
  %3140 = vmatprep.subr.bf16.mxu0 %v3036
  %3141 = vmatpush1.bf16.msra.mxu0 %v3035
  %3142 = vmatprep.subr.bf16.mxu0 %v3040
  %3143 = vmatpush1.bf16.msra.mxu0 %v3039
  %3144 = vmatprep.subr.bf16.mxu0 %v3044
  %3145 = vmatpush1.bf16.msra.mxu0 %v3043
  %3146 = vmatprep.subr.bf16.mxu0 %v3048
  %3147 = vmatpush1.bf16.msra.mxu0 %v3047
  %3148 = vmatprep.subr.bf16.mxu0 %v3052
  %3149 = vmatpush1.bf16.msra.mxu0 %v3051
  %3150 = vmatprep.subr.bf16.mxu0 %v3056
  %3151 = vmatpush1.bf16.msra.mxu0 %v3055
  %3152 = vmatprep.subr.bf16.mxu0 %v3060
  %3153 = vmatpush1.bf16.msra.mxu0 %v3059
  %3154 = vmatprep.subr.bf16.mxu0 %v3064
  %3155 = vmatpush1.bf16.msra.mxu0 %v3063
  %3156 = vmatprep.subr.bf16.mxu0 0
  %3157 = vmatpush1.bf16.msra.mxu0 0
  %3158 = vmatprep.subr.bf16.mxu0 0
  %3159 = vmatpush1.bf16.msra.mxu0 0
  %3160 = vmatprep.subr.bf16.mxu0 0
  %3161 = vmatpush1.bf16.msra.mxu0 0
  %3162 = vmatprep.subr.bf16.mxu0 0
  %3163 = vmatpush1.bf16.msra.mxu0 0
  %3164 = vmatprep.subr.bf16.mxu0 0
  %3165 = vmatpush1.bf16.msra.mxu0 0
  %3166 = vmatprep.subr.bf16.mxu0 0
  %3167 = vmatpush1.bf16.msra.mxu0 0
  %3168 = vmatprep.subr.bf16.mxu0 0
  %3169 = vmatpush1.bf16.msra.mxu0 0
  %3170 = vmatprep.subr.bf16.mxu0 0
  %3171 = vmatpush1.bf16.msra.mxu0 0
  %3172 = vmatprep.mubr.bf16.mxu0 0
  %3173 = vmatmul.mubr.bf16.gmra.mrb[0].mxu0 %v2904
  %v3174 = vpop.f32.mrb[0].mxu0
  %v3175 = vadd.f32 0.0, %v3174
  %v3176 = vpop.f32.mrb[0].mxu0
  %v3177 = vadd.f32 0.0, %v3176
  %v3178 = vpop.f32.mrb[0].mxu0
  %v3179 = vadd.f32 0.0, %v3178
  %v3180 = vpop.f32.mrb[0].mxu0
  %v3181 = vadd.f32 0.0, %v3180
  %3182 = vdwg.mxu0
  %v3183 = vadd.f32 %v3132, %v2894
  %v3184 = vadd.f32 %v3136, %v2899
  %v3185 = vtanh.pop %v3183
  %v3186 = vtanh.pop %v3184
  %v3187 = vadd.f32 %v3175, %v2896
  %v3188 = vadd.f32 %v3179, %v2901
  %v3189 = vxor.u32 %v3187, 2147483648
  %v3190 = vxor.u32 %v3188, 2147483648
  %v3191 = vmul.f32 %v3189, 1.442695
  %v3192 = vpow.pop %v3191
  %v3193 = vmul.f32 %v3190, 1.442695
  %v3194 = vpow.pop %v3193
  %v3195 = vadd.f32 %v3192, 1.0
  %v3196 = vadd.f32 %v3194, 1.0
  %v3197 = vrcp.pop %v3195
  %v3198 = vmul.f32 1.0, %v3197
  %v3199 = vrcp.pop %v3196
  %v3200 = vmul.f32 1.0, %v3199
  %v3201 = vadd.f32 %v3177, %v2897
  %v3202 = vadd.f32 %v3181, %v2902
  %v3203 = vxor.u32 %v3201, 2147483648
  %v3204 = vxor.u32 %v3202, 2147483648
  %v3205 = vmul.f32 %v3203, 1.442695
  %v3206 = vpow.pop %v3205
  %v3207 = vmul.f32 %v3204, 1.442695
  %v3208 = vpow.pop %v3207
  %v3209 = vadd.f32 %v3206, 1.0
  %v3210 = vadd.f32 %v3208, 1.0
  %v3211 = vrcp.pop %v3209
  %v3212 = vmul.f32 1.0, %v3211
  %v3213 = vrcp.pop %v3210
  %v3214 = vmul.f32 1.0, %v3213
  %v3215 = vmul.f32 %v3198, %v2881
  %v3216 = vmul.f32 %v3200, %v2882
  %v3217 = vpack.c.bf16 %v3186, %v3185
  %v3218 = vpack.c.bf16 %v3216, %v3215
  %v3219 = vld [vmem:[%s3] sm:$0xff]
  %v3220 = vld [vmem:[%s3 + $0x8] sm:$0xff]
  %v3221 = vld [vmem:[%s3 + $0x10] sm:$0xff]
  %v3222 = vld [vmem:[%s3 + $0x18] sm:$0xff]
  %v3223 = vld [vmem:[%s3 + $0x20] sm:$0xff]
  %v3224 = vld [vmem:[%s3 + $0x28] sm:$0xff]
  %v3225 = vld [vmem:[%s3 + $0x30] sm:$0xff]
  %v3226 = vld [vmem:[%s3 + $0x38] sm:$0xff]
  %v3227 = vld [vmem:[%s3 + $0x40] sm:$0xff]
  %v3228 = vld [vmem:[%s3 + $0x48] sm:$0xff]
  %v3229 = vld [vmem:[%s3 + $0x50] sm:$0xff]
  %v3230 = vld [vmem:[%s3 + $0x58] sm:$0xff]
  %v3231 = vld [vmem:[%s3 + $0x60] sm:$0xff]
  %v3232 = vld [vmem:[%s3 + $0x68] sm:$0xff]
  %v3233 = vld [vmem:[%s3 + $0x70] sm:$0xff]
  %v3234 = vld [vmem:[%s3 + $0x78] sm:$0xff]
  %v3235 = vld [vmem:[%s3 + $0x80] sm:$0xff]
  %v3236 = vld [vmem:[%s3 + $0x88] sm:$0xff]
  %v3237 = vld [vmem:[%s3 + $0x90] sm:$0xff]
  %v3238 = vld [vmem:[%s3 + $0x98] sm:$0xff]
  %v3239 = vld [vmem:[%s3 + $0xa0] sm:$0xff]
  %v3240 = vld [vmem:[%s3 + $0xa8] sm:$0xff]
  %v3241 = vld [vmem:[%s3 + $0xb0] sm:$0xff]
  %v3242 = vld [vmem:[%s3 + $0xb8] sm:$0xff]
  %v3243 = vld [vmem:[%s3 + $0xc0] sm:$0xff]
  %v3244 = vld [vmem:[%s3 + $0xc8] sm:$0xff]
  %v3245 = vld [vmem:[%s3 + $0xd0] sm:$0xff]
  %v3246 = vld [vmem:[%s3 + $0xd8] sm:$0xff]
  %v3247 = vld [vmem:[%s3 + $0xe0] sm:$0xff]
  %v3248 = vld [vmem:[%s3 + $0xe8] sm:$0xff]
  %v3249 = vld [vmem:[%s3 + $0xf0] sm:$0xff]
  %v3250 = vld [vmem:[%s3 + $0xf8] sm:$0xff]
  %v3283 = vunpack.c.l.b16 %v3219
  %v3284 = vunpack.c.h.b16 %v3219
  %v3285 = vunpack.c.l.b16 %v3220
  %v3286 = vunpack.c.h.b16 %v3220
  %v3287 = vunpack.c.l.b16 %v3221
  %v3288 = vunpack.c.h.b16 %v3221
  %v3289 = vunpack.c.l.b16 %v3222
  %v3290 = vunpack.c.h.b16 %v3222
  %v3291 = vunpack.c.l.b16 %v3223
  %v3292 = vunpack.c.h.b16 %v3223
  %v3293 = vunpack.c.l.b16 %v3224
  %v3294 = vunpack.c.h.b16 %v3224
  %v3295 = vunpack.c.l.b16 %v3225
  %v3296 = vunpack.c.h.b16 %v3225
  %v3297 = vunpack.c.l.b16 %v3226
  %v3298 = vunpack.c.h.b16 %v3226
  %v3299 = vunpack.c.l.b16 %v3227
  %v3300 = vunpack.c.h.b16 %v3227
  %v3301 = vunpack.c.l.b16 %v3228
  %v3302 = vunpack.c.h.b16 %v3228
  %v3303 = vunpack.c.l.b16 %v3229
  %v3304 = vunpack.c.h.b16 %v3229
  %v3305 = vunpack.c.l.b16 %v3230
  %v3306 = vunpack.c.h.b16 %v3230
  %v3307 = vunpack.c.l.b16 %v3231
  %v3308 = vunpack.c.h.b16 %v3231
  %v3309 = vunpack.c.l.b16 %v3232
  %v3310 = vunpack.c.h.b16 %v3232
  %v3311 = vunpack.c.l.b16 %v3233
  %v3312 = vunpack.c.h.b16 %v3233
  %v3313 = vunpack.c.l.b16 %v3234
  %v3314 = vunpack.c.h.b16 %v3234
  %v3315 = vunpack.c.l.b16 %v3235
  %v3316 = vunpack.c.h.b16 %v3235
  %v3317 = vunpack.c.l.b16 %v3236
  %v3318 = vunpack.c.h.b16 %v3236
  %v3319 = vunpack.c.l.b16 %v3237
  %v3320 = vunpack.c.h.b16 %v3237
  %v3321 = vunpack.c.l.b16 %v3238
  %v3322 = vunpack.c.h.b16 %v3238
  %v3323 = vunpack.c.l.b16 %v3239
  %v3324 = vunpack.c.h.b16 %v3239
  %v3325 = vunpack.c.l.b16 %v3240
  %v3326 = vunpack.c.h.b16 %v3240
  %v3327 = vunpack.c.l.b16 %v3241
  %v3328 = vunpack.c.h.b16 %v3241
  %v3329 = vunpack.c.l.b16 %v3242
  %v3330 = vunpack.c.h.b16 %v3242
  %v3331 = vunpack.c.l.b16 %v3243
  %v3332 = vunpack.c.h.b16 %v3243
  %v3333 = vunpack.c.l.b16 %v3244
  %v3334 = vunpack.c.h.b16 %v3244
  %v3335 = vunpack.c.l.b16 %v3245
  %v3336 = vunpack.c.h.b16 %v3245
  %v3337 = vunpack.c.l.b16 %v3246
  %v3338 = vunpack.c.h.b16 %v3246
  %v3339 = vunpack.c.l.b16 %v3247
  %v3340 = vunpack.c.h.b16 %v3247
  %v3341 = vunpack.c.l.b16 %v3248
  %v3342 = vunpack.c.h.b16 %v3248
  %v3343 = vunpack.c.l.b16 %v3249
  %v3344 = vunpack.c.h.b16 %v3249
  %v3345 = vunpack.c.l.b16 %v3250
  %v3346 = vunpack.c.h.b16 %v3250
  %v3347 = vpack.c.b16 %v3285, %v3283
  %v3348 = vpack.c.b16 %v3286, %v3284
  %v3349 = vpack.c.b16 %v3289, %v3287
  %v3350 = vpack.c.b16 %v3290, %v3288
  %v3351 = vpack.c.b16 %v3293, %v3291
  %v3352 = vpack.c.b16 %v3294, %v3292
  %v3353 = vpack.c.b16 %v3297, %v3295
  %v3354 = vpack.c.b16 %v3298, %v3296
  %v3355 = vpack.c.b16 %v3301, %v3299
  %v3356 = vpack.c.b16 %v3302, %v3300
  %v3357 = vpack.c.b16 %v3305, %v3303
  %v3358 = vpack.c.b16 %v3306, %v3304
  %v3359 = vpack.c.b16 %v3309, %v3307
  %v3360 = vpack.c.b16 %v3310, %v3308
  %v3361 = vpack.c.b16 %v3313, %v3311
  %v3362 = vpack.c.b16 %v3314, %v3312
  %v3363 = vpack.c.b16 %v3317, %v3315
  %v3364 = vpack.c.b16 %v3318, %v3316
  %v3365 = vpack.c.b16 %v3321, %v3319
  %v3366 = vpack.c.b16 %v3322, %v3320
  %v3367 = vpack.c.b16 %v3325, %v3323
  %v3368 = vpack.c.b16 %v3326, %v3324
  %v3369 = vpack.c.b16 %v3329, %v3327
  %v3370 = vpack.c.b16 %v3330, %v3328
  %v3371 = vpack.c.b16 %v3333, %v3331
  %v3372 = vpack.c.b16 %v3334, %v3332
  %v3373 = vpack.c.b16 %v3337, %v3335
  %v3374 = vpack.c.b16 %v3338, %v3336
  %v3375 = vpack.c.b16 %v3341, %v3339
  %v3376 = vpack.c.b16 %v3342, %v3340
  %v3377 = vpack.c.b16 %v3345, %v3343
  %v3378 = vpack.c.b16 %v3346, %v3344
  %3411 = vmatprep.subr.bf16.mxu0 %v3348
  %3412 = vmatpush1.bf16.msra.mxu0 %v3347
  %3413 = vmatprep.subr.bf16.mxu0 %v3350
  %3414 = vmatpush1.bf16.msra.mxu0 %v3349
  %3415 = vmatprep.subr.bf16.mxu0 %v3352
  %3416 = vmatpush1.bf16.msra.mxu0 %v3351
  %3417 = vmatprep.subr.bf16.mxu0 %v3354
  %3418 = vmatpush1.bf16.msra.mxu0 %v3353
  %3419 = vmatprep.subr.bf16.mxu0 %v3356
  %3420 = vmatpush1.bf16.msra.mxu0 %v3355
  %3421 = vmatprep.subr.bf16.mxu0 %v3358
  %3422 = vmatpush1.bf16.msra.mxu0 %v3357
  %3423 = vmatprep.subr.bf16.mxu0 %v3360
  %3424 = vmatpush1.bf16.msra.mxu0 %v3359
  %3425 = vmatprep.subr.bf16.mxu0 %v3362
  %3426 = vmatpush1.bf16.msra.mxu0 %v3361
  %3427 = vmatprep.subr.bf16.mxu0 %v3364
  %3428 = vmatpush1.bf16.msra.mxu0 %v3363
  %3429 = vmatprep.subr.bf16.mxu0 %v3366
  %3430 = vmatpush1.bf16.msra.mxu0 %v3365
  %3431 = vmatprep.subr.bf16.mxu0 %v3368
  %3432 = vmatpush1.bf16.msra.mxu0 %v3367
  %3433 = vmatprep.subr.bf16.mxu0 %v3370
  %3434 = vmatpush1.bf16.msra.mxu0 %v3369
  %3435 = vmatprep.subr.bf16.mxu0 %v3372
  %3436 = vmatpush1.bf16.msra.mxu0 %v3371
  %3437 = vmatprep.subr.bf16.mxu0 %v3374
  %3438 = vmatpush1.bf16.msra.mxu0 %v3373
  %3439 = vmatprep.subr.bf16.mxu0 %v3376
  %3440 = vmatpush1.bf16.msra.mxu0 %v3375
  %3441 = vmatprep.subr.bf16.mxu0 %v3378
  %3442 = vmatpush1.bf16.msra.mxu0 %v3377
  %3443 = vmatprep.mubr.bf16.mxu0 %v3218
  %3444 = vmatmul.mubr.bf16.gmra.mrb[0].mxu0 %v3217
  %v3445 = vpop.f32.mrb[0].mxu0
  %v3446 = vadd.f32 0.0, %v3445
  %v3447 = vpop.f32.mrb[0].mxu0
  %v3448 = vadd.f32 0.0, %v3447
  %v3449 = vpop.f32.mrb[0].mxu0
  %v3450 = vadd.f32 0.0, %v3449
  %v3451 = vpop.f32.mrb[0].mxu0
  %v3452 = vadd.f32 0.0, %v3451
  %3453 = vdwg.mxu0
  %v3454 = vadd.f32 %v3134, %v2895
  %v3455 = vadd.f32 %v3138, %v2900
  %v3456 = vadd.f32 %v3454, %v3446
  %v3457 = vadd.f32 %v3455, %v3450
  %v3458 = vxor.u32 %v3456, 2147483648
  %v3459 = vxor.u32 %v3457, 2147483648
  %v3460 = vmul.f32 %v3458, 1.442695
  %v3461 = vpow.pop %v3460
  %v3462 = vmul.f32 %v3459, 1.442695
  %v3463 = vpow.pop %v3462
  %v3464 = vadd.f32 %v3461, 1.0
  %v3465 = vadd.f32 %v3463, 1.0
  %v3466 = vrcp.pop %v3464
  %v3467 = vmul.f32 1.0, %v3466
  %v3468 = vrcp.pop %v3465
  %v3469 = vmul.f32 1.0, %v3468
  %v3470 = vadd.f32 %v3448, %v2898
  %v3471 = vadd.f32 %v3452, %v2903
  %v3472 = vtanh.pop %v3470
  %v3473 = vtanh.pop %v3471
  %v3474 = vsub.f32 1.0, %v3212
  %v3475 = vsub.f32 1.0, %v3214
  %v3476 = vmul.f32 %v3467, %v2881
  %v3477 = vmul.f32 %v3469, %v2882
  %v3478 = vmul.f32 %v3474, %v3476
  %v3479 = vmul.f32 %v3475, %v3477
  %v3480 = vmul.f32 %v3212, %v3472
  %v3481 = vmul.f32 %v3214, %v3473
  %v3482 = vadd.f32 %v3478, %v3480
  %v3483 = vadd.f32 %v3479, %v3481
  %s3484 = scalar_lea.vmem %s5, 64
  %3485 = vst [vmem:[%s3484] sm:$0xff] %v3482
  %3486 = vst [vmem:[%s3484 + $0x8] sm:$0xff] %v3483
  %s3487 = smul.u32 5, 5
  %s3488 = smul.addr %s3487, 8
  %s3489 = scalar_lea.vmem [#allocation3], %s3488
  %v3490 = vld [vmem:[%s3489] sm:$0xff]
  %v3491 = vld [vmem:[%s3489 + $0x8] sm:$0xff]
  %v3492 = vld [vmem:[%s3489 + $0x10] sm:$0xff]
  %v3493 = vld [vmem:[%s3489 + $0x18] sm:$0xff]
  %v3494 = vld [vmem:[%s3489 + $0x20] sm:$0xff]
  %v3495 = vunpack.c.l.bf16 %v3490
  %v3496 = vunpack.c.l.bf16 %v3491
  %v3497 = vunpack.c.l.bf16 %v3492
  %v3498 = vunpack.c.l.bf16 %v3493
  %v3499 = vunpack.c.l.bf16 %v3494
  %v3500 = vunpack.c.h.bf16 %v3490
  %v3501 = vunpack.c.h.bf16 %v3491
  %v3502 = vunpack.c.h.bf16 %v3492
  %v3503 = vunpack.c.h.bf16 %v3493
  %v3504 = vunpack.c.h.bf16 %v3494
  %v3505 = vpack.c.bf16 %v3483, %v3482
  %v3506 = vld [vmem:[%s2] sm:$0xff]
  %v3507 = vld [vmem:[%s2 + $0x8] sm:$0xff]
  %v3508 = vld [vmem:[%s2 + $0x10] sm:$0xff]
  %v3509 = vld [vmem:[%s2 + $0x18] sm:$0xff]
  %v3510 = vld [vmem:[%s2 + $0x20] sm:$0xff]
  %v3511 = vld [vmem:[%s2 + $0x28] sm:$0xff]
  %v3512 = vld [vmem:[%s2 + $0x30] sm:$0xff]
  %v3513 = vld [vmem:[%s2 + $0x38] sm:$0xff]
  %v3514 = vld [vmem:[%s2 + $0x40] sm:$0xff]
  %v3515 = vld [vmem:[%s2 + $0x48] sm:$0xff]
  %v3516 = vld [vmem:[%s2 + $0x50] sm:$0xff]
  %v3517 = vld [vmem:[%s2 + $0x58] sm:$0xff]
  %v3518 = vld [vmem:[%s2 + $0x60] sm:$0xff]
  %v3519 = vld [vmem:[%s2 + $0x68] sm:$0xff]
  %v3520 = vld [vmem:[%s2 + $0x70] sm:$0xff]
  %v3521 = vld [vmem:[%s2 + $0x78] sm:$0xff]
  %v3522 = vld [vmem:[%s2 + $0x80] sm:$0xff]
  %v3523 = vld [vmem:[%s2 + $0x88] sm:$0xff]
  %v3524 = vld [vmem:[%s2 + $0x90] sm:$0xff]
  %v3525 = vld [vmem:[%s2 + $0x98] sm:$0xff]
  %v3526 = vld [vmem:[%s2 + $0xa0] sm:$0xff]
  %v3527 = vld [vmem:[%s2 + $0xa8] sm:$0xff]
  %v3528 = vld [vmem:[%s2 + $0xb0] sm:$0xff]
  %v3529 = vld [vmem:[%s2 + $0xb8] sm:$0xff]
  %v3530 = vld [vmem:[%s2 + $0xc0] sm:$0xff]
  %v3531 = vld [vmem:[%s2 + $0xc8] sm:$0xff]
  %v3532 = vld [vmem:[%s2 + $0xd0] sm:$0xff]
  %v3533 = vld [vmem:[%s2 + $0xd8] sm:$0xff]
  %v3534 = vld [vmem:[%s2 + $0xe0] sm:$0xff]
  %v3535 = vld [vmem:[%s2 + $0xe8] sm:$0xff]
  %v3536 = vld [vmem:[%s2 + $0xf0] sm:$0xff]
  %v3537 = vld [vmem:[%s2 + $0xf8] sm:$0xff]
  %v3570 = vunpack.c.l.b16 %v3506
  %v3571 = vunpack.c.h.b16 %v3506
  %v3572 = vunpack.c.l.b16 %v3507
  %v3573 = vunpack.c.h.b16 %v3507
  %v3574 = vunpack.c.l.b16 %v3508
  %v3575 = vunpack.c.h.b16 %v3508
  %v3576 = vunpack.c.l.b16 %v3509
  %v3577 = vunpack.c.h.b16 %v3509
  %v3578 = vunpack.c.l.b16 %v3510
  %v3579 = vunpack.c.h.b16 %v3510
  %v3580 = vunpack.c.l.b16 %v3511
  %v3581 = vunpack.c.h.b16 %v3511
  %v3582 = vunpack.c.l.b16 %v3512
  %v3583 = vunpack.c.h.b16 %v3512
  %v3584 = vunpack.c.l.b16 %v3513
  %v3585 = vunpack.c.h.b16 %v3513
  %v3586 = vunpack.c.l.b16 %v3514
  %v3587 = vunpack.c.h.b16 %v3514
  %v3588 = vunpack.c.l.b16 %v3515
  %v3589 = vunpack.c.h.b16 %v3515
  %v3590 = vunpack.c.l.b16 %v3516
  %v3591 = vunpack.c.h.b16 %v3516
  %v3592 = vunpack.c.l.b16 %v3517
  %v3593 = vunpack.c.h.b16 %v3517
  %v3594 = vunpack.c.l.b16 %v3518
  %v3595 = vunpack.c.h.b16 %v3518
  %v3596 = vunpack.c.l.b16 %v3519
  %v3597 = vunpack.c.h.b16 %v3519
  %v3598 = vunpack.c.l.b16 %v3520
  %v3599 = vunpack.c.h.b16 %v3520
  %v3600 = vunpack.c.l.b16 %v3521
  %v3601 = vunpack.c.h.b16 %v3521
  %v3602 = vunpack.c.l.b16 %v3522
  %v3603 = vunpack.c.h.b16 %v3522
  %v3604 = vunpack.c.l.b16 %v3523
  %v3605 = vunpack.c.h.b16 %v3523
  %v3606 = vunpack.c.l.b16 %v3524
  %v3607 = vunpack.c.h.b16 %v3524
  %v3608 = vunpack.c.l.b16 %v3525
  %v3609 = vunpack.c.h.b16 %v3525
  %v3610 = vunpack.c.l.b16 %v3526
  %v3611 = vunpack.c.h.b16 %v3526
  %v3612 = vunpack.c.l.b16 %v3527
  %v3613 = vunpack.c.h.b16 %v3527
  %v3614 = vunpack.c.l.b16 %v3528
  %v3615 = vunpack.c.h.b16 %v3528
  %v3616 = vunpack.c.l.b16 %v3529
  %v3617 = vunpack.c.h.b16 %v3529
  %v3618 = vunpack.c.l.b16 %v3530
  %v3619 = vunpack.c.h.b16 %v3530
  %v3620 = vunpack.c.l.b16 %v3531
  %v3621 = vunpack.c.h.b16 %v3531
  %v3622 = vunpack.c.l.b16 %v3532
  %v3623 = vunpack.c.h.b16 %v3532
  %v3624 = vunpack.c.l.b16 %v3533
  %v3625 = vunpack.c.h.b16 %v3533
  %v3626 = vunpack.c.l.b16 %v3534
  %v3627 = vunpack.c.h.b16 %v3534
  %v3628 = vunpack.c.l.b16 %v3535
  %v3629 = vunpack.c.h.b16 %v3535
  %v3630 = vunpack.c.l.b16 %v3536
  %v3631 = vunpack.c.h.b16 %v3536
  %v3632 = vunpack.c.l.b16 %v3537
  %v3633 = vunpack.c.h.b16 %v3537
  %v3634 = vpack.c.b16 %v3574, %v3570
  %v3635 = vpack.c.b16 %v3575, %v3571
  %v3636 = vpack.c.b16 %v3576, %v3572
  %v3637 = vpack.c.b16 %v3577, %v3573
  %v3638 = vpack.c.b16 %v3582, %v3578
  %v3639 = vpack.c.b16 %v3583, %v3579
  %v3640 = vpack.c.b16 %v3584, %v3580
  %v3641 = vpack.c.b16 %v3585, %v3581
  %v3642 = vpack.c.b16 %v3590, %v3586
  %v3643 = vpack.c.b16 %v3591, %v3587
  %v3644 = vpack.c.b16 %v3592, %v3588
  %v3645 = vpack.c.b16 %v3593, %v3589
  %v3646 = vpack.c.b16 %v3598, %v3594
  %v3647 = vpack.c.b16 %v3599, %v3595
  %v3648 = vpack.c.b16 %v3600, %v3596
  %v3649 = vpack.c.b16 %v3601, %v3597
  %v3650 = vpack.c.b16 %v3606, %v3602
  %v3651 = vpack.c.b16 %v3607, %v3603
  %v3652 = vpack.c.b16 %v3608, %v3604
  %v3653 = vpack.c.b16 %v3609, %v3605
  %v3654 = vpack.c.b16 %v3614, %v3610
  %v3655 = vpack.c.b16 %v3615, %v3611
  %v3656 = vpack.c.b16 %v3616, %v3612
  %v3657 = vpack.c.b16 %v3617, %v3613
  %v3658 = vpack.c.b16 %v3622, %v3618
  %v3659 = vpack.c.b16 %v3623, %v3619
  %v3660 = vpack.c.b16 %v3624, %v3620
  %v3661 = vpack.c.b16 %v3625, %v3621
  %v3662 = vpack.c.b16 %v3630, %v3626
  %v3663 = vpack.c.b16 %v3631, %v3627
  %v3664 = vpack.c.b16 %v3632, %v3628
  %v3665 = vpack.c.b16 %v3633, %v3629
  %3698 = vmatprep.subr.bf16.mxu0 %v3635
  %3699 = vmatpush1.bf16.msra.mxu0 %v3634
  %3700 = vmatprep.subr.bf16.mxu0 %v3639
  %3701 = vmatpush1.bf16.msra.mxu0 %v3638
  %3702 = vmatprep.subr.bf16.mxu0 %v3643
  %3703 = vmatpush1.bf16.msra.mxu0 %v3642
  %3704 = vmatprep.subr.bf16.mxu0 %v3647
  %3705 = vmatpush1.bf16.msra.mxu0 %v3646
  %3706 = vmatprep.subr.bf16.mxu0 %v3651
  %3707 = vmatpush1.bf16.msra.mxu0 %v3650
  %3708 = vmatprep.subr.bf16.mxu0 %v3655
  %3709 = vmatpush1.bf16.msra.mxu0 %v3654
  %3710 = vmatprep.subr.bf16.mxu0 %v3659
  %3711 = vmatpush1.bf16.msra.mxu0 %v3658
  %3712 = vmatprep.subr.bf16.mxu0 %v3663
  %3713 = vmatpush1.bf16.msra.mxu0 %v3662
  %3714 = vmatprep.subr.bf16.mxu0 0
  %3715 = vmatpush1.bf16.msra.mxu0 0
  %3716 = vmatprep.subr.bf16.mxu0 0
  %3717 = vmatpush1.bf16.msra.mxu0 0
  %3718 = vmatprep.subr.bf16.mxu0 0
  %3719 = vmatpush1.bf16.msra.mxu0 0
  %3720 = vmatprep.subr.bf16.mxu0 0
  %3721 = vmatpush1.bf16.msra.mxu0 0
  %3722 = vmatprep.subr.bf16.mxu0 0
  %3723 = vmatpush1.bf16.msra.mxu0 0
  %3724 = vmatprep.subr.bf16.mxu0 0
  %3725 = vmatpush1.bf16.msra.mxu0 0
  %3726 = vmatprep.subr.bf16.mxu0 0
  %3727 = vmatpush1.bf16.msra.mxu0 0
  %3728 = vmatprep.subr.bf16.mxu0 0
  %3729 = vmatpush1.bf16.msra.mxu0 0
  %3730 = vmatprep.mubr.bf16.mxu0 0
  %3731 = vmatmul.mubr.bf16.gmra.mrb[0].mxu0 %v3505
  %v3732 = vpop.f32.mrb[0].mxu0
  %v3733 = vadd.f32 0.0, %v3732
  %v3734 = vpop.f32.mrb[0].mxu0
  %v3735 = vadd.f32 0.0, %v3734
  %v3736 = vpop.f32.mrb[0].mxu0
  %v3737 = vadd.f32 0.0, %v3736
  %v3738 = vpop.f32.mrb[0].mxu0
  %v3739 = vadd.f32 0.0, %v3738
  %3740 = vdwg.mxu0
  %3741 = vmatprep.subr.bf16.mxu0 %v3637
  %3742 = vmatpush1.bf16.msra.mxu0 %v3636
  %3743 = vmatprep.subr.bf16.mxu0 %v3641
  %3744 = vmatpush1.bf16.msra.mxu0 %v3640
  %3745 = vmatprep.subr.bf16.mxu0 %v3645
  %3746 = vmatpush1.bf16.msra.mxu0 %v3644
  %3747 = vmatprep.subr.bf16.mxu0 %v3649
  %3748 = vmatpush1.bf16.msra.mxu0 %v3648
  %3749 = vmatprep.subr.bf16.mxu0 %v3653
  %3750 = vmatpush1.bf16.msra.mxu0 %v3652
  %3751 = vmatprep.subr.bf16.mxu0 %v3657
  %3752 = vmatpush1.bf16.msra.mxu0 %v3656
  %3753 = vmatprep.subr.bf16.mxu0 %v3661
  %3754 = vmatpush1.bf16.msra.mxu0 %v3660
  %3755 = vmatprep.subr.bf16.mxu0 %v3665
  %3756 = vmatpush1.bf16.msra.mxu0 %v3664
  %3757 = vmatprep.subr.bf16.mxu0 0
  %3758 = vmatpush1.bf16.msra.mxu0 0
  %3759 = vmatprep.subr.bf16.mxu0 0
  %3760 = vmatpush1.bf16.msra.mxu0 0
  %3761 = vmatprep.subr.bf16.mxu0 0
  %3762 = vmatpush1.bf16.msra.mxu0 0
  %3763 = vmatprep.subr.bf16.mxu0 0
  %3764 = vmatpush1.bf16.msra.mxu0 0
  %3765 = vmatprep.subr.bf16.mxu0 0
  %3766 = vmatpush1.bf16.msra.mxu0 0
  %3767 = vmatprep.subr.bf16.mxu0 0
  %3768 = vmatpush1.bf16.msra.mxu0 0
  %3769 = vmatprep.subr.bf16.mxu0 0
  %3770 = vmatpush1.bf16.msra.mxu0 0
  %3771 = vmatprep.subr.bf16.mxu0 0
  %3772 = vmatpush1.bf16.msra.mxu0 0
  %3773 = vmatprep.mubr.bf16.mxu0 0
  %3774 = vmatmul.mubr.bf16.gmra.mrb[0].mxu0 %v3505
  %v3775 = vpop.f32.mrb[0].mxu0
  %v3776 = vadd.f32 0.0, %v3775
  %v3777 = vpop.f32.mrb[0].mxu0
  %v3778 = vadd.f32 0.0, %v3777
  %v3779 = vpop.f32.mrb[0].mxu0
  %v3780 = vadd.f32 0.0, %v3779
  %v3781 = vpop.f32.mrb[0].mxu0
  %v3782 = vadd.f32 0.0, %v3781
  %3783 = vdwg.mxu0
  %v3784 = vadd.f32 %v3733, %v3495
  %v3785 = vadd.f32 %v3737, %v3500
  %v3786 = vtanh.pop %v3784
  %v3787 = vtanh.pop %v3785
  %v3788 = vadd.f32 %v3776, %v3497
  %v3789 = vadd.f32 %v3780, %v3502
  %v3790 = vxor.u32 %v3788, 2147483648
  %v3791 = vxor.u32 %v3789, 2147483648
  %v3792 = vmul.f32 %v3790, 1.442695
  %v3793 = vpow.pop %v3792
  %v3794 = vmul.f32 %v3791, 1.442695
  %v3795 = vpow.pop %v3794
  %v3796 = vadd.f32 %v3793, 1.0
  %v3797 = vadd.f32 %v3795, 1.0
  %v3798 = vrcp.pop %v3796
  %v3799 = vmul.f32 1.0, %v3798
  %v3800 = vrcp.pop %v3797
  %v3801 = vmul.f32 1.0, %v3800
  %v3802 = vadd.f32 %v3778, %v3498
  %v3803 = vadd.f32 %v3782, %v3503
  %v3804 = vxor.u32 %v3802, 2147483648
  %v3805 = vxor.u32 %v3803, 2147483648
  %v3806 = vmul.f32 %v3804, 1.442695
  %v3807 = vpow.pop %v3806
  %v3808 = vmul.f32 %v3805, 1.442695
  %v3809 = vpow.pop %v3808
  %v3810 = vadd.f32 %v3807, 1.0
  %v3811 = vadd.f32 %v3809, 1.0
  %v3812 = vrcp.pop %v3810
  %v3813 = vmul.f32 1.0, %v3812
  %v3814 = vrcp.pop %v3811
  %v3815 = vmul.f32 1.0, %v3814
  %v3816 = vmul.f32 %v3799, %v3482
  %v3817 = vmul.f32 %v3801, %v3483
  %v3818 = vpack.c.bf16 %v3787, %v3786
  %v3819 = vpack.c.bf16 %v3817, %v3816
  %v3820 = vld [vmem:[%s3] sm:$0xff]
  %v3821 = vld [vmem:[%s3 + $0x8] sm:$0xff]
  %v3822 = vld [vmem:[%s3 + $0x10] sm:$0xff]
  %v3823 = vld [vmem:[%s3 + $0x18] sm:$0xff]
  %v3824 = vld [vmem:[%s3 + $0x20] sm:$0xff]
  %v3825 = vld [vmem:[%s3 + $0x28] sm:$0xff]
  %v3826 = vld [vmem:[%s3 + $0x30] sm:$0xff]
  %v3827 = vld [vmem:[%s3 + $0x38] sm:$0xff]
  %v3828 = vld [vmem:[%s3 + $0x40] sm:$0xff]
  %v3829 = vld [vmem:[%s3 + $0x48] sm:$0xff]
  %v3830 = vld [vmem:[%s3 + $0x50] sm:$0xff]
  %v3831 = vld [vmem:[%s3 + $0x58] sm:$0xff]
  %v3832 = vld [vmem:[%s3 + $0x60] sm:$0xff]
  %v3833 = vld [vmem:[%s3 + $0x68] sm:$0xff]
  %v3834 = vld [vmem:[%s3 + $0x70] sm:$0xff]
  %v3835 = vld [vmem:[%s3 + $0x78] sm:$0xff]
  %v3836 = vld [vmem:[%s3 + $0x80] sm:$0xff]
  %v3837 = vld [vmem:[%s3 + $0x88] sm:$0xff]
  %v3838 = vld [vmem:[%s3 + $0x90] sm:$0xff]
  %v3839 = vld [vmem:[%s3 + $0x98] sm:$0xff]
  %v3840 = vld [vmem:[%s3 + $0xa0] sm:$0xff]
  %v3841 = vld [vmem:[%s3 + $0xa8] sm:$0xff]
  %v3842 = vld [vmem:[%s3 + $0xb0] sm:$0xff]
  %v3843 = vld [vmem:[%s3 + $0xb8] sm:$0xff]
  %v3844 = vld [vmem:[%s3 + $0xc0] sm:$0xff]
  %v3845 = vld [vmem:[%s3 + $0xc8] sm:$0xff]
  %v3846 = vld [vmem:[%s3 + $0xd0] sm:$0xff]
  %v3847 = vld [vmem:[%s3 + $0xd8] sm:$0xff]
  %v3848 = vld [vmem:[%s3 + $0xe0] sm:$0xff]
  %v3849 = vld [vmem:[%s3 + $0xe8] sm:$0xff]
  %v3850 = vld [vmem:[%s3 + $0xf0] sm:$0xff]
  %v3851 = vld [vmem:[%s3 + $0xf8] sm:$0xff]
  %v3884 = vunpack.c.l.b16 %v3820
  %v3885 = vunpack.c.h.b16 %v3820
  %v3886 = vunpack.c.l.b16 %v3821
  %v3887 = vunpack.c.h.b16 %v3821
  %v3888 = vunpack.c.l.b16 %v3822
  %v3889 = vunpack.c.h.b16 %v3822
  %v3890 = vunpack.c.l.b16 %v3823
  %v3891 = vunpack.c.h.b16 %v3823
  %v3892 = vunpack.c.l.b16 %v3824
  %v3893 = vunpack.c.h.b16 %v3824
  %v3894 = vunpack.c.l.b16 %v3825
  %v3895 = vunpack.c.h.b16 %v3825
  %v3896 = vunpack.c.l.b16 %v3826
  %v3897 = vunpack.c.h.b16 %v3826
  %v3898 = vunpack.c.l.b16 %v3827
  %v3899 = vunpack.c.h.b16 %v3827
  %v3900 = vunpack.c.l.b16 %v3828
  %v3901 = vunpack.c.h.b16 %v3828
  %v3902 = vunpack.c.l.b16 %v3829
  %v3903 = vunpack.c.h.b16 %v3829
  %v3904 = vunpack.c.l.b16 %v3830
  %v3905 = vunpack.c.h.b16 %v3830
  %v3906 = vunpack.c.l.b16 %v3831
  %v3907 = vunpack.c.h.b16 %v3831
  %v3908 = vunpack.c.l.b16 %v3832
  %v3909 = vunpack.c.h.b16 %v3832
  %v3910 = vunpack.c.l.b16 %v3833
  %v3911 = vunpack.c.h.b16 %v3833
  %v3912 = vunpack.c.l.b16 %v3834
  %v3913 = vunpack.c.h.b16 %v3834
  %v3914 = vunpack.c.l.b16 %v3835
  %v3915 = vunpack.c.h.b16 %v3835
  %v3916 = vunpack.c.l.b16 %v3836
  %v3917 = vunpack.c.h.b16 %v3836
  %v3918 = vunpack.c.l.b16 %v3837
  %v3919 = vunpack.c.h.b16 %v3837
  %v3920 = vunpack.c.l.b16 %v3838
  %v3921 = vunpack.c.h.b16 %v3838
  %v3922 = vunpack.c.l.b16 %v3839
  %v3923 = vunpack.c.h.b16 %v3839
  %v3924 = vunpack.c.l.b16 %v3840
  %v3925 = vunpack.c.h.b16 %v3840
  %v3926 = vunpack.c.l.b16 %v3841
  %v3927 = vunpack.c.h.b16 %v3841
  %v3928 = vunpack.c.l.b16 %v3842
  %v3929 = vunpack.c.h.b16 %v3842
  %v3930 = vunpack.c.l.b16 %v3843
  %v3931 = vunpack.c.h.b16 %v3843
  %v3932 = vunpack.c.l.b16 %v3844
  %v3933 = vunpack.c.h.b16 %v3844
  %v3934 = vunpack.c.l.b16 %v3845
  %v3935 = vunpack.c.h.b16 %v3845
  %v3936 = vunpack.c.l.b16 %v3846
  %v3937 = vunpack.c.h.b16 %v3846
  %v3938 = vunpack.c.l.b16 %v3847
  %v3939 = vunpack.c.h.b16 %v3847
  %v3940 = vunpack.c.l.b16 %v3848
  %v3941 = vunpack.c.h.b16 %v3848
  %v3942 = vunpack.c.l.b16 %v3849
  %v3943 = vunpack.c.h.b16 %v3849
  %v3944 = vunpack.c.l.b16 %v3850
  %v3945 = vunpack.c.h.b16 %v3850
  %v3946 = vunpack.c.l.b16 %v3851
  %v3947 = vunpack.c.h.b16 %v3851
  %v3948 = vpack.c.b16 %v3886, %v3884
  %v3949 = vpack.c.b16 %v3887, %v3885
  %v3950 = vpack.c.b16 %v3890, %v3888
  %v3951 = vpack.c.b16 %v3891, %v3889
  %v3952 = vpack.c.b16 %v3894, %v3892
  %v3953 = vpack.c.b16 %v3895, %v3893
  %v3954 = vpack.c.b16 %v3898, %v3896
  %v3955 = vpack.c.b16 %v3899, %v3897
  %v3956 = vpack.c.b16 %v3902, %v3900
  %v3957 = vpack.c.b16 %v3903, %v3901
  %v3958 = vpack.c.b16 %v3906, %v3904
  %v3959 = vpack.c.b16 %v3907, %v3905
  %v3960 = vpack.c.b16 %v3910, %v3908
  %v3961 = vpack.c.b16 %v3911, %v3909
  %v3962 = vpack.c.b16 %v3914, %v3912
  %v3963 = vpack.c.b16 %v3915, %v3913
  %v3964 = vpack.c.b16 %v3918, %v3916
  %v3965 = vpack.c.b16 %v3919, %v3917
  %v3966 = vpack.c.b16 %v3922, %v3920
  %v3967 = vpack.c.b16 %v3923, %v3921
  %v3968 = vpack.c.b16 %v3926, %v3924
  %v3969 = vpack.c.b16 %v3927, %v3925
  %v3970 = vpack.c.b16 %v3930, %v3928
  %v3971 = vpack.c.b16 %v3931, %v3929
  %v3972 = vpack.c.b16 %v3934, %v3932
  %v3973 = vpack.c.b16 %v3935, %v3933
  %v3974 = vpack.c.b16 %v3938, %v3936
  %v3975 = vpack.c.b16 %v3939, %v3937
  %v3976 = vpack.c.b16 %v3942, %v3940
  %v3977 = vpack.c.b16 %v3943, %v3941
  %v3978 = vpack.c.b16 %v3946, %v3944
  %v3979 = vpack.c.b16 %v3947, %v3945
  %4012 = vmatprep.subr.bf16.mxu0 %v3949
  %4013 = vmatpush1.bf16.msra.mxu0 %v3948
  %4014 = vmatprep.subr.bf16.mxu0 %v3951
  %4015 = vmatpush1.bf16.msra.mxu0 %v3950
  %4016 = vmatprep.subr.bf16.mxu0 %v3953
  %4017 = vmatpush1.bf16.msra.mxu0 %v3952
  %4018 = vmatprep.subr.bf16.mxu0 %v3955
  %4019 = vmatpush1.bf16.msra.mxu0 %v3954
  %4020 = vmatprep.subr.bf16.mxu0 %v3957
  %4021 = vmatpush1.bf16.msra.mxu0 %v3956
  %4022 = vmatprep.subr.bf16.mxu0 %v3959
  %4023 = vmatpush1.bf16.msra.mxu0 %v3958
  %4024 = vmatprep.subr.bf16.mxu0 %v3961
  %4025 = vmatpush1.bf16.msra.mxu0 %v3960
  %4026 = vmatprep.subr.bf16.mxu0 %v3963
  %4027 = vmatpush1.bf16.msra.mxu0 %v3962
  %4028 = vmatprep.subr.bf16.mxu0 %v3965
  %4029 = vmatpush1.bf16.msra.mxu0 %v3964
  %4030 = vmatprep.subr.bf16.mxu0 %v3967
  %4031 = vmatpush1.bf16.msra.mxu0 %v3966
  %4032 = vmatprep.subr.bf16.mxu0 %v3969
  %4033 = vmatpush1.bf16.msra.mxu0 %v3968
  %4034 = vmatprep.subr.bf16.mxu0 %v3971
  %4035 = vmatpush1.bf16.msra.mxu0 %v3970
  %4036 = vmatprep.subr.bf16.mxu0 %v3973
  %4037 = vmatpush1.bf16.msra.mxu0 %v3972
  %4038 = vmatprep.subr.bf16.mxu0 %v3975
  %4039 = vmatpush1.bf16.msra.mxu0 %v3974
  %4040 = vmatprep.subr.bf16.mxu0 %v3977
  %4041 = vmatpush1.bf16.msra.mxu0 %v3976
  %4042 = vmatprep.subr.bf16.mxu0 %v3979
  %4043 = vmatpush1.bf16.msra.mxu0 %v3978
  %4044 = vmatprep.mubr.bf16.mxu0 %v3819
  %4045 = vmatmul.mubr.bf16.gmra.mrb[0].mxu0 %v3818
  %v4046 = vpop.f32.mrb[0].mxu0
  %v4047 = vadd.f32 0.0, %v4046
  %v4048 = vpop.f32.mrb[0].mxu0
  %v4049 = vadd.f32 0.0, %v4048
  %v4050 = vpop.f32.mrb[0].mxu0
  %v4051 = vadd.f32 0.0, %v4050
  %v4052 = vpop.f32.mrb[0].mxu0
  %v4053 = vadd.f32 0.0, %v4052
  %4054 = vdwg.mxu0
  %v4055 = vadd.f32 %v3735, %v3496
  %v4056 = vadd.f32 %v3739, %v3501
  %v4057 = vadd.f32 %v4055, %v4047
  %v4058 = vadd.f32 %v4056, %v4051
  %v4059 = vxor.u32 %v4057, 2147483648
  %v4060 = vxor.u32 %v4058, 2147483648
  %v4061 = vmul.f32 %v4059, 1.442695
  %v4062 = vpow.pop %v4061
  %v4063 = vmul.f32 %v4060, 1.442695
  %v4064 = vpow.pop %v4063
  %v4065 = vadd.f32 %v4062, 1.0
  %v4066 = vadd.f32 %v4064, 1.0
  %v4067 = vrcp.pop %v4065
  %v4068 = vmul.f32 1.0, %v4067
  %v4069 = vrcp.pop %v4066
  %v4070 = vmul.f32 1.0, %v4069
  %v4071 = vadd.f32 %v4049, %v3499
  %v4072 = vadd.f32 %v4053, %v3504
  %v4073 = vtanh.pop %v4071
  %v4074 = vtanh.pop %v4072
  %v4075 = vsub.f32 1.0, %v3813
  %v4076 = vsub.f32 1.0, %v3815
  %v4077 = vmul.f32 %v4068, %v3482
  %v4078 = vmul.f32 %v4070, %v3483
  %v4079 = vmul.f32 %v4075, %v4077
  %v4080 = vmul.f32 %v4076, %v4078
  %v4081 = vmul.f32 %v3813, %v4073
  %v4082 = vmul.f32 %v3815, %v4074
  %v4083 = vadd.f32 %v4079, %v4081
  %v4084 = vadd.f32 %v4080, %v4082
  %s4085 = scalar_lea.vmem %s5, 80
  %4086 = vst [vmem:[%s4085] sm:$0xff] %v4083
  %4087 = vst [vmem:[%s4085 + $0x8] sm:$0xff] %v4084
  %4088 = vst [vmem:[#allocation2] sm:$0xff] %v4083
  %4089 = vst [vmem:[#allocation2 + $0x8] sm:$0xff] %v4084
  // Predicated region
  $region26: #{fraud_time_aware_gru.1} parent=0 // pred_check
    _
  $region27: #{fraud_time_aware_gru.1} parent=0 // pred_check_branch
    %4091 = sbr.rel (0) target = $region29
  $region28: #{fraud_time_aware_gru.1} parent=0 // pred_region
    _
  $region29: #{fraud_time_aware_gru.1} parent=0 // pred_fallthru
    _
  // Predicated region
  $region30: #{fraud_time_aware_gru.1} parent=0 // pred_check
    _
  $region31: #{fraud_time_aware_gru.1} parent=0 // pred_check_branch
    %4093 = sbr.rel (0) target = $region33
  $region32: #{fraud_time_aware_gru.1} parent=0 // pred_region
    _
  $region33: #{fraud_time_aware_gru.1} parent=0 // pred_fallthru
    _

</llo_original>
